<compile_context>
chip_gen: v7x
topology: tpu7x:2x2x1
jax: 0.10.0
libtpu: 0.0.40
codegen_flags: <defaults>
</compile_context>

<pallas_src>
import jax
import jax.numpy as jnp
from jax.experimental import pallas as pl
from jax.experimental.pallas import tpu as pltpu

EPS = 1e-5

# bf16 operands reach peak MXU throughput on v5e/v6e/v7x; at the toy shapes in
# this script the kernel is launch/DMA-overhead bound (not MXU-bound), so f32
# operands are kept for exact module semantics.  Flip to jnp.bfloat16 at
# production sizes — accumulation stays f32 via preferred_element_type.
MXU_DTYPE = jnp.float32


def _dot(a, b):
    return jnp.dot(a.astype(MXU_DTYPE), b.astype(MXU_DTYPE),
                   preferred_element_type=jnp.float32)


# --------------------------------------------------------------------------
# Fused Pallas kernel: whole ConnAndOpsPhase forward
# --------------------------------------------------------------------------
def _fused_phase_kernel(x_ref, wf_ref,
                        n1w_ref, n1g_ref, n1b_ref,
                        n2w_ref, n2g_ref, n2b_ref,
                        n3w_ref, n3g_ref, n3b_ref,
                        p3a_ref, p3b_ref, p4a_ref, p4b_ref,
                        obg_ref, obb_ref,
                        w1_ref, w2_ref, sp_ref,
                        o_ref):
    """Whole phase on (B, C, L) tiles resident in VMEM (no HBM round-trips)."""
    B = x_ref.shape[0]
    L = x_ref.shape[2]
    inv_n = 1.0 / float(B * L)

    def shifted(x):
        # zero-padded x[:, l-1] and x[:, l+1] along the lane (L) axis
        pos = jax.lax.broadcasted_iota(jnp.int32, x.shape, 1)
        x_prev = jnp.where(pos >= 1, pltpu.roll(x, shift=1, axis=1), 0.0)
        x_next = jnp.where(pos <= L - 2, pltpu.roll(x, shift=L - 1, axis=1), 0.0)
        return x_prev, x_next

    def conv3(x, w_folded, pre_relu):
        # Conv1d(k=3, stride=1, pad=1, bias=False); 3 taps folded into ONE dot:
        # (Cout, 3*Cin) @ [x[l-1]; x[l]; x[l+1]]  (sublane-aligned concat).
        if pre_relu:
            x = jnp.maximum(x, 0.0)
        x_prev, x_next = shifted(x)
        stacked = jnp.concatenate([x_prev, x, x_next], axis=0)   # (3*Cin, L)
        return _dot(w_folded, stacked)                           # (C, L)

    def batchnorm(xs, g_ref, b_ref, relu):
        # BatchNorm1d with per-call batch statistics (module default = training
        # mode), biased variance, one pass via E[x^2] - E[x]^2.
        s = xs[0].sum(axis=1, keepdims=True)
        ss = jnp.square(xs[0]).sum(axis=1, keepdims=True)
        for xb in xs[1:]:
            s = s + xb.sum(axis=1, keepdims=True)
            ss = ss + jnp.square(xb).sum(axis=1, keepdims=True)
        mean = s * inv_n                                         # (C, 1)
        var = ss * inv_n - jnp.square(mean)
        scale = g_ref[...] * jax.lax.rsqrt(var + EPS)
        shift = b_ref[...] - mean * scale
        out = [xb * scale + shift for xb in xs]
        if relu:
            out = [jnp.maximum(yb, 0.0) for yb in out]
        return out

    def node_op(xs, w_folded, g_ref, b_ref):
        # ReLU -> Conv1d(C, C, 3, pad=1, bias=False) -> BatchNorm1d(affine)
        return batchnorm([conv3(xb, w_folded, True) for xb in xs],
                         g_ref, b_ref, relu=False)

    # first_conv (channel_flag: Cin != Cout; idx == 0 -> k=3, pad=1, bias=False)
    wf = wf_ref[...]
    xs = [conv3(x_ref[b], wf, False) for b in range(B)]          # (C, L) each

    # dependency_graph {1: [0], 2: [1], 3: [1, 2], 4: [0, 3]}
    o1 = node_op(xs, n1w_ref[...], n1g_ref, n1b_ref)             # proc: Identity
    o2 = node_op(o1, n2w_ref[...], n2g_ref, n2b_ref)             # proc: Identity
    # node 3 processor Conv1d(2C, C, 1): channel concat == sum of two dots
    p3a, p3b = p3a_ref[...], p3b_ref[...]
    h3 = [_dot(p3a, o1[b]) + _dot(p3b, o2[b]) for b in range(B)]
    o3 = node_op(h3, n3w_ref[...], n3g_ref, n3b_ref)
    # output node processor Conv1d(2C, C, 1) on cat([x, out3])
    p4a, p4b = p4a_ref[...], p4b_ref[...]
    h4 = [_dot(p4a, xs[b]) + _dot(p4b, o3[b]) for b in range(B)]

    # out head: BatchNorm1d -> ReLU -> CBAM(ratio=8), fused (stays in VMEM)
    y = batchnorm(h4, obg_ref, obb_ref, relu=True)

    w1 = w1_ref[...]                                             # (hid, C)
    w2 = w2_ref[...]                                             # (C, hid)
    pos_l = jax.lax.broadcasted_iota(jnp.int32, (1, L), 1)
    for b in range(B):
        yb = y[b]                                                # (C, L)
        # channel attention: sigmoid(MLP(avgpool_L) + MLP(maxpool_L))
        avg = jnp.mean(yb, axis=1, keepdims=True)                # (C, 1)
        mx = jnp.max(yb, axis=1, keepdims=True)
        hidden = jnp.maximum(_dot(w1, avg), 0.0) + jnp.maximum(_dot(w1, mx), 0.0)
        yb = yb * jax.nn.sigmoid(_dot(w2, hidden))               # scale channels
        # spatial attention: k=7 / pad=3 conv over [mean_C, max_C], done as
        # 7 lane-rolls + masked FMAs (O(L) memory, no O(L^2) Toeplitz operands).
        s_avg = jnp.mean(yb, axis=0, keepdims=True)              # (1, L)
        s_max = jnp.max(yb, axis=0, keepdims=True)
        att = jnp.zeros((1, L), jnp.float32)
        for t in range(7):
            off = t - 3
            sh = (-off) % L
            a_sh = pltpu.roll(s_avg, shift=sh, axis=1) if sh else s_avg
            m_sh = pltpu.roll(s_max, shift=sh, axis=1) if sh else s_max
            valid = (pos_l + off >= 0) & (pos_l + off <= L - 1)
            att = att + jnp.where(valid,
                                  sp_ref[0, t] * a_sh + sp_ref[1, t] * m_sh, 0.0)
        o_ref[b] = yb * jax.nn.sigmoid(att)                      # (C, L) store


# --------------------------------------------------------------------------
# Wrapper: weight preprocessing (glue) + one pallas_call
# --------------------------------------------------------------------------
def conn_and_ops_phase_forward(x_ncl, params):
    """ConnAndOpsPhase forward. x_ncl: (B, Cin, L) in PyTorch Conv1d layout."""
    x = x_ncl.astype(jnp.float32)
    B, _, L = x.shape
    C = params["first_conv_w"].shape[0]

    def fold_k3(w):
        # (Cout, Cin, 3) -> (Cout, 3*Cin), tap-major, matching [x_prev; x; x_next]
        co, ci, k = w.shape
        return jnp.transpose(w, (0, 2, 1)).reshape(co, k * ci).astype(jnp.float32)

    def col(v):
        return v.reshape(-1, 1).astype(jnp.float32)

    nodes = [params[f"node{i}"] for i in (1, 2, 3)]
    p3, p4 = params["proc3_w"], params["proc4_w"]
    cb = params["cbam"]

    args = (
        x,
        fold_k3(params["first_conv_w"]),
        fold_k3(nodes[0]["conv_w"]), col(nodes[0]["bn_g"]), col(nodes[0]["bn_b"]),
        fold_k3(nodes[1]["conv_w"]), col(nodes[1]["bn_g"]), col(nodes[1]["bn_b"]),
        fold_k3(nodes[2]["conv_w"]), col(nodes[2]["bn_g"]), col(nodes[2]["bn_b"]),
        p3[:, :C], p3[:, C:], p4[:, :C], p4[:, C:],
        col(params["out_bn_g"]), col(params["out_bn_b"]),
        cb["w1"], cb["w2"], cb["sp_w"],
    )

    vmem = pl.BlockSpec(memory_space=pltpu.MemorySpace.VMEM)
    smem = pl.BlockSpec(memory_space=pltpu.MemorySpace.SMEM)   # 14 conv taps as scalars
    # Single gridless pallas_call: all weights + intermediates < ~100 KiB, well
    # inside VMEM on v5e/v6e/v7x.  At production B*L one would add a grid over L
    # with lane-dense blocks; unnecessary at these shapes.
    return pl.pallas_call(
        _fused_phase_kernel,
        out_shape=jax.ShapeDtypeStruct((B, C, L), jnp.float32),
        in_specs=[vmem] * (len(args) - 1) + [smem],
        out_specs=vmem,
    )(*args)


# --------------------------------------------------------------------------
# Deterministic parameter init (synthetic; shapes follow the module __init__)
# --------------------------------------------------------------------------
def init_params(key, c_in, c_out, ratio=8):
    ks = jax.random.split(key, 9)

    def w(k, shape, fan_in):
        return jax.random.normal(k, shape, jnp.float32) / jnp.sqrt(float(fan_in))

    hid = max(c_out // ratio, 1)
    params = {
        "first_conv_w": w(ks[0], (c_out, c_in, 3), 3 * c_in),   # Conv1d(Cin, C, 3)
        "proc3_w": w(ks[1], (c_out, 2 * c_out), 2 * c_out),     # Conv1d(2C, C, 1)
        "proc4_w": w(ks[2], (c_out, 2 * c_out), 2 * c_out),     # Conv1d(2C, C, 1)
        "out_bn_g": jnp.ones((c_out,), jnp.float32),            # BN default init
        "out_bn_b": jnp.zeros((c_out,), jnp.float32),
        "cbam": {
            "w1": w(ks[3], (hid, c_out), c_out),                # shared MLP fc1
            "w2": w(ks[4], (c_out, hid), hid),                  # shared MLP fc2
            "sp_w": w(ks[5], (2, 7), 14),                       # k=7 taps: row0=mean, row1=max
        },
    }
    for i, k in zip((1, 2, 3), ks[6:9]):
        params[f"node{i}"] = {
            "conv_w": w(k, (c_out, c_out, 3), 3 * c_out),
            "bn_g": jnp.ones((c_out,), jnp.float32),
            "bn_b": jnp.zeros((c_out,), jnp.float32),
        }
    return params


if __name__ == "__main__":
    B, C_IN, C_OUT, L = 2, 16, 32, 24
    key = jax.random.PRNGKey(0)
    k_x, k_p = jax.random.split(key)
    x = jax.random.normal(k_x, (B, C_IN, L), jnp.float32)   # PyTorch Conv1d layout (N, C, L)
    params = init_params(k_p, C_IN, C_OUT)

    fwd = jax.jit(lambda inp: conn_and_ops_phase_forward(inp, params))
    y = fwd(x)
    jax.block_until_ready(y)
    assert y.shape == (B, C_OUT, L), y.shape
    assert bool(jnp.all(jnp.isfinite(y)))
    print("KERNEL_OK")
</pallas_src>

<mosaic_0001>
module attributes {stable_mosaic.version = 11 : i64} {
  func.func @_fused_phase_kernel(%arg0: memref<2x16x24xf32, #tpu.memory_space<vmem>>, %arg1: memref<32x48xf32, #tpu.memory_space<vmem>>, %arg2: memref<32x96xf32, #tpu.memory_space<vmem>>, %arg3: memref<32x1xf32, #tpu.memory_space<vmem>>, %arg4: memref<32x1xf32, #tpu.memory_space<vmem>>, %arg5: memref<32x96xf32, #tpu.memory_space<vmem>>, %arg6: memref<32x1xf32, #tpu.memory_space<vmem>>, %arg7: memref<32x1xf32, #tpu.memory_space<vmem>>, %arg8: memref<32x96xf32, #tpu.memory_space<vmem>>, %arg9: memref<32x1xf32, #tpu.memory_space<vmem>>, %arg10: memref<32x1xf32, #tpu.memory_space<vmem>>, %arg11: memref<32x32xf32, #tpu.memory_space<vmem>>, %arg12: memref<32x32xf32, #tpu.memory_space<vmem>>, %arg13: memref<32x32xf32, #tpu.memory_space<vmem>>, %arg14: memref<32x32xf32, #tpu.memory_space<vmem>>, %arg15: memref<32x1xf32, #tpu.memory_space<vmem>>, %arg16: memref<32x1xf32, #tpu.memory_space<vmem>>, %arg17: memref<4x32xf32, #tpu.memory_space<vmem>>, %arg18: memref<32x4xf32, #tpu.memory_space<vmem>>, %arg19: memref<2x7xf32, #tpu.memory_space<smem>>, %arg20: memref<2x32x24xf32, #tpu.memory_space<vmem>>) attributes {dimension_semantics = [], scalar_prefetch = 0 : i64, scratch_operands = 0 : i64, tpu.core_type = #tpu.core_type<tc>} {
    %c0 = arith.constant 0 : index
    %c0_0 = arith.constant 0 : index
    %0 = vector.load %arg1[%c0, %c0_0] : memref<32x48xf32, #tpu.memory_space<vmem>>, vector<32x48xf32>
    %c0_1 = arith.constant 0 : index
    %c0_2 = arith.constant 0 : index
    %c0_3 = arith.constant 0 : index
    %1 = vector.load %arg0[%c0_1, %c0_2, %c0_3] : memref<2x16x24xf32, #tpu.memory_space<vmem>>, vector<1x16x24xf32>
    %2 = vector.shape_cast %1 : vector<1x16x24xf32> to vector<16x24xf32>
    %3 = tpu.iota {dimensions = array<i32: 1>} : vector<16x24xi32>
    %c1_i32 = arith.constant 1 : i32
    %4 = vector.broadcast %c1_i32 : i32 to vector<16x24xi32>
    %5 = arith.cmpi sge, %3, %4 : vector<16x24xi32>
    %c1_i32_4 = arith.constant 1 : i32
    %6 = tpu.dynamic_rotate %2 by %c1_i32_4 dim 1 : vector<16x24xf32>, i32 -> vector<16x24xf32>
    %cst = arith.constant 0.000000e+00 : f32
    %7 = vector.broadcast %cst : f32 to vector<16x24xf32>
    %8 = arith.select %5, %6, %7 : vector<16x24xi1>, vector<16x24xf32>
    %c22_i32 = arith.constant 22 : i32
    %9 = vector.broadcast %c22_i32 : i32 to vector<16x24xi32>
    %10 = arith.cmpi sle, %3, %9 : vector<16x24xi32>
    %c23_i32 = arith.constant 23 : i32
    %11 = tpu.dynamic_rotate %2 by %c23_i32 dim 1 : vector<16x24xf32>, i32 -> vector<16x24xf32>
    %cst_5 = arith.constant 0.000000e+00 : f32
    %12 = vector.broadcast %cst_5 : f32 to vector<16x24xf32>
    %13 = arith.select %10, %11, %12 : vector<16x24xi1>, vector<16x24xf32>
    %14 = tpu.concatenate %8, %2, %13 in 0 : vector<16x24xf32>, vector<16x24xf32>, vector<16x24xf32> -> vector<48x24xf32>
    %cst_6 = arith.constant dense<0.000000e+00> : vector<32x24xf32>
    %15 = tpu.matmul %0, %14, %cst_6 {dimension_numbers = #tpu.dot_dimension_numbers<[1], [0], [0], [1], [0, 0, 1, 1], [], []>} : vector<32x48xf32>, vector<48x24xf32>, vector<32x24xf32> -> vector<32x24xf32>
    %c1 = arith.constant 1 : index
    %c0_7 = arith.constant 0 : index
    %c0_8 = arith.constant 0 : index
    %16 = vector.load %arg0[%c1, %c0_7, %c0_8] : memref<2x16x24xf32, #tpu.memory_space<vmem>>, vector<1x16x24xf32>
    %17 = vector.shape_cast %16 : vector<1x16x24xf32> to vector<16x24xf32>
    %18 = tpu.iota {dimensions = array<i32: 1>} : vector<16x24xi32>
    %c1_i32_9 = arith.constant 1 : i32
    %19 = vector.broadcast %c1_i32_9 : i32 to vector<16x24xi32>
    %20 = arith.cmpi sge, %18, %19 : vector<16x24xi32>
    %c1_i32_10 = arith.constant 1 : i32
    %21 = tpu.dynamic_rotate %17 by %c1_i32_10 dim 1 : vector<16x24xf32>, i32 -> vector<16x24xf32>
    %cst_11 = arith.constant 0.000000e+00 : f32
    %22 = vector.broadcast %cst_11 : f32 to vector<16x24xf32>
    %23 = arith.select %20, %21, %22 : vector<16x24xi1>, vector<16x24xf32>
    %c22_i32_12 = arith.constant 22 : i32
    %24 = vector.broadcast %c22_i32_12 : i32 to vector<16x24xi32>
    %25 = arith.cmpi sle, %18, %24 : vector<16x24xi32>
    %c23_i32_13 = arith.constant 23 : i32
    %26 = tpu.dynamic_rotate %17 by %c23_i32_13 dim 1 : vector<16x24xf32>, i32 -> vector<16x24xf32>
    %cst_14 = arith.constant 0.000000e+00 : f32
    %27 = vector.broadcast %cst_14 : f32 to vector<16x24xf32>
    %28 = arith.select %25, %26, %27 : vector<16x24xi1>, vector<16x24xf32>
    %29 = tpu.concatenate %23, %17, %28 in 0 : vector<16x24xf32>, vector<16x24xf32>, vector<16x24xf32> -> vector<48x24xf32>
    %cst_15 = arith.constant dense<0.000000e+00> : vector<32x24xf32>
    %30 = tpu.matmul %0, %29, %cst_15 {dimension_numbers = #tpu.dot_dimension_numbers<[1], [0], [0], [1], [0, 0, 1, 1], [], []>} : vector<32x48xf32>, vector<48x24xf32>, vector<32x24xf32> -> vector<32x24xf32>
    %c0_16 = arith.constant 0 : index
    %c0_17 = arith.constant 0 : index
    %31 = vector.load %arg2[%c0_16, %c0_17] : memref<32x96xf32, #tpu.memory_space<vmem>>, vector<32x96xf32>
    %cst_18 = arith.constant 0.000000e+00 : f32
    %32 = vector.broadcast %cst_18 : f32 to vector<32x24xf32>
    %33 = arith.maximumf %15, %32 : vector<32x24xf32>
    %34 = tpu.iota {dimensions = array<i32: 1>} : vector<32x24xi32>
    %c1_i32_19 = arith.constant 1 : i32
    %35 = vector.broadcast %c1_i32_19 : i32 to vector<32x24xi32>
    %36 = arith.cmpi sge, %34, %35 : vector<32x24xi32>
    %c1_i32_20 = arith.constant 1 : i32
    %37 = tpu.dynamic_rotate %33 by %c1_i32_20 dim 1 : vector<32x24xf32>, i32 -> vector<32x24xf32>
    %cst_21 = arith.constant 0.000000e+00 : f32
    %38 = vector.broadcast %cst_21 : f32 to vector<32x24xf32>
    %39 = arith.select %36, %37, %38 : vector<32x24xi1>, vector<32x24xf32>
    %c22_i32_22 = arith.constant 22 : i32
    %40 = vector.broadcast %c22_i32_22 : i32 to vector<32x24xi32>
    %41 = arith.cmpi sle, %34, %40 : vector<32x24xi32>
    %c23_i32_23 = arith.constant 23 : i32
    %42 = tpu.dynamic_rotate %33 by %c23_i32_23 dim 1 : vector<32x24xf32>, i32 -> vector<32x24xf32>
    %cst_24 = arith.constant 0.000000e+00 : f32
    %43 = vector.broadcast %cst_24 : f32 to vector<32x24xf32>
    %44 = arith.select %41, %42, %43 : vector<32x24xi1>, vector<32x24xf32>
    %45 = tpu.concatenate %39, %33, %44 in 0 : vector<32x24xf32>, vector<32x24xf32>, vector<32x24xf32> -> vector<96x24xf32>
    %cst_25 = arith.constant dense<0.000000e+00> : vector<32x24xf32>
    %46 = tpu.matmul %31, %45, %cst_25 {dimension_numbers = #tpu.dot_dimension_numbers<[1], [0], [0], [1], [0, 0, 1, 1], [], []>} : vector<32x96xf32>, vector<96x24xf32>, vector<32x24xf32> -> vector<32x24xf32>
    %cst_26 = arith.constant 0.000000e+00 : f32
    %47 = vector.broadcast %cst_26 : f32 to vector<32x24xf32>
    %48 = arith.maximumf %30, %47 : vector<32x24xf32>
    %49 = tpu.iota {dimensions = array<i32: 1>} : vector<32x24xi32>
    %c1_i32_27 = arith.constant 1 : i32
    %50 = vector.broadcast %c1_i32_27 : i32 to vector<32x24xi32>
    %51 = arith.cmpi sge, %49, %50 : vector<32x24xi32>
    %c1_i32_28 = arith.constant 1 : i32
    %52 = tpu.dynamic_rotate %48 by %c1_i32_28 dim 1 : vector<32x24xf32>, i32 -> vector<32x24xf32>
    %cst_29 = arith.constant 0.000000e+00 : f32
    %53 = vector.broadcast %cst_29 : f32 to vector<32x24xf32>
    %54 = arith.select %51, %52, %53 : vector<32x24xi1>, vector<32x24xf32>
    %c22_i32_30 = arith.constant 22 : i32
    %55 = vector.broadcast %c22_i32_30 : i32 to vector<32x24xi32>
    %56 = arith.cmpi sle, %49, %55 : vector<32x24xi32>
    %c23_i32_31 = arith.constant 23 : i32
    %57 = tpu.dynamic_rotate %48 by %c23_i32_31 dim 1 : vector<32x24xf32>, i32 -> vector<32x24xf32>
    %cst_32 = arith.constant 0.000000e+00 : f32
    %58 = vector.broadcast %cst_32 : f32 to vector<32x24xf32>
    %59 = arith.select %56, %57, %58 : vector<32x24xi1>, vector<32x24xf32>
    %60 = tpu.concatenate %54, %48, %59 in 0 : vector<32x24xf32>, vector<32x24xf32>, vector<32x24xf32> -> vector<96x24xf32>
    %cst_33 = arith.constant dense<0.000000e+00> : vector<32x24xf32>
    %61 = tpu.matmul %31, %60, %cst_33 {dimension_numbers = #tpu.dot_dimension_numbers<[1], [0], [0], [1], [0, 0, 1, 1], [], []>} : vector<32x96xf32>, vector<96x24xf32>, vector<32x24xf32> -> vector<32x24xf32>
    %cst_34 = arith.constant dense<0.000000e+00> : vector<32xf32>
    %62 = vector.multi_reduction <add>, %46, %cst_34 [1] : vector<32x24xf32> to vector<32xf32>
    %63 = vector.shape_cast %62 : vector<32xf32> to vector<32x1xf32>
    %64 = arith.mulf %46, %46 : vector<32x24xf32>
    %cst_35 = arith.constant dense<0.000000e+00> : vector<32xf32>
    %65 = vector.multi_reduction <add>, %64, %cst_35 [1] : vector<32x24xf32> to vector<32xf32>
    %66 = vector.shape_cast %65 : vector<32xf32> to vector<32x1xf32>
    %cst_36 = arith.constant dense<0.000000e+00> : vector<32xf32>
    %67 = vector.multi_reduction <add>, %61, %cst_36 [1] : vector<32x24xf32> to vector<32xf32>
    %68 = vector.shape_cast %67 : vector<32xf32> to vector<32x1xf32>
    %69 = arith.addf %63, %68 : vector<32x1xf32>
    %70 = arith.mulf %61, %61 : vector<32x24xf32>
    %cst_37 = arith.constant dense<0.000000e+00> : vector<32xf32>
    %71 = vector.multi_reduction <add>, %70, %cst_37 [1] : vector<32x24xf32> to vector<32xf32>
    %72 = vector.shape_cast %71 : vector<32xf32> to vector<32x1xf32>
    %73 = arith.addf %66, %72 : vector<32x1xf32>
    %cst_38 = arith.constant 0.020833334 : f32
    %74 = vector.broadcast %cst_38 : f32 to vector<32x1xf32>
    %75 = arith.mulf %69, %74 : vector<32x1xf32>
    %cst_39 = arith.constant 0.020833334 : f32
    %76 = vector.broadcast %cst_39 : f32 to vector<32x1xf32>
    %77 = arith.mulf %73, %76 : vector<32x1xf32>
    %78 = arith.mulf %75, %75 : vector<32x1xf32>
    %79 = arith.subf %77, %78 : vector<32x1xf32>
    %c0_40 = arith.constant 0 : index
    %c0_41 = arith.constant 0 : index
    %80 = vector.load %arg3[%c0_40, %c0_41] : memref<32x1xf32, #tpu.memory_space<vmem>>, vector<32x1xf32>
    %cst_42 = arith.constant 9.99999974E-6 : f32
    %81 = vector.broadcast %cst_42 : f32 to vector<32x1xf32>
    %82 = arith.addf %79, %81 : vector<32x1xf32>
    %83 = math.rsqrt %82 : vector<32x1xf32>
    %84 = arith.mulf %80, %83 : vector<32x1xf32>
    %c0_43 = arith.constant 0 : index
    %c0_44 = arith.constant 0 : index
    %85 = vector.load %arg4[%c0_43, %c0_44] : memref<32x1xf32, #tpu.memory_space<vmem>>, vector<32x1xf32>
    %86 = arith.mulf %75, %84 : vector<32x1xf32>
    %87 = arith.subf %85, %86 : vector<32x1xf32>
    %88 = vector.broadcast %84 : vector<32x1xf32> to vector<32x24xf32>
    %89 = arith.mulf %46, %88 : vector<32x24xf32>
    %90 = vector.broadcast %87 : vector<32x1xf32> to vector<32x24xf32>
    %91 = arith.addf %89, %90 : vector<32x24xf32>
    %92 = vector.broadcast %84 : vector<32x1xf32> to vector<32x24xf32>
    %93 = arith.mulf %61, %92 : vector<32x24xf32>
    %94 = vector.broadcast %87 : vector<32x1xf32> to vector<32x24xf32>
    %95 = arith.addf %93, %94 : vector<32x24xf32>
    %c0_45 = arith.constant 0 : index
    %c0_46 = arith.constant 0 : index
    %96 = vector.load %arg5[%c0_45, %c0_46] : memref<32x96xf32, #tpu.memory_space<vmem>>, vector<32x96xf32>
    %cst_47 = arith.constant 0.000000e+00 : f32
    %97 = vector.broadcast %cst_47 : f32 to vector<32x24xf32>
    %98 = arith.maximumf %91, %97 : vector<32x24xf32>
    %99 = tpu.iota {dimensions = array<i32: 1>} : vector<32x24xi32>
    %c1_i32_48 = arith.constant 1 : i32
    %100 = vector.broadcast %c1_i32_48 : i32 to vector<32x24xi32>
    %101 = arith.cmpi sge, %99, %100 : vector<32x24xi32>
    %c1_i32_49 = arith.constant 1 : i32
    %102 = tpu.dynamic_rotate %98 by %c1_i32_49 dim 1 : vector<32x24xf32>, i32 -> vector<32x24xf32>
    %cst_50 = arith.constant 0.000000e+00 : f32
    %103 = vector.broadcast %cst_50 : f32 to vector<32x24xf32>
    %104 = arith.select %101, %102, %103 : vector<32x24xi1>, vector<32x24xf32>
    %c22_i32_51 = arith.constant 22 : i32
    %105 = vector.broadcast %c22_i32_51 : i32 to vector<32x24xi32>
    %106 = arith.cmpi sle, %99, %105 : vector<32x24xi32>
    %c23_i32_52 = arith.constant 23 : i32
    %107 = tpu.dynamic_rotate %98 by %c23_i32_52 dim 1 : vector<32x24xf32>, i32 -> vector<32x24xf32>
    %cst_53 = arith.constant 0.000000e+00 : f32
    %108 = vector.broadcast %cst_53 : f32 to vector<32x24xf32>
    %109 = arith.select %106, %107, %108 : vector<32x24xi1>, vector<32x24xf32>
    %110 = tpu.concatenate %104, %98, %109 in 0 : vector<32x24xf32>, vector<32x24xf32>, vector<32x24xf32> -> vector<96x24xf32>
    %cst_54 = arith.constant dense<0.000000e+00> : vector<32x24xf32>
    %111 = tpu.matmul %96, %110, %cst_54 {dimension_numbers = #tpu.dot_dimension_numbers<[1], [0], [0], [1], [0, 0, 1, 1], [], []>} : vector<32x96xf32>, vector<96x24xf32>, vector<32x24xf32> -> vector<32x24xf32>
    %cst_55 = arith.constant 0.000000e+00 : f32
    %112 = vector.broadcast %cst_55 : f32 to vector<32x24xf32>
    %113 = arith.maximumf %95, %112 : vector<32x24xf32>
    %114 = tpu.iota {dimensions = array<i32: 1>} : vector<32x24xi32>
    %c1_i32_56 = arith.constant 1 : i32
    %115 = vector.broadcast %c1_i32_56 : i32 to vector<32x24xi32>
    %116 = arith.cmpi sge, %114, %115 : vector<32x24xi32>
    %c1_i32_57 = arith.constant 1 : i32
    %117 = tpu.dynamic_rotate %113 by %c1_i32_57 dim 1 : vector<32x24xf32>, i32 -> vector<32x24xf32>
    %cst_58 = arith.constant 0.000000e+00 : f32
    %118 = vector.broadcast %cst_58 : f32 to vector<32x24xf32>
    %119 = arith.select %116, %117, %118 : vector<32x24xi1>, vector<32x24xf32>
    %c22_i32_59 = arith.constant 22 : i32
    %120 = vector.broadcast %c22_i32_59 : i32 to vector<32x24xi32>
    %121 = arith.cmpi sle, %114, %120 : vector<32x24xi32>
    %c23_i32_60 = arith.constant 23 : i32
    %122 = tpu.dynamic_rotate %113 by %c23_i32_60 dim 1 : vector<32x24xf32>, i32 -> vector<32x24xf32>
    %cst_61 = arith.constant 0.000000e+00 : f32
    %123 = vector.broadcast %cst_61 : f32 to vector<32x24xf32>
    %124 = arith.select %121, %122, %123 : vector<32x24xi1>, vector<32x24xf32>
    %125 = tpu.concatenate %119, %113, %124 in 0 : vector<32x24xf32>, vector<32x24xf32>, vector<32x24xf32> -> vector<96x24xf32>
    %cst_62 = arith.constant dense<0.000000e+00> : vector<32x24xf32>
    %126 = tpu.matmul %96, %125, %cst_62 {dimension_numbers = #tpu.dot_dimension_numbers<[1], [0], [0], [1], [0, 0, 1, 1], [], []>} : vector<32x96xf32>, vector<96x24xf32>, vector<32x24xf32> -> vector<32x24xf32>
    %cst_63 = arith.constant dense<0.000000e+00> : vector<32xf32>
    %127 = vector.multi_reduction <add>, %111, %cst_63 [1] : vector<32x24xf32> to vector<32xf32>
    %128 = vector.shape_cast %127 : vector<32xf32> to vector<32x1xf32>
    %129 = arith.mulf %111, %111 : vector<32x24xf32>
    %cst_64 = arith.constant dense<0.000000e+00> : vector<32xf32>
    %130 = vector.multi_reduction <add>, %129, %cst_64 [1] : vector<32x24xf32> to vector<32xf32>
    %131 = vector.shape_cast %130 : vector<32xf32> to vector<32x1xf32>
    %cst_65 = arith.constant dense<0.000000e+00> : vector<32xf32>
    %132 = vector.multi_reduction <add>, %126, %cst_65 [1] : vector<32x24xf32> to vector<32xf32>
    %133 = vector.shape_cast %132 : vector<32xf32> to vector<32x1xf32>
    %134 = arith.addf %128, %133 : vector<32x1xf32>
    %135 = arith.mulf %126, %126 : vector<32x24xf32>
    %cst_66 = arith.constant dense<0.000000e+00> : vector<32xf32>
    %136 = vector.multi_reduction <add>, %135, %cst_66 [1] : vector<32x24xf32> to vector<32xf32>
    %137 = vector.shape_cast %136 : vector<32xf32> to vector<32x1xf32>
    %138 = arith.addf %131, %137 : vector<32x1xf32>
    %cst_67 = arith.constant 0.020833334 : f32
    %139 = vector.broadcast %cst_67 : f32 to vector<32x1xf32>
    %140 = arith.mulf %134, %139 : vector<32x1xf32>
    %cst_68 = arith.constant 0.020833334 : f32
    %141 = vector.broadcast %cst_68 : f32 to vector<32x1xf32>
    %142 = arith.mulf %138, %141 : vector<32x1xf32>
    %143 = arith.mulf %140, %140 : vector<32x1xf32>
    %144 = arith.subf %142, %143 : vector<32x1xf32>
    %c0_69 = arith.constant 0 : index
    %c0_70 = arith.constant 0 : index
    %145 = vector.load %arg6[%c0_69, %c0_70] : memref<32x1xf32, #tpu.memory_space<vmem>>, vector<32x1xf32>
    %cst_71 = arith.constant 9.99999974E-6 : f32
    %146 = vector.broadcast %cst_71 : f32 to vector<32x1xf32>
    %147 = arith.addf %144, %146 : vector<32x1xf32>
    %148 = math.rsqrt %147 : vector<32x1xf32>
    %149 = arith.mulf %145, %148 : vector<32x1xf32>
    %c0_72 = arith.constant 0 : index
    %c0_73 = arith.constant 0 : index
    %150 = vector.load %arg7[%c0_72, %c0_73] : memref<32x1xf32, #tpu.memory_space<vmem>>, vector<32x1xf32>
    %151 = arith.mulf %140, %149 : vector<32x1xf32>
    %152 = arith.subf %150, %151 : vector<32x1xf32>
    %153 = vector.broadcast %149 : vector<32x1xf32> to vector<32x24xf32>
    %154 = arith.mulf %111, %153 : vector<32x24xf32>
    %155 = vector.broadcast %152 : vector<32x1xf32> to vector<32x24xf32>
    %156 = arith.addf %154, %155 : vector<32x24xf32>
    %157 = vector.broadcast %149 : vector<32x1xf32> to vector<32x24xf32>
    %158 = arith.mulf %126, %157 : vector<32x24xf32>
    %159 = vector.broadcast %152 : vector<32x1xf32> to vector<32x24xf32>
    %160 = arith.addf %158, %159 : vector<32x24xf32>
    %c0_74 = arith.constant 0 : index
    %c0_75 = arith.constant 0 : index
    %161 = vector.load %arg11[%c0_74, %c0_75] : memref<32x32xf32, #tpu.memory_space<vmem>>, vector<32x32xf32>
    %c0_76 = arith.constant 0 : index
    %c0_77 = arith.constant 0 : index
    %162 = vector.load %arg12[%c0_76, %c0_77] : memref<32x32xf32, #tpu.memory_space<vmem>>, vector<32x32xf32>
    %cst_78 = arith.constant dense<0.000000e+00> : vector<32x24xf32>
    %163 = tpu.matmul %161, %91, %cst_78 {dimension_numbers = #tpu.dot_dimension_numbers<[1], [0], [0], [1], [0, 0, 1, 1], [], []>} : vector<32x32xf32>, vector<32x24xf32>, vector<32x24xf32> -> vector<32x24xf32>
    %cst_79 = arith.constant dense<0.000000e+00> : vector<32x24xf32>
    %164 = tpu.matmul %162, %156, %cst_79 {dimension_numbers = #tpu.dot_dimension_numbers<[1], [0], [0], [1], [0, 0, 1, 1], [], []>} : vector<32x32xf32>, vector<32x24xf32>, vector<32x24xf32> -> vector<32x24xf32>
    %165 = arith.addf %163, %164 : vector<32x24xf32>
    %cst_80 = arith.constant dense<0.000000e+00> : vector<32x24xf32>
    %166 = tpu.matmul %161, %95, %cst_80 {dimension_numbers = #tpu.dot_dimension_numbers<[1], [0], [0], [1], [0, 0, 1, 1], [], []>} : vector<32x32xf32>, vector<32x24xf32>, vector<32x24xf32> -> vector<32x24xf32>
    %cst_81 = arith.constant dense<0.000000e+00> : vector<32x24xf32>
    %167 = tpu.matmul %162, %160, %cst_81 {dimension_numbers = #tpu.dot_dimension_numbers<[1], [0], [0], [1], [0, 0, 1, 1], [], []>} : vector<32x32xf32>, vector<32x24xf32>, vector<32x24xf32> -> vector<32x24xf32>
    %168 = arith.addf %166, %167 : vector<32x24xf32>
    %c0_82 = arith.constant 0 : index
    %c0_83 = arith.constant 0 : index
    %169 = vector.load %arg8[%c0_82, %c0_83] : memref<32x96xf32, #tpu.memory_space<vmem>>, vector<32x96xf32>
    %cst_84 = arith.constant 0.000000e+00 : f32
    %170 = vector.broadcast %cst_84 : f32 to vector<32x24xf32>
    %171 = arith.maximumf %165, %170 : vector<32x24xf32>
    %172 = tpu.iota {dimensions = array<i32: 1>} : vector<32x24xi32>
    %c1_i32_85 = arith.constant 1 : i32
    %173 = vector.broadcast %c1_i32_85 : i32 to vector<32x24xi32>
    %174 = arith.cmpi sge, %172, %173 : vector<32x24xi32>
    %c1_i32_86 = arith.constant 1 : i32
    %175 = tpu.dynamic_rotate %171 by %c1_i32_86 dim 1 : vector<32x24xf32>, i32 -> vector<32x24xf32>
    %cst_87 = arith.constant 0.000000e+00 : f32
    %176 = vector.broadcast %cst_87 : f32 to vector<32x24xf32>
    %177 = arith.select %174, %175, %176 : vector<32x24xi1>, vector<32x24xf32>
    %c22_i32_88 = arith.constant 22 : i32
    %178 = vector.broadcast %c22_i32_88 : i32 to vector<32x24xi32>
    %179 = arith.cmpi sle, %172, %178 : vector<32x24xi32>
    %c23_i32_89 = arith.constant 23 : i32
    %180 = tpu.dynamic_rotate %171 by %c23_i32_89 dim 1 : vector<32x24xf32>, i32 -> vector<32x24xf32>
    %cst_90 = arith.constant 0.000000e+00 : f32
    %181 = vector.broadcast %cst_90 : f32 to vector<32x24xf32>
    %182 = arith.select %179, %180, %181 : vector<32x24xi1>, vector<32x24xf32>
    %183 = tpu.concatenate %177, %171, %182 in 0 : vector<32x24xf32>, vector<32x24xf32>, vector<32x24xf32> -> vector<96x24xf32>
    %cst_91 = arith.constant dense<0.000000e+00> : vector<32x24xf32>
    %184 = tpu.matmul %169, %183, %cst_91 {dimension_numbers = #tpu.dot_dimension_numbers<[1], [0], [0], [1], [0, 0, 1, 1], [], []>} : vector<32x96xf32>, vector<96x24xf32>, vector<32x24xf32> -> vector<32x24xf32>
    %cst_92 = arith.constant 0.000000e+00 : f32
    %185 = vector.broadcast %cst_92 : f32 to vector<32x24xf32>
    %186 = arith.maximumf %168, %185 : vector<32x24xf32>
    %187 = tpu.iota {dimensions = array<i32: 1>} : vector<32x24xi32>
    %c1_i32_93 = arith.constant 1 : i32
    %188 = vector.broadcast %c1_i32_93 : i32 to vector<32x24xi32>
    %189 = arith.cmpi sge, %187, %188 : vector<32x24xi32>
    %c1_i32_94 = arith.constant 1 : i32
    %190 = tpu.dynamic_rotate %186 by %c1_i32_94 dim 1 : vector<32x24xf32>, i32 -> vector<32x24xf32>
    %cst_95 = arith.constant 0.000000e+00 : f32
    %191 = vector.broadcast %cst_95 : f32 to vector<32x24xf32>
    %192 = arith.select %189, %190, %191 : vector<32x24xi1>, vector<32x24xf32>
    %c22_i32_96 = arith.constant 22 : i32
    %193 = vector.broadcast %c22_i32_96 : i32 to vector<32x24xi32>
    %194 = arith.cmpi sle, %187, %193 : vector<32x24xi32>
    %c23_i32_97 = arith.constant 23 : i32
    %195 = tpu.dynamic_rotate %186 by %c23_i32_97 dim 1 : vector<32x24xf32>, i32 -> vector<32x24xf32>
    %cst_98 = arith.constant 0.000000e+00 : f32
    %196 = vector.broadcast %cst_98 : f32 to vector<32x24xf32>
    %197 = arith.select %194, %195, %196 : vector<32x24xi1>, vector<32x24xf32>
    %198 = tpu.concatenate %192, %186, %197 in 0 : vector<32x24xf32>, vector<32x24xf32>, vector<32x24xf32> -> vector<96x24xf32>
    %cst_99 = arith.constant dense<0.000000e+00> : vector<32x24xf32>
    %199 = tpu.matmul %169, %198, %cst_99 {dimension_numbers = #tpu.dot_dimension_numbers<[1], [0], [0], [1], [0, 0, 1, 1], [], []>} : vector<32x96xf32>, vector<96x24xf32>, vector<32x24xf32> -> vector<32x24xf32>
    %cst_100 = arith.constant dense<0.000000e+00> : vector<32xf32>
    %200 = vector.multi_reduction <add>, %184, %cst_100 [1] : vector<32x24xf32> to vector<32xf32>
    %201 = vector.shape_cast %200 : vector<32xf32> to vector<32x1xf32>
    %202 = arith.mulf %184, %184 : vector<32x24xf32>
    %cst_101 = arith.constant dense<0.000000e+00> : vector<32xf32>
    %203 = vector.multi_reduction <add>, %202, %cst_101 [1] : vector<32x24xf32> to vector<32xf32>
    %204 = vector.shape_cast %203 : vector<32xf32> to vector<32x1xf32>
    %cst_102 = arith.constant dense<0.000000e+00> : vector<32xf32>
    %205 = vector.multi_reduction <add>, %199, %cst_102 [1] : vector<32x24xf32> to vector<32xf32>
    %206 = vector.shape_cast %205 : vector<32xf32> to vector<32x1xf32>
    %207 = arith.addf %201, %206 : vector<32x1xf32>
    %208 = arith.mulf %199, %199 : vector<32x24xf32>
    %cst_103 = arith.constant dense<0.000000e+00> : vector<32xf32>
    %209 = vector.multi_reduction <add>, %208, %cst_103 [1] : vector<32x24xf32> to vector<32xf32>
    %210 = vector.shape_cast %209 : vector<32xf32> to vector<32x1xf32>
    %211 = arith.addf %204, %210 : vector<32x1xf32>
    %cst_104 = arith.constant 0.020833334 : f32
    %212 = vector.broadcast %cst_104 : f32 to vector<32x1xf32>
    %213 = arith.mulf %207, %212 : vector<32x1xf32>
    %cst_105 = arith.constant 0.020833334 : f32
    %214 = vector.broadcast %cst_105 : f32 to vector<32x1xf32>
    %215 = arith.mulf %211, %214 : vector<32x1xf32>
    %216 = arith.mulf %213, %213 : vector<32x1xf32>
    %217 = arith.subf %215, %216 : vector<32x1xf32>
    %c0_106 = arith.constant 0 : index
    %c0_107 = arith.constant 0 : index
    %218 = vector.load %arg9[%c0_106, %c0_107] : memref<32x1xf32, #tpu.memory_space<vmem>>, vector<32x1xf32>
    %cst_108 = arith.constant 9.99999974E-6 : f32
    %219 = vector.broadcast %cst_108 : f32 to vector<32x1xf32>
    %220 = arith.addf %217, %219 : vector<32x1xf32>
    %221 = math.rsqrt %220 : vector<32x1xf32>
    %222 = arith.mulf %218, %221 : vector<32x1xf32>
    %c0_109 = arith.constant 0 : index
    %c0_110 = arith.constant 0 : index
    %223 = vector.load %arg10[%c0_109, %c0_110] : memref<32x1xf32, #tpu.memory_space<vmem>>, vector<32x1xf32>
    %224 = arith.mulf %213, %222 : vector<32x1xf32>
    %225 = arith.subf %223, %224 : vector<32x1xf32>
    %226 = vector.broadcast %222 : vector<32x1xf32> to vector<32x24xf32>
    %227 = arith.mulf %184, %226 : vector<32x24xf32>
    %228 = vector.broadcast %225 : vector<32x1xf32> to vector<32x24xf32>
    %229 = arith.addf %227, %228 : vector<32x24xf32>
    %230 = vector.broadcast %222 : vector<32x1xf32> to vector<32x24xf32>
    %231 = arith.mulf %199, %230 : vector<32x24xf32>
    %232 = vector.broadcast %225 : vector<32x1xf32> to vector<32x24xf32>
    %233 = arith.addf %231, %232 : vector<32x24xf32>
    %c0_111 = arith.constant 0 : index
    %c0_112 = arith.constant 0 : index
    %234 = vector.load %arg13[%c0_111, %c0_112] : memref<32x32xf32, #tpu.memory_space<vmem>>, vector<32x32xf32>
    %c0_113 = arith.constant 0 : index
    %c0_114 = arith.constant 0 : index
    %235 = vector.load %arg14[%c0_113, %c0_114] : memref<32x32xf32, #tpu.memory_space<vmem>>, vector<32x32xf32>
    %cst_115 = arith.constant dense<0.000000e+00> : vector<32x24xf32>
    %236 = tpu.matmul %234, %15, %cst_115 {dimension_numbers = #tpu.dot_dimension_numbers<[1], [0], [0], [1], [0, 0, 1, 1], [], []>} : vector<32x32xf32>, vector<32x24xf32>, vector<32x24xf32> -> vector<32x24xf32>
    %cst_116 = arith.constant dense<0.000000e+00> : vector<32x24xf32>
    %237 = tpu.matmul %235, %229, %cst_116 {dimension_numbers = #tpu.dot_dimension_numbers<[1], [0], [0], [1], [0, 0, 1, 1], [], []>} : vector<32x32xf32>, vector<32x24xf32>, vector<32x24xf32> -> vector<32x24xf32>
    %238 = arith.addf %236, %237 : vector<32x24xf32>
    %cst_117 = arith.constant dense<0.000000e+00> : vector<32x24xf32>
    %239 = tpu.matmul %234, %30, %cst_117 {dimension_numbers = #tpu.dot_dimension_numbers<[1], [0], [0], [1], [0, 0, 1, 1], [], []>} : vector<32x32xf32>, vector<32x24xf32>, vector<32x24xf32> -> vector<32x24xf32>
    %cst_118 = arith.constant dense<0.000000e+00> : vector<32x24xf32>
    %240 = tpu.matmul %235, %233, %cst_118 {dimension_numbers = #tpu.dot_dimension_numbers<[1], [0], [0], [1], [0, 0, 1, 1], [], []>} : vector<32x32xf32>, vector<32x24xf32>, vector<32x24xf32> -> vector<32x24xf32>
    %241 = arith.addf %239, %240 : vector<32x24xf32>
    %cst_119 = arith.constant dense<0.000000e+00> : vector<32xf32>
    %242 = vector.multi_reduction <add>, %238, %cst_119 [1] : vector<32x24xf32> to vector<32xf32>
    %243 = vector.shape_cast %242 : vector<32xf32> to vector<32x1xf32>
    %244 = arith.mulf %238, %238 : vector<32x24xf32>
    %cst_120 = arith.constant dense<0.000000e+00> : vector<32xf32>
    %245 = vector.multi_reduction <add>, %244, %cst_120 [1] : vector<32x24xf32> to vector<32xf32>
    %246 = vector.shape_cast %245 : vector<32xf32> to vector<32x1xf32>
    %cst_121 = arith.constant dense<0.000000e+00> : vector<32xf32>
    %247 = vector.multi_reduction <add>, %241, %cst_121 [1] : vector<32x24xf32> to vector<32xf32>
    %248 = vector.shape_cast %247 : vector<32xf32> to vector<32x1xf32>
    %249 = arith.addf %243, %248 : vector<32x1xf32>
    %250 = arith.mulf %241, %241 : vector<32x24xf32>
    %cst_122 = arith.constant dense<0.000000e+00> : vector<32xf32>
    %251 = vector.multi_reduction <add>, %250, %cst_122 [1] : vector<32x24xf32> to vector<32xf32>
    %252 = vector.shape_cast %251 : vector<32xf32> to vector<32x1xf32>
    %253 = arith.addf %246, %252 : vector<32x1xf32>
    %cst_123 = arith.constant 0.020833334 : f32
    %254 = vector.broadcast %cst_123 : f32 to vector<32x1xf32>
    %255 = arith.mulf %249, %254 : vector<32x1xf32>
    %cst_124 = arith.constant 0.020833334 : f32
    %256 = vector.broadcast %cst_124 : f32 to vector<32x1xf32>
    %257 = arith.mulf %253, %256 : vector<32x1xf32>
    %258 = arith.mulf %255, %255 : vector<32x1xf32>
    %259 = arith.subf %257, %258 : vector<32x1xf32>
    %c0_125 = arith.constant 0 : index
    %c0_126 = arith.constant 0 : index
    %260 = vector.load %arg15[%c0_125, %c0_126] : memref<32x1xf32, #tpu.memory_space<vmem>>, vector<32x1xf32>
    %cst_127 = arith.constant 9.99999974E-6 : f32
    %261 = vector.broadcast %cst_127 : f32 to vector<32x1xf32>
    %262 = arith.addf %259, %261 : vector<32x1xf32>
    %263 = math.rsqrt %262 : vector<32x1xf32>
    %264 = arith.mulf %260, %263 : vector<32x1xf32>
    %c0_128 = arith.constant 0 : index
    %c0_129 = arith.constant 0 : index
    %265 = vector.load %arg16[%c0_128, %c0_129] : memref<32x1xf32, #tpu.memory_space<vmem>>, vector<32x1xf32>
    %266 = arith.mulf %255, %264 : vector<32x1xf32>
    %267 = arith.subf %265, %266 : vector<32x1xf32>
    %268 = vector.broadcast %264 : vector<32x1xf32> to vector<32x24xf32>
    %269 = arith.mulf %238, %268 : vector<32x24xf32>
    %270 = vector.broadcast %267 : vector<32x1xf32> to vector<32x24xf32>
    %271 = arith.addf %269, %270 : vector<32x24xf32>
    %272 = vector.broadcast %264 : vector<32x1xf32> to vector<32x24xf32>
    %273 = arith.mulf %241, %272 : vector<32x24xf32>
    %274 = vector.broadcast %267 : vector<32x1xf32> to vector<32x24xf32>
    %275 = arith.addf %273, %274 : vector<32x24xf32>
    %cst_130 = arith.constant 0.000000e+00 : f32
    %276 = vector.broadcast %cst_130 : f32 to vector<32x24xf32>
    %277 = arith.maximumf %271, %276 : vector<32x24xf32>
    %cst_131 = arith.constant 0.000000e+00 : f32
    %278 = vector.broadcast %cst_131 : f32 to vector<32x24xf32>
    %279 = arith.maximumf %275, %278 : vector<32x24xf32>
    %c0_132 = arith.constant 0 : index
    %c0_133 = arith.constant 0 : index
    %280 = vector.load %arg17[%c0_132, %c0_133] : memref<4x32xf32, #tpu.memory_space<vmem>>, vector<4x32xf32>
    %c0_134 = arith.constant 0 : index
    %c0_135 = arith.constant 0 : index
    %281 = vector.load %arg18[%c0_134, %c0_135] : memref<32x4xf32, #tpu.memory_space<vmem>>, vector<32x4xf32>
    %282 = tpu.iota {dimensions = array<i32: 1>} : vector<1x24xi32>
    %cst_136 = arith.constant dense<0.000000e+00> : vector<32xf32>
    %283 = vector.multi_reduction <add>, %277, %cst_136 [1] : vector<32x24xf32> to vector<32xf32>
    %284 = vector.shape_cast %283 : vector<32xf32> to vector<32x1xf32>
    %cst_137 = arith.constant 2.400000e+01 : f32
    %285 = vector.broadcast %cst_137 : f32 to vector<32x1xf32>
    %286 = arith.divf %284, %285 : vector<32x1xf32>
    %cst_138 = arith.constant dense<0xFF800000> : vector<32xf32>
    %287 = vector.multi_reduction <maximumf>, %277, %cst_138 [1] : vector<32x24xf32> to vector<32xf32>
    %288 = vector.shape_cast %287 : vector<32xf32> to vector<32x1xf32>
    %cst_139 = arith.constant dense<0.000000e+00> : vector<4x1xf32>
    %289 = tpu.matmul %280, %286, %cst_139 {dimension_numbers = #tpu.dot_dimension_numbers<[1], [0], [0], [1], [0, 0, 1, 1], [], []>} : vector<4x32xf32>, vector<32x1xf32>, vector<4x1xf32> -> vector<4x1xf32>
    %cst_140 = arith.constant 0.000000e+00 : f32
    %290 = vector.broadcast %cst_140 : f32 to vector<4x1xf32>
    %291 = arith.maximumf %289, %290 : vector<4x1xf32>
    %cst_141 = arith.constant dense<0.000000e+00> : vector<4x1xf32>
    %292 = tpu.matmul %280, %288, %cst_141 {dimension_numbers = #tpu.dot_dimension_numbers<[1], [0], [0], [1], [0, 0, 1, 1], [], []>} : vector<4x32xf32>, vector<32x1xf32>, vector<4x1xf32> -> vector<4x1xf32>
    %cst_142 = arith.constant 0.000000e+00 : f32
    %293 = vector.broadcast %cst_142 : f32 to vector<4x1xf32>
    %294 = arith.maximumf %292, %293 : vector<4x1xf32>
    %295 = arith.addf %291, %294 : vector<4x1xf32>
    %cst_143 = arith.constant dense<0.000000e+00> : vector<32x1xf32>
    %296 = tpu.matmul %281, %295, %cst_143 {dimension_numbers = #tpu.dot_dimension_numbers<[1], [0], [0], [1], [0, 0, 1, 1], [], []>} : vector<32x4xf32>, vector<4x1xf32>, vector<32x1xf32> -> vector<32x1xf32>
    %297 = arith.negf %296 : vector<32x1xf32>
    %298 = math.exp %297 : vector<32x1xf32>
    %cst_144 = arith.constant 1.000000e+00 : f32
    %299 = vector.broadcast %cst_144 : f32 to vector<32x1xf32>
    %300 = arith.addf %299, %298 : vector<32x1xf32>
    %301 = arith.divf %299, %300 : vector<32x1xf32>
    %302 = vector.broadcast %301 : vector<32x1xf32> to vector<32x24xf32>
    %303 = arith.mulf %277, %302 : vector<32x24xf32>
    %cst_145 = arith.constant dense<0.000000e+00> : vector<24xf32>
    %304 = vector.multi_reduction <add>, %303, %cst_145 [0] : vector<32x24xf32> to vector<24xf32>
    %305 = vector.shape_cast %304 : vector<24xf32> to vector<1x24xf32>
    %cst_146 = arith.constant 3.200000e+01 : f32
    %306 = vector.broadcast %cst_146 : f32 to vector<1x24xf32>
    %307 = arith.divf %305, %306 : vector<1x24xf32>
    %cst_147 = arith.constant dense<0xFF800000> : vector<24xf32>
    %308 = vector.multi_reduction <maximumf>, %303, %cst_147 [0] : vector<32x24xf32> to vector<24xf32>
    %309 = vector.shape_cast %308 : vector<24xf32> to vector<1x24xf32>
    %cst_148 = arith.constant 0.000000e+00 : f32
    %310 = vector.broadcast %cst_148 : f32 to vector<1x24xf32>
    %c3_i32 = arith.constant 3 : i32
    %311 = tpu.dynamic_rotate %307 by %c3_i32 dim 1 : vector<1x24xf32>, i32 -> vector<1x24xf32>
    %c3_i32_149 = arith.constant 3 : i32
    %312 = tpu.dynamic_rotate %309 by %c3_i32_149 dim 1 : vector<1x24xf32>, i32 -> vector<1x24xf32>
    %c-3_i32 = arith.constant -3 : i32
    %313 = vector.broadcast %c-3_i32 : i32 to vector<1x24xi32>
    %314 = arith.addi %282, %313 : vector<1x24xi32>
    %c0_i32 = arith.constant 0 : i32
    %315 = vector.broadcast %c0_i32 : i32 to vector<1x24xi32>
    %316 = arith.cmpi sge, %314, %315 : vector<1x24xi32>
    %c-3_i32_150 = arith.constant -3 : i32
    %317 = vector.broadcast %c-3_i32_150 : i32 to vector<1x24xi32>
    %318 = arith.addi %282, %317 : vector<1x24xi32>
    %c23_i32_151 = arith.constant 23 : i32
    %319 = vector.broadcast %c23_i32_151 : i32 to vector<1x24xi32>
    %320 = arith.cmpi sle, %318, %319 : vector<1x24xi32>
    %321 = arith.andi %316, %320 : vector<1x24xi1>
    %c0_152 = arith.constant 0 : index
    %c0_153 = arith.constant 0 : index
    %322 = memref.load %arg19[%c0_152, %c0_153] : memref<2x7xf32, #tpu.memory_space<smem>>
    %323 = vector.broadcast %322 : f32 to vector<1x24xf32>
    %324 = arith.mulf %323, %311 : vector<1x24xf32>
    %c1_154 = arith.constant 1 : index
    %c0_155 = arith.constant 0 : index
    %325 = memref.load %arg19[%c1_154, %c0_155] : memref<2x7xf32, #tpu.memory_space<smem>>
    %326 = vector.broadcast %325 : f32 to vector<1x24xf32>
    %327 = arith.mulf %326, %312 : vector<1x24xf32>
    %328 = arith.addf %324, %327 : vector<1x24xf32>
    %cst_156 = arith.constant 0.000000e+00 : f32
    %329 = vector.broadcast %cst_156 : f32 to vector<1x24xf32>
    %330 = arith.select %321, %328, %329 : vector<1x24xi1>, vector<1x24xf32>
    %331 = arith.addf %310, %330 : vector<1x24xf32>
    %c2_i32 = arith.constant 2 : i32
    %332 = tpu.dynamic_rotate %307 by %c2_i32 dim 1 : vector<1x24xf32>, i32 -> vector<1x24xf32>
    %c2_i32_157 = arith.constant 2 : i32
    %333 = tpu.dynamic_rotate %309 by %c2_i32_157 dim 1 : vector<1x24xf32>, i32 -> vector<1x24xf32>
    %c-2_i32 = arith.constant -2 : i32
    %334 = vector.broadcast %c-2_i32 : i32 to vector<1x24xi32>
    %335 = arith.addi %282, %334 : vector<1x24xi32>
    %c0_i32_158 = arith.constant 0 : i32
    %336 = vector.broadcast %c0_i32_158 : i32 to vector<1x24xi32>
    %337 = arith.cmpi sge, %335, %336 : vector<1x24xi32>
    %c-2_i32_159 = arith.constant -2 : i32
    %338 = vector.broadcast %c-2_i32_159 : i32 to vector<1x24xi32>
    %339 = arith.addi %282, %338 : vector<1x24xi32>
    %c23_i32_160 = arith.constant 23 : i32
    %340 = vector.broadcast %c23_i32_160 : i32 to vector<1x24xi32>
    %341 = arith.cmpi sle, %339, %340 : vector<1x24xi32>
    %342 = arith.andi %337, %341 : vector<1x24xi1>
    %c0_161 = arith.constant 0 : index
    %c1_162 = arith.constant 1 : index
    %343 = memref.load %arg19[%c0_161, %c1_162] : memref<2x7xf32, #tpu.memory_space<smem>>
    %344 = vector.broadcast %343 : f32 to vector<1x24xf32>
    %345 = arith.mulf %344, %332 : vector<1x24xf32>
    %c1_163 = arith.constant 1 : index
    %c1_164 = arith.constant 1 : index
    %346 = memref.load %arg19[%c1_163, %c1_164] : memref<2x7xf32, #tpu.memory_space<smem>>
    %347 = vector.broadcast %346 : f32 to vector<1x24xf32>
    %348 = arith.mulf %347, %333 : vector<1x24xf32>
    %349 = arith.addf %345, %348 : vector<1x24xf32>
    %cst_165 = arith.constant 0.000000e+00 : f32
    %350 = vector.broadcast %cst_165 : f32 to vector<1x24xf32>
    %351 = arith.select %342, %349, %350 : vector<1x24xi1>, vector<1x24xf32>
    %352 = arith.addf %331, %351 : vector<1x24xf32>
    %c1_i32_166 = arith.constant 1 : i32
    %353 = tpu.dynamic_rotate %307 by %c1_i32_166 dim 1 : vector<1x24xf32>, i32 -> vector<1x24xf32>
    %c1_i32_167 = arith.constant 1 : i32
    %354 = tpu.dynamic_rotate %309 by %c1_i32_167 dim 1 : vector<1x24xf32>, i32 -> vector<1x24xf32>
    %c-1_i32 = arith.constant -1 : i32
    %355 = vector.broadcast %c-1_i32 : i32 to vector<1x24xi32>
    %356 = arith.addi %282, %355 : vector<1x24xi32>
    %c0_i32_168 = arith.constant 0 : i32
    %357 = vector.broadcast %c0_i32_168 : i32 to vector<1x24xi32>
    %358 = arith.cmpi sge, %356, %357 : vector<1x24xi32>
    %c-1_i32_169 = arith.constant -1 : i32
    %359 = vector.broadcast %c-1_i32_169 : i32 to vector<1x24xi32>
    %360 = arith.addi %282, %359 : vector<1x24xi32>
    %c23_i32_170 = arith.constant 23 : i32
    %361 = vector.broadcast %c23_i32_170 : i32 to vector<1x24xi32>
    %362 = arith.cmpi sle, %360, %361 : vector<1x24xi32>
    %363 = arith.andi %358, %362 : vector<1x24xi1>
    %c0_171 = arith.constant 0 : index
    %c2 = arith.constant 2 : index
    %364 = memref.load %arg19[%c0_171, %c2] : memref<2x7xf32, #tpu.memory_space<smem>>
    %365 = vector.broadcast %364 : f32 to vector<1x24xf32>
    %366 = arith.mulf %365, %353 : vector<1x24xf32>
    %c1_172 = arith.constant 1 : index
    %c2_173 = arith.constant 2 : index
    %367 = memref.load %arg19[%c1_172, %c2_173] : memref<2x7xf32, #tpu.memory_space<smem>>
    %368 = vector.broadcast %367 : f32 to vector<1x24xf32>
    %369 = arith.mulf %368, %354 : vector<1x24xf32>
    %370 = arith.addf %366, %369 : vector<1x24xf32>
    %cst_174 = arith.constant 0.000000e+00 : f32
    %371 = vector.broadcast %cst_174 : f32 to vector<1x24xf32>
    %372 = arith.select %363, %370, %371 : vector<1x24xi1>, vector<1x24xf32>
    %373 = arith.addf %352, %372 : vector<1x24xf32>
    %c0_i32_175 = arith.constant 0 : i32
    %374 = vector.broadcast %c0_i32_175 : i32 to vector<1x24xi32>
    %375 = arith.addi %282, %374 : vector<1x24xi32>
    %c0_i32_176 = arith.constant 0 : i32
    %376 = vector.broadcast %c0_i32_176 : i32 to vector<1x24xi32>
    %377 = arith.cmpi sge, %375, %376 : vector<1x24xi32>
    %c0_i32_177 = arith.constant 0 : i32
    %378 = vector.broadcast %c0_i32_177 : i32 to vector<1x24xi32>
    %379 = arith.addi %282, %378 : vector<1x24xi32>
    %c23_i32_178 = arith.constant 23 : i32
    %380 = vector.broadcast %c23_i32_178 : i32 to vector<1x24xi32>
    %381 = arith.cmpi sle, %379, %380 : vector<1x24xi32>
    %382 = arith.andi %377, %381 : vector<1x24xi1>
    %c0_179 = arith.constant 0 : index
    %c3 = arith.constant 3 : index
    %383 = memref.load %arg19[%c0_179, %c3] : memref<2x7xf32, #tpu.memory_space<smem>>
    %384 = vector.broadcast %383 : f32 to vector<1x24xf32>
    %385 = arith.mulf %384, %307 : vector<1x24xf32>
    %c1_180 = arith.constant 1 : index
    %c3_181 = arith.constant 3 : index
    %386 = memref.load %arg19[%c1_180, %c3_181] : memref<2x7xf32, #tpu.memory_space<smem>>
    %387 = vector.broadcast %386 : f32 to vector<1x24xf32>
    %388 = arith.mulf %387, %309 : vector<1x24xf32>
    %389 = arith.addf %385, %388 : vector<1x24xf32>
    %cst_182 = arith.constant 0.000000e+00 : f32
    %390 = vector.broadcast %cst_182 : f32 to vector<1x24xf32>
    %391 = arith.select %382, %389, %390 : vector<1x24xi1>, vector<1x24xf32>
    %392 = arith.addf %373, %391 : vector<1x24xf32>
    %c23_i32_183 = arith.constant 23 : i32
    %393 = tpu.dynamic_rotate %307 by %c23_i32_183 dim 1 : vector<1x24xf32>, i32 -> vector<1x24xf32>
    %c23_i32_184 = arith.constant 23 : i32
    %394 = tpu.dynamic_rotate %309 by %c23_i32_184 dim 1 : vector<1x24xf32>, i32 -> vector<1x24xf32>
    %c1_i32_185 = arith.constant 1 : i32
    %395 = vector.broadcast %c1_i32_185 : i32 to vector<1x24xi32>
    %396 = arith.addi %282, %395 : vector<1x24xi32>
    %c0_i32_186 = arith.constant 0 : i32
    %397 = vector.broadcast %c0_i32_186 : i32 to vector<1x24xi32>
    %398 = arith.cmpi sge, %396, %397 : vector<1x24xi32>
    %c1_i32_187 = arith.constant 1 : i32
    %399 = vector.broadcast %c1_i32_187 : i32 to vector<1x24xi32>
    %400 = arith.addi %282, %399 : vector<1x24xi32>
    %c23_i32_188 = arith.constant 23 : i32
    %401 = vector.broadcast %c23_i32_188 : i32 to vector<1x24xi32>
    %402 = arith.cmpi sle, %400, %401 : vector<1x24xi32>
    %403 = arith.andi %398, %402 : vector<1x24xi1>
    %c0_189 = arith.constant 0 : index
    %c4 = arith.constant 4 : index
    %404 = memref.load %arg19[%c0_189, %c4] : memref<2x7xf32, #tpu.memory_space<smem>>
    %405 = vector.broadcast %404 : f32 to vector<1x24xf32>
    %406 = arith.mulf %405, %393 : vector<1x24xf32>
    %c1_190 = arith.constant 1 : index
    %c4_191 = arith.constant 4 : index
    %407 = memref.load %arg19[%c1_190, %c4_191] : memref<2x7xf32, #tpu.memory_space<smem>>
    %408 = vector.broadcast %407 : f32 to vector<1x24xf32>
    %409 = arith.mulf %408, %394 : vector<1x24xf32>
    %410 = arith.addf %406, %409 : vector<1x24xf32>
    %cst_192 = arith.constant 0.000000e+00 : f32
    %411 = vector.broadcast %cst_192 : f32 to vector<1x24xf32>
    %412 = arith.select %403, %410, %411 : vector<1x24xi1>, vector<1x24xf32>
    %413 = arith.addf %392, %412 : vector<1x24xf32>
    %c22_i32_193 = arith.constant 22 : i32
    %414 = tpu.dynamic_rotate %307 by %c22_i32_193 dim 1 : vector<1x24xf32>, i32 -> vector<1x24xf32>
    %c22_i32_194 = arith.constant 22 : i32
    %415 = tpu.dynamic_rotate %309 by %c22_i32_194 dim 1 : vector<1x24xf32>, i32 -> vector<1x24xf32>
    %c2_i32_195 = arith.constant 2 : i32
    %416 = vector.broadcast %c2_i32_195 : i32 to vector<1x24xi32>
    %417 = arith.addi %282, %416 : vector<1x24xi32>
    %c0_i32_196 = arith.constant 0 : i32
    %418 = vector.broadcast %c0_i32_196 : i32 to vector<1x24xi32>
    %419 = arith.cmpi sge, %417, %418 : vector<1x24xi32>
    %c2_i32_197 = arith.constant 2 : i32
    %420 = vector.broadcast %c2_i32_197 : i32 to vector<1x24xi32>
    %421 = arith.addi %282, %420 : vector<1x24xi32>
    %c23_i32_198 = arith.constant 23 : i32
    %422 = vector.broadcast %c23_i32_198 : i32 to vector<1x24xi32>
    %423 = arith.cmpi sle, %421, %422 : vector<1x24xi32>
    %424 = arith.andi %419, %423 : vector<1x24xi1>
    %c0_199 = arith.constant 0 : index
    %c5 = arith.constant 5 : index
    %425 = memref.load %arg19[%c0_199, %c5] : memref<2x7xf32, #tpu.memory_space<smem>>
    %426 = vector.broadcast %425 : f32 to vector<1x24xf32>
    %427 = arith.mulf %426, %414 : vector<1x24xf32>
    %c1_200 = arith.constant 1 : index
    %c5_201 = arith.constant 5 : index
    %428 = memref.load %arg19[%c1_200, %c5_201] : memref<2x7xf32, #tpu.memory_space<smem>>
    %429 = vector.broadcast %428 : f32 to vector<1x24xf32>
    %430 = arith.mulf %429, %415 : vector<1x24xf32>
    %431 = arith.addf %427, %430 : vector<1x24xf32>
    %cst_202 = arith.constant 0.000000e+00 : f32
    %432 = vector.broadcast %cst_202 : f32 to vector<1x24xf32>
    %433 = arith.select %424, %431, %432 : vector<1x24xi1>, vector<1x24xf32>
    %434 = arith.addf %413, %433 : vector<1x24xf32>
    %c21_i32 = arith.constant 21 : i32
    %435 = tpu.dynamic_rotate %307 by %c21_i32 dim 1 : vector<1x24xf32>, i32 -> vector<1x24xf32>
    %c21_i32_203 = arith.constant 21 : i32
    %436 = tpu.dynamic_rotate %309 by %c21_i32_203 dim 1 : vector<1x24xf32>, i32 -> vector<1x24xf32>
    %c3_i32_204 = arith.constant 3 : i32
    %437 = vector.broadcast %c3_i32_204 : i32 to vector<1x24xi32>
    %438 = arith.addi %282, %437 : vector<1x24xi32>
    %c0_i32_205 = arith.constant 0 : i32
    %439 = vector.broadcast %c0_i32_205 : i32 to vector<1x24xi32>
    %440 = arith.cmpi sge, %438, %439 : vector<1x24xi32>
    %c3_i32_206 = arith.constant 3 : i32
    %441 = vector.broadcast %c3_i32_206 : i32 to vector<1x24xi32>
    %442 = arith.addi %282, %441 : vector<1x24xi32>
    %c23_i32_207 = arith.constant 23 : i32
    %443 = vector.broadcast %c23_i32_207 : i32 to vector<1x24xi32>
    %444 = arith.cmpi sle, %442, %443 : vector<1x24xi32>
    %445 = arith.andi %440, %444 : vector<1x24xi1>
    %c0_208 = arith.constant 0 : index
    %c6 = arith.constant 6 : index
    %446 = memref.load %arg19[%c0_208, %c6] : memref<2x7xf32, #tpu.memory_space<smem>>
    %447 = vector.broadcast %446 : f32 to vector<1x24xf32>
    %448 = arith.mulf %447, %435 : vector<1x24xf32>
    %c1_209 = arith.constant 1 : index
    %c6_210 = arith.constant 6 : index
    %449 = memref.load %arg19[%c1_209, %c6_210] : memref<2x7xf32, #tpu.memory_space<smem>>
    %450 = vector.broadcast %449 : f32 to vector<1x24xf32>
    %451 = arith.mulf %450, %436 : vector<1x24xf32>
    %452 = arith.addf %448, %451 : vector<1x24xf32>
    %cst_211 = arith.constant 0.000000e+00 : f32
    %453 = vector.broadcast %cst_211 : f32 to vector<1x24xf32>
    %454 = arith.select %445, %452, %453 : vector<1x24xi1>, vector<1x24xf32>
    %455 = arith.addf %434, %454 : vector<1x24xf32>
    %456 = arith.negf %455 : vector<1x24xf32>
    %457 = math.exp %456 : vector<1x24xf32>
    %cst_212 = arith.constant 1.000000e+00 : f32
    %458 = vector.broadcast %cst_212 : f32 to vector<1x24xf32>
    %459 = arith.addf %458, %457 : vector<1x24xf32>
    %460 = arith.divf %458, %459 : vector<1x24xf32>
    %461 = vector.broadcast %460 : vector<1x24xf32> to vector<32x24xf32>
    %462 = arith.mulf %303, %461 : vector<32x24xf32>
    %c0_213 = arith.constant 0 : index
    %c0_214 = arith.constant 0 : index
    %c0_215 = arith.constant 0 : index
    %463 = vector.load %arg20[%c0_213, %c0_214, %c0_215] : memref<2x32x24xf32, #tpu.memory_space<vmem>>, vector<1x32x24xf32>
    %464 = vector.shape_cast %463 : vector<1x32x24xf32> to vector<32x24xf32>
    %465 = vector.shape_cast %462 : vector<32x24xf32> to vector<1x32x24xf32>
    tpu.vector_store %arg20[%c0_213, %c0_214, %c0_215], %465 {strides = array<i32>} : memref<2x32x24xf32, #tpu.memory_space<vmem>>, vector<1x32x24xf32>,
    %cst_216 = arith.constant dense<0.000000e+00> : vector<32xf32>
    %466 = vector.multi_reduction <add>, %279, %cst_216 [1] : vector<32x24xf32> to vector<32xf32>
    %467 = vector.shape_cast %466 : vector<32xf32> to vector<32x1xf32>
    %cst_217 = arith.constant 2.400000e+01 : f32
    %468 = vector.broadcast %cst_217 : f32 to vector<32x1xf32>
    %469 = arith.divf %467, %468 : vector<32x1xf32>
    %cst_218 = arith.constant dense<0xFF800000> : vector<32xf32>
    %470 = vector.multi_reduction <maximumf>, %279, %cst_218 [1] : vector<32x24xf32> to vector<32xf32>
    %471 = vector.shape_cast %470 : vector<32xf32> to vector<32x1xf32>
    %cst_219 = arith.constant dense<0.000000e+00> : vector<4x1xf32>
    %472 = tpu.matmul %280, %469, %cst_219 {dimension_numbers = #tpu.dot_dimension_numbers<[1], [0], [0], [1], [0, 0, 1, 1], [], []>} : vector<4x32xf32>, vector<32x1xf32>, vector<4x1xf32> -> vector<4x1xf32>
    %cst_220 = arith.constant 0.000000e+00 : f32
    %473 = vector.broadcast %cst_220 : f32 to vector<4x1xf32>
    %474 = arith.maximumf %472, %473 : vector<4x1xf32>
    %cst_221 = arith.constant dense<0.000000e+00> : vector<4x1xf32>
    %475 = tpu.matmul %280, %471, %cst_221 {dimension_numbers = #tpu.dot_dimension_numbers<[1], [0], [0], [1], [0, 0, 1, 1], [], []>} : vector<4x32xf32>, vector<32x1xf32>, vector<4x1xf32> -> vector<4x1xf32>
    %cst_222 = arith.constant 0.000000e+00 : f32
    %476 = vector.broadcast %cst_222 : f32 to vector<4x1xf32>
    %477 = arith.maximumf %475, %476 : vector<4x1xf32>
    %478 = arith.addf %474, %477 : vector<4x1xf32>
    %cst_223 = arith.constant dense<0.000000e+00> : vector<32x1xf32>
    %479 = tpu.matmul %281, %478, %cst_223 {dimension_numbers = #tpu.dot_dimension_numbers<[1], [0], [0], [1], [0, 0, 1, 1], [], []>} : vector<32x4xf32>, vector<4x1xf32>, vector<32x1xf32> -> vector<32x1xf32>
    %480 = arith.negf %479 : vector<32x1xf32>
    %481 = math.exp %480 : vector<32x1xf32>
    %cst_224 = arith.constant 1.000000e+00 : f32
    %482 = vector.broadcast %cst_224 : f32 to vector<32x1xf32>
    %483 = arith.addf %482, %481 : vector<32x1xf32>
    %484 = arith.divf %482, %483 : vector<32x1xf32>
    %485 = vector.broadcast %484 : vector<32x1xf32> to vector<32x24xf32>
    %486 = arith.mulf %279, %485 : vector<32x24xf32>
    %cst_225 = arith.constant dense<0.000000e+00> : vector<24xf32>
    %487 = vector.multi_reduction <add>, %486, %cst_225 [0] : vector<32x24xf32> to vector<24xf32>
    %488 = vector.shape_cast %487 : vector<24xf32> to vector<1x24xf32>
    %cst_226 = arith.constant 3.200000e+01 : f32
    %489 = vector.broadcast %cst_226 : f32 to vector<1x24xf32>
    %490 = arith.divf %488, %489 : vector<1x24xf32>
    %cst_227 = arith.constant dense<0xFF800000> : vector<24xf32>
    %491 = vector.multi_reduction <maximumf>, %486, %cst_227 [0] : vector<32x24xf32> to vector<24xf32>
    %492 = vector.shape_cast %491 : vector<24xf32> to vector<1x24xf32>
    %cst_228 = arith.constant 0.000000e+00 : f32
    %493 = vector.broadcast %cst_228 : f32 to vector<1x24xf32>
    %c3_i32_229 = arith.constant 3 : i32
    %494 = tpu.dynamic_rotate %490 by %c3_i32_229 dim 1 : vector<1x24xf32>, i32 -> vector<1x24xf32>
    %c3_i32_230 = arith.constant 3 : i32
    %495 = tpu.dynamic_rotate %492 by %c3_i32_230 dim 1 : vector<1x24xf32>, i32 -> vector<1x24xf32>
    %c-3_i32_231 = arith.constant -3 : i32
    %496 = vector.broadcast %c-3_i32_231 : i32 to vector<1x24xi32>
    %497 = arith.addi %282, %496 : vector<1x24xi32>
    %c0_i32_232 = arith.constant 0 : i32
    %498 = vector.broadcast %c0_i32_232 : i32 to vector<1x24xi32>
    %499 = arith.cmpi sge, %497, %498 : vector<1x24xi32>
    %c-3_i32_233 = arith.constant -3 : i32
    %500 = vector.broadcast %c-3_i32_233 : i32 to vector<1x24xi32>
    %501 = arith.addi %282, %500 : vector<1x24xi32>
    %c23_i32_234 = arith.constant 23 : i32
    %502 = vector.broadcast %c23_i32_234 : i32 to vector<1x24xi32>
    %503 = arith.cmpi sle, %501, %502 : vector<1x24xi32>
    %504 = arith.andi %499, %503 : vector<1x24xi1>
    %c0_235 = arith.constant 0 : index
    %c0_236 = arith.constant 0 : index
    %505 = memref.load %arg19[%c0_235, %c0_236] : memref<2x7xf32, #tpu.memory_space<smem>>
    %506 = vector.broadcast %505 : f32 to vector<1x24xf32>
    %507 = arith.mulf %506, %494 : vector<1x24xf32>
    %c1_237 = arith.constant 1 : index
    %c0_238 = arith.constant 0 : index
    %508 = memref.load %arg19[%c1_237, %c0_238] : memref<2x7xf32, #tpu.memory_space<smem>>
    %509 = vector.broadcast %508 : f32 to vector<1x24xf32>
    %510 = arith.mulf %509, %495 : vector<1x24xf32>
    %511 = arith.addf %507, %510 : vector<1x24xf32>
    %cst_239 = arith.constant 0.000000e+00 : f32
    %512 = vector.broadcast %cst_239 : f32 to vector<1x24xf32>
    %513 = arith.select %504, %511, %512 : vector<1x24xi1>, vector<1x24xf32>
    %514 = arith.addf %493, %513 : vector<1x24xf32>
    %c2_i32_240 = arith.constant 2 : i32
    %515 = tpu.dynamic_rotate %490 by %c2_i32_240 dim 1 : vector<1x24xf32>, i32 -> vector<1x24xf32>
    %c2_i32_241 = arith.constant 2 : i32
    %516 = tpu.dynamic_rotate %492 by %c2_i32_241 dim 1 : vector<1x24xf32>, i32 -> vector<1x24xf32>
    %c-2_i32_242 = arith.constant -2 : i32
    %517 = vector.broadcast %c-2_i32_242 : i32 to vector<1x24xi32>
    %518 = arith.addi %282, %517 : vector<1x24xi32>
    %c0_i32_243 = arith.constant 0 : i32
    %519 = vector.broadcast %c0_i32_243 : i32 to vector<1x24xi32>
    %520 = arith.cmpi sge, %518, %519 : vector<1x24xi32>
    %c-2_i32_244 = arith.constant -2 : i32
    %521 = vector.broadcast %c-2_i32_244 : i32 to vector<1x24xi32>
    %522 = arith.addi %282, %521 : vector<1x24xi32>
    %c23_i32_245 = arith.constant 23 : i32
    %523 = vector.broadcast %c23_i32_245 : i32 to vector<1x24xi32>
    %524 = arith.cmpi sle, %522, %523 : vector<1x24xi32>
    %525 = arith.andi %520, %524 : vector<1x24xi1>
    %c0_246 = arith.constant 0 : index
    %c1_247 = arith.constant 1 : index
    %526 = memref.load %arg19[%c0_246, %c1_247] : memref<2x7xf32, #tpu.memory_space<smem>>
    %527 = vector.broadcast %526 : f32 to vector<1x24xf32>
    %528 = arith.mulf %527, %515 : vector<1x24xf32>
    %c1_248 = arith.constant 1 : index
    %c1_249 = arith.constant 1 : index
    %529 = memref.load %arg19[%c1_248, %c1_249] : memref<2x7xf32, #tpu.memory_space<smem>>
    %530 = vector.broadcast %529 : f32 to vector<1x24xf32>
    %531 = arith.mulf %530, %516 : vector<1x24xf32>
    %532 = arith.addf %528, %531 : vector<1x24xf32>
    %cst_250 = arith.constant 0.000000e+00 : f32
    %533 = vector.broadcast %cst_250 : f32 to vector<1x24xf32>
    %534 = arith.select %525, %532, %533 : vector<1x24xi1>, vector<1x24xf32>
    %535 = arith.addf %514, %534 : vector<1x24xf32>
    %c1_i32_251 = arith.constant 1 : i32
    %536 = tpu.dynamic_rotate %490 by %c1_i32_251 dim 1 : vector<1x24xf32>, i32 -> vector<1x24xf32>
    %c1_i32_252 = arith.constant 1 : i32
    %537 = tpu.dynamic_rotate %492 by %c1_i32_252 dim 1 : vector<1x24xf32>, i32 -> vector<1x24xf32>
    %c-1_i32_253 = arith.constant -1 : i32
    %538 = vector.broadcast %c-1_i32_253 : i32 to vector<1x24xi32>
    %539 = arith.addi %282, %538 : vector<1x24xi32>
    %c0_i32_254 = arith.constant 0 : i32
    %540 = vector.broadcast %c0_i32_254 : i32 to vector<1x24xi32>
    %541 = arith.cmpi sge, %539, %540 : vector<1x24xi32>
    %c-1_i32_255 = arith.constant -1 : i32
    %542 = vector.broadcast %c-1_i32_255 : i32 to vector<1x24xi32>
    %543 = arith.addi %282, %542 : vector<1x24xi32>
    %c23_i32_256 = arith.constant 23 : i32
    %544 = vector.broadcast %c23_i32_256 : i32 to vector<1x24xi32>
    %545 = arith.cmpi sle, %543, %544 : vector<1x24xi32>
    %546 = arith.andi %541, %545 : vector<1x24xi1>
    %c0_257 = arith.constant 0 : index
    %c2_258 = arith.constant 2 : index
    %547 = memref.load %arg19[%c0_257, %c2_258] : memref<2x7xf32, #tpu.memory_space<smem>>
    %548 = vector.broadcast %547 : f32 to vector<1x24xf32>
    %549 = arith.mulf %548, %536 : vector<1x24xf32>
    %c1_259 = arith.constant 1 : index
    %c2_260 = arith.constant 2 : index
    %550 = memref.load %arg19[%c1_259, %c2_260] : memref<2x7xf32, #tpu.memory_space<smem>>
    %551 = vector.broadcast %550 : f32 to vector<1x24xf32>
    %552 = arith.mulf %551, %537 : vector<1x24xf32>
    %553 = arith.addf %549, %552 : vector<1x24xf32>
    %cst_261 = arith.constant 0.000000e+00 : f32
    %554 = vector.broadcast %cst_261 : f32 to vector<1x24xf32>
    %555 = arith.select %546, %553, %554 : vector<1x24xi1>, vector<1x24xf32>
    %556 = arith.addf %535, %555 : vector<1x24xf32>
    %c0_i32_262 = arith.constant 0 : i32
    %557 = vector.broadcast %c0_i32_262 : i32 to vector<1x24xi32>
    %558 = arith.addi %282, %557 : vector<1x24xi32>
    %c0_i32_263 = arith.constant 0 : i32
    %559 = vector.broadcast %c0_i32_263 : i32 to vector<1x24xi32>
    %560 = arith.cmpi sge, %558, %559 : vector<1x24xi32>
    %c0_i32_264 = arith.constant 0 : i32
    %561 = vector.broadcast %c0_i32_264 : i32 to vector<1x24xi32>
    %562 = arith.addi %282, %561 : vector<1x24xi32>
    %c23_i32_265 = arith.constant 23 : i32
    %563 = vector.broadcast %c23_i32_265 : i32 to vector<1x24xi32>
    %564 = arith.cmpi sle, %562, %563 : vector<1x24xi32>
    %565 = arith.andi %560, %564 : vector<1x24xi1>
    %c0_266 = arith.constant 0 : index
    %c3_267 = arith.constant 3 : index
    %566 = memref.load %arg19[%c0_266, %c3_267] : memref<2x7xf32, #tpu.memory_space<smem>>
    %567 = vector.broadcast %566 : f32 to vector<1x24xf32>
    %568 = arith.mulf %567, %490 : vector<1x24xf32>
    %c1_268 = arith.constant 1 : index
    %c3_269 = arith.constant 3 : index
    %569 = memref.load %arg19[%c1_268, %c3_269] : memref<2x7xf32, #tpu.memory_space<smem>>
    %570 = vector.broadcast %569 : f32 to vector<1x24xf32>
    %571 = arith.mulf %570, %492 : vector<1x24xf32>
    %572 = arith.addf %568, %571 : vector<1x24xf32>
    %cst_270 = arith.constant 0.000000e+00 : f32
    %573 = vector.broadcast %cst_270 : f32 to vector<1x24xf32>
    %574 = arith.select %565, %572, %573 : vector<1x24xi1>, vector<1x24xf32>
    %575 = arith.addf %556, %574 : vector<1x24xf32>
    %c23_i32_271 = arith.constant 23 : i32
    %576 = tpu.dynamic_rotate %490 by %c23_i32_271 dim 1 : vector<1x24xf32>, i32 -> vector<1x24xf32>
    %c23_i32_272 = arith.constant 23 : i32
    %577 = tpu.dynamic_rotate %492 by %c23_i32_272 dim 1 : vector<1x24xf32>, i32 -> vector<1x24xf32>
    %c1_i32_273 = arith.constant 1 : i32
    %578 = vector.broadcast %c1_i32_273 : i32 to vector<1x24xi32>
    %579 = arith.addi %282, %578 : vector<1x24xi32>
    %c0_i32_274 = arith.constant 0 : i32
    %580 = vector.broadcast %c0_i32_274 : i32 to vector<1x24xi32>
    %581 = arith.cmpi sge, %579, %580 : vector<1x24xi32>
    %c1_i32_275 = arith.constant 1 : i32
    %582 = vector.broadcast %c1_i32_275 : i32 to vector<1x24xi32>
    %583 = arith.addi %282, %582 : vector<1x24xi32>
    %c23_i32_276 = arith.constant 23 : i32
    %584 = vector.broadcast %c23_i32_276 : i32 to vector<1x24xi32>
    %585 = arith.cmpi sle, %583, %584 : vector<1x24xi32>
    %586 = arith.andi %581, %585 : vector<1x24xi1>
    %c0_277 = arith.constant 0 : index
    %c4_278 = arith.constant 4 : index
    %587 = memref.load %arg19[%c0_277, %c4_278] : memref<2x7xf32, #tpu.memory_space<smem>>
    %588 = vector.broadcast %587 : f32 to vector<1x24xf32>
    %589 = arith.mulf %588, %576 : vector<1x24xf32>
    %c1_279 = arith.constant 1 : index
    %c4_280 = arith.constant 4 : index
    %590 = memref.load %arg19[%c1_279, %c4_280] : memref<2x7xf32, #tpu.memory_space<smem>>
    %591 = vector.broadcast %590 : f32 to vector<1x24xf32>
    %592 = arith.mulf %591, %577 : vector<1x24xf32>
    %593 = arith.addf %589, %592 : vector<1x24xf32>
    %cst_281 = arith.constant 0.000000e+00 : f32
    %594 = vector.broadcast %cst_281 : f32 to vector<1x24xf32>
    %595 = arith.select %586, %593, %594 : vector<1x24xi1>, vector<1x24xf32>
    %596 = arith.addf %575, %595 : vector<1x24xf32>
    %c22_i32_282 = arith.constant 22 : i32
    %597 = tpu.dynamic_rotate %490 by %c22_i32_282 dim 1 : vector<1x24xf32>, i32 -> vector<1x24xf32>
    %c22_i32_283 = arith.constant 22 : i32
    %598 = tpu.dynamic_rotate %492 by %c22_i32_283 dim 1 : vector<1x24xf32>, i32 -> vector<1x24xf32>
    %c2_i32_284 = arith.constant 2 : i32
    %599 = vector.broadcast %c2_i32_284 : i32 to vector<1x24xi32>
    %600 = arith.addi %282, %599 : vector<1x24xi32>
    %c0_i32_285 = arith.constant 0 : i32
    %601 = vector.broadcast %c0_i32_285 : i32 to vector<1x24xi32>
    %602 = arith.cmpi sge, %600, %601 : vector<1x24xi32>
    %c2_i32_286 = arith.constant 2 : i32
    %603 = vector.broadcast %c2_i32_286 : i32 to vector<1x24xi32>
    %604 = arith.addi %282, %603 : vector<1x24xi32>
    %c23_i32_287 = arith.constant 23 : i32
    %605 = vector.broadcast %c23_i32_287 : i32 to vector<1x24xi32>
    %606 = arith.cmpi sle, %604, %605 : vector<1x24xi32>
    %607 = arith.andi %602, %606 : vector<1x24xi1>
    %c0_288 = arith.constant 0 : index
    %c5_289 = arith.constant 5 : index
    %608 = memref.load %arg19[%c0_288, %c5_289] : memref<2x7xf32, #tpu.memory_space<smem>>
    %609 = vector.broadcast %608 : f32 to vector<1x24xf32>
    %610 = arith.mulf %609, %597 : vector<1x24xf32>
    %c1_290 = arith.constant 1 : index
    %c5_291 = arith.constant 5 : index
    %611 = memref.load %arg19[%c1_290, %c5_291] : memref<2x7xf32, #tpu.memory_space<smem>>
    %612 = vector.broadcast %611 : f32 to vector<1x24xf32>
    %613 = arith.mulf %612, %598 : vector<1x24xf32>
    %614 = arith.addf %610, %613 : vector<1x24xf32>
    %cst_292 = arith.constant 0.000000e+00 : f32
    %615 = vector.broadcast %cst_292 : f32 to vector<1x24xf32>
    %616 = arith.select %607, %614, %615 : vector<1x24xi1>, vector<1x24xf32>
    %617 = arith.addf %596, %616 : vector<1x24xf32>
    %c21_i32_293 = arith.constant 21 : i32
    %618 = tpu.dynamic_rotate %490 by %c21_i32_293 dim 1 : vector<1x24xf32>, i32 -> vector<1x24xf32>
    %c21_i32_294 = arith.constant 21 : i32
    %619 = tpu.dynamic_rotate %492 by %c21_i32_294 dim 1 : vector<1x24xf32>, i32 -> vector<1x24xf32>
    %c3_i32_295 = arith.constant 3 : i32
    %620 = vector.broadcast %c3_i32_295 : i32 to vector<1x24xi32>
    %621 = arith.addi %282, %620 : vector<1x24xi32>
    %c0_i32_296 = arith.constant 0 : i32
    %622 = vector.broadcast %c0_i32_296 : i32 to vector<1x24xi32>
    %623 = arith.cmpi sge, %621, %622 : vector<1x24xi32>
    %c3_i32_297 = arith.constant 3 : i32
    %624 = vector.broadcast %c3_i32_297 : i32 to vector<1x24xi32>
    %625 = arith.addi %282, %624 : vector<1x24xi32>
    %c23_i32_298 = arith.constant 23 : i32
    %626 = vector.broadcast %c23_i32_298 : i32 to vector<1x24xi32>
    %627 = arith.cmpi sle, %625, %626 : vector<1x24xi32>
    %628 = arith.andi %623, %627 : vector<1x24xi1>
    %c0_299 = arith.constant 0 : index
    %c6_300 = arith.constant 6 : index
    %629 = memref.load %arg19[%c0_299, %c6_300] : memref<2x7xf32, #tpu.memory_space<smem>>
    %630 = vector.broadcast %629 : f32 to vector<1x24xf32>
    %631 = arith.mulf %630, %618 : vector<1x24xf32>
    %c1_301 = arith.constant 1 : index
    %c6_302 = arith.constant 6 : index
    %632 = memref.load %arg19[%c1_301, %c6_302] : memref<2x7xf32, #tpu.memory_space<smem>>
    %633 = vector.broadcast %632 : f32 to vector<1x24xf32>
    %634 = arith.mulf %633, %619 : vector<1x24xf32>
    %635 = arith.addf %631, %634 : vector<1x24xf32>
    %cst_303 = arith.constant 0.000000e+00 : f32
    %636 = vector.broadcast %cst_303 : f32 to vector<1x24xf32>
    %637 = arith.select %628, %635, %636 : vector<1x24xi1>, vector<1x24xf32>
    %638 = arith.addf %617, %637 : vector<1x24xf32>
    %639 = arith.negf %638 : vector<1x24xf32>
    %640 = math.exp %639 : vector<1x24xf32>
    %cst_304 = arith.constant 1.000000e+00 : f32
    %641 = vector.broadcast %cst_304 : f32 to vector<1x24xf32>
    %642 = arith.addf %641, %640 : vector<1x24xf32>
    %643 = arith.divf %641, %642 : vector<1x24xf32>
    %644 = vector.broadcast %643 : vector<1x24xf32> to vector<32x24xf32>
    %645 = arith.mulf %486, %644 : vector<32x24xf32>
    %c1_305 = arith.constant 1 : index
    %c0_306 = arith.constant 0 : index
    %c0_307 = arith.constant 0 : index
    %646 = vector.load %arg20[%c1_305, %c0_306, %c0_307] : memref<2x32x24xf32, #tpu.memory_space<vmem>>, vector<1x32x24xf32>
    %647 = vector.shape_cast %646 : vector<1x32x24xf32> to vector<32x24xf32>
    %648 = vector.shape_cast %645 : vector<32x24xf32> to vector<1x32x24xf32>
    tpu.vector_store %arg20[%c1_305, %c0_306, %c0_307], %648 {strides = array<i32>} : memref<2x32x24xf32, #tpu.memory_space<vmem>>, vector<1x32x24xf32>,
    return
  }
}

</mosaic_0001>

<llo_original>
// kernel: _lambda_.1
$region0: #{_lambda_.1}
  #allocation0 [shape = 'u32[]', space=smem, size = 0x4, offset = 0x4, fixed_abs, tag = 'smem constant byte address 0x4 - core index']
  #allocation1 [shape = 'u32[144,128]{1,0:T(1,128)}', space=vmem, size = 0x12000, scoped, tag = 'internal scratch']
  %s0 = inlined_call_operand.vmem [shape: f32[2,16,24], index: 0, kind: input, shape index: {}]
  %s1 = inlined_call_operand.hbm [shape: f32[32,48], index: 1, kind: input, shape index: {}]
  %s2 = inlined_call_operand.hbm [shape: f32[32,96], index: 2, kind: input, shape index: {}]
  %s3 = inlined_call_operand.vmem [shape: f32[32,1], index: 3, kind: input, shape index: {}, may-alias: {3,6,9,15}]
  %s4 = inlined_call_operand.vmem [shape: f32[32,1], index: 4, kind: input, shape index: {}, may-alias: {4,7,10,16}]
  %s5 = inlined_call_operand.hbm [shape: f32[32,96], index: 5, kind: input, shape index: {}]
  %s6 = inlined_call_operand.vmem [shape: f32[32,1], index: 6, kind: input, shape index: {}, may-alias: {3,6,9,15}]
  %s7 = inlined_call_operand.vmem [shape: f32[32,1], index: 7, kind: input, shape index: {}, may-alias: {4,7,10,16}]
  %s8 = inlined_call_operand.hbm [shape: f32[32,96], index: 8, kind: input, shape index: {}]
  %s9 = inlined_call_operand.vmem [shape: f32[32,1], index: 9, kind: input, shape index: {}, may-alias: {3,6,9,15}]
  %s10 = inlined_call_operand.vmem [shape: f32[32,1], index: 10, kind: input, shape index: {}, may-alias: {4,7,10,16}]
  %s11 = inlined_call_operand.hbm [shape: f32[32,32], index: 11, kind: input, shape index: {}]
  %s12 = inlined_call_operand.hbm [shape: f32[32,32], index: 12, kind: input, shape index: {}]
  %s13 = inlined_call_operand.vmem [shape: f32[32,32], index: 13, kind: input, shape index: {}]
  %s14 = inlined_call_operand.vmem [shape: f32[32,32], index: 14, kind: input, shape index: {}]
  %s15 = inlined_call_operand.vmem [shape: f32[32,1], index: 15, kind: input, shape index: {}, may-alias: {3,6,9,15}]
  %s16 = inlined_call_operand.vmem [shape: f32[32,1], index: 16, kind: input, shape index: {}, may-alias: {4,7,10,16}]
  %s17 = inlined_call_operand.hbm [shape: f32[4,32], index: 17, kind: input, shape index: {}]
  %s18 = inlined_call_operand.hbm [shape: f32[32,4], index: 18, kind: input, shape index: {}]
  %s19 = inlined_call_operand.hbm [shape: f32[2,7], index: 19, kind: input, shape index: {}]
  %s20 = inlined_call_operand.vmem [shape: f32[2,32,24], index: 20, kind: output, shape index: {}]
  %s21 = sld [smem:[#allocation0]]
  $region126: #{_lambda_.1} parent=0
    _
  %s23 = ssub.s32 1, %s21
  %s24 = scalar_select 0, %s23, %s21
  $region1: #{_lambda_.1} parent=0
    #allocation2 [shape = 'u8[16384]{0}', space=vmem, size = 0x4000, scoped, tag = 'input window, operand 1, single buffered']
    #allocation3 [shape = 's32[1]{0}', space=sflag, size = 0x4, scoped, tag = 'scoped memory for _lambda_.1']
    #allocation4 [shape = 's32[1]{0}', space=sflag, size = 0x4, scoped, tag = 'scoped memory for _lambda_.1']
    #allocation5 [shape = 'u8[16384]{0}', space=vmem, size = 0x4000, scoped, tag = 'input window, operand 2, single buffered']
    #allocation6 [shape = 's32[1]{0}', space=sflag, size = 0x4, scoped, tag = 'scoped memory for _lambda_.1']
    #allocation7 [shape = 'u8[16384]{0}', space=vmem, size = 0x4000, scoped, tag = 'input window, operand 5, single buffered']
    #allocation8 [shape = 'u8[16384]{0}', space=vmem, size = 0x4000, scoped, tag = 'input window, operand 8, single buffered']
    #allocation9 [shape = 's32[1]{0}', space=sflag, size = 0x4, scoped, tag = 'scoped memory for _lambda_.1']
    #allocation10 [shape = 'u8[16384]{0}', space=vmem, size = 0x4000, scoped, tag = 'input window, operand 11, single buffered']
    #allocation11 [shape = 'u8[16384]{0}', space=vmem, size = 0x4000, scoped, tag = 'input window, operand 12, single buffered']
    #allocation12 [shape = 's32[1]{0}', space=sflag, size = 0x4, scoped, tag = 'scoped memory for _lambda_.1']
    #allocation13 [shape = 'u8[2048]{0}', space=vmem, size = 0x800, scoped, tag = 'input window, operand 17, single buffered']
    #allocation14 [shape = 'u8[16384]{0}', space=vmem, size = 0x4000, scoped, tag = 'input window, operand 18, single buffered']
    #allocation15 [shape = 's32[1]{0}', space=sflag, size = 0x4, scoped, tag = 'scoped memory for _lambda_.1']
    #allocation16 [shape = 'u8[1024]{0}', space=smem, size = 0x400, scoped, tag = 'input window, operand 19, single buffered']
    %25 = vsyncpa [#allocation3], 0
    %26 = vsyncpa [#allocation6], 0
    %27 = vsyncpa [#allocation9], 0
    %28 = vsyncpa [#allocation12], 0
    %29 = vsyncpa [#allocation15], 0
    %30 = vsyncpa [#allocation4], 0
    // Predicated region
    $region2: #{_lambda_.1} parent=1 // pred_check
      _
    $region3: #{_lambda_.1} parent=1 // pred_check_branch
      %32 = sbr.rel (0) target = $region5
    $region4: #{_lambda_.1} parent=1 // pred_region
      _
    $region5: #{_lambda_.1} parent=1 // pred_fallthru
      _
    // Predicated region
    $region6: #{_lambda_.1} parent=1 // pred_check
      _
    $region7: #{_lambda_.1} parent=1 // pred_check_branch
      %34 = sbr.rel (0) target = $region9
    $region8: #{_lambda_.1} parent=1 // pred_region
      %s36 = ssub.s32 512, 512
      %37 = vsyncadd [#allocation3], %s36
      %s38 = sshll.u32 [#allocation2], 4
      %s39 = int_to_ptr.vmem [resolvable:$true] %s38
      %44 = dma.hbm_to_vmem [thread:$0]  %s1, 512, %s39, [#allocation3], 128, 128, 8
    $region9: #{_lambda_.1} parent=1 // pred_fallthru
      _
    // Predicated region
    $region10: #{_lambda_.1} parent=1 // pred_check
      _
    $region11: #{_lambda_.1} parent=1 // pred_check_branch
      %46 = sbr.rel (0) target = $region13
    $region12: #{_lambda_.1} parent=1 // pred_region
      %s48 = ssub.s32 512, 512
      %49 = vsyncadd [#allocation6], %s48
      %s50 = sshll.u32 [#allocation5], 4
      %s51 = int_to_ptr.vmem [resolvable:$true] %s50
      %56 = dma.hbm_to_vmem [thread:$0]  %s2, 512, %s51, [#allocation6], 128, 128, 8
    $region13: #{_lambda_.1} parent=1 // pred_fallthru
      _
    // Predicated region
    $region14: #{_lambda_.1} parent=1 // pred_check
      _
    $region15: #{_lambda_.1} parent=1 // pred_check_branch
      %58 = sbr.rel (0) target = $region17
    $region16: #{_lambda_.1} parent=1 // pred_region
      _
    $region17: #{_lambda_.1} parent=1 // pred_fallthru
      _
    // Predicated region
    $region18: #{_lambda_.1} parent=1 // pred_check
      _
    $region19: #{_lambda_.1} parent=1 // pred_check_branch
      %60 = sbr.rel (0) target = $region21
    $region20: #{_lambda_.1} parent=1 // pred_region
      _
    $region21: #{_lambda_.1} parent=1 // pred_fallthru
      _
    // Predicated region
    $region22: #{_lambda_.1} parent=1 // pred_check
      _
    $region23: #{_lambda_.1} parent=1 // pred_check_branch
      %62 = sbr.rel (0) target = $region25
    $region24: #{_lambda_.1} parent=1 // pred_region
      %s64 = ssub.s32 512, 512
      %65 = vsyncadd [#allocation6], %s64
      %s66 = sshll.u32 [#allocation7], 4
      %s67 = int_to_ptr.vmem [resolvable:$true] %s66
      %72 = dma.hbm_to_vmem [thread:$0]  %s5, 512, %s67, [#allocation6], 128, 128, 8
    $region25: #{_lambda_.1} parent=1 // pred_fallthru
      _
    // Predicated region
    $region26: #{_lambda_.1} parent=1 // pred_check
      _
    $region27: #{_lambda_.1} parent=1 // pred_check_branch
      %74 = sbr.rel (0) target = $region29
    $region28: #{_lambda_.1} parent=1 // pred_region
      _
    $region29: #{_lambda_.1} parent=1 // pred_fallthru
      _
    // Predicated region
    $region30: #{_lambda_.1} parent=1 // pred_check
      _
    $region31: #{_lambda_.1} parent=1 // pred_check_branch
      %76 = sbr.rel (0) target = $region33
    $region32: #{_lambda_.1} parent=1 // pred_region
      _
    $region33: #{_lambda_.1} parent=1 // pred_fallthru
      _
    // Predicated region
    $region34: #{_lambda_.1} parent=1 // pred_check
      _
    $region35: #{_lambda_.1} parent=1 // pred_check_branch
      %78 = sbr.rel (0) target = $region37
    $region36: #{_lambda_.1} parent=1 // pred_region
      %s80 = ssub.s32 512, 512
      %81 = vsyncadd [#allocation9], %s80
      %s82 = sshll.u32 [#allocation8], 4
      %s83 = int_to_ptr.vmem [resolvable:$true] %s82
      %88 = dma.hbm_to_vmem [thread:$0]  %s8, 512, %s83, [#allocation9], 128, 128, 8
    $region37: #{_lambda_.1} parent=1 // pred_fallthru
      _
    // Predicated region
    $region38: #{_lambda_.1} parent=1 // pred_check
      _
    $region39: #{_lambda_.1} parent=1 // pred_check_branch
      %90 = sbr.rel (0) target = $region41
    $region40: #{_lambda_.1} parent=1 // pred_region
      _
    $region41: #{_lambda_.1} parent=1 // pred_fallthru
      _
    // Predicated region
    $region42: #{_lambda_.1} parent=1 // pred_check
      _
    $region43: #{_lambda_.1} parent=1 // pred_check_branch
      %92 = sbr.rel (0) target = $region45
    $region44: #{_lambda_.1} parent=1 // pred_region
      _
    $region45: #{_lambda_.1} parent=1 // pred_fallthru
      _
    // Predicated region
    $region46: #{_lambda_.1} parent=1 // pred_check
      _
    $region47: #{_lambda_.1} parent=1 // pred_check_branch
      %94 = sbr.rel (0) target = $region49
    $region48: #{_lambda_.1} parent=1 // pred_region
      %s96 = ssub.s32 512, 512
      %97 = vsyncadd [#allocation9], %s96
      %s98 = sshll.u32 [#allocation10], 4
      %s99 = int_to_ptr.vmem [resolvable:$true] %s98
      %104 = dma.hbm_to_vmem [thread:$0]  %s11, 512, %s99, [#allocation9], 128, 128, 8
    $region49: #{_lambda_.1} parent=1 // pred_fallthru
      _
    // Predicated region
    $region50: #{_lambda_.1} parent=1 // pred_check
      _
    $region51: #{_lambda_.1} parent=1 // pred_check_branch
      %106 = sbr.rel (0) target = $region53
    $region52: #{_lambda_.1} parent=1 // pred_region
      %s108 = ssub.s32 512, 512
      %109 = vsyncadd [#allocation12], %s108
      %s110 = sshll.u32 [#allocation11], 4
      %s111 = int_to_ptr.vmem [resolvable:$true] %s110
      %116 = dma.hbm_to_vmem [thread:$0]  %s12, 512, %s111, [#allocation12], 128, 128, 8
    $region53: #{_lambda_.1} parent=1 // pred_fallthru
      _
    // Predicated region
    $region54: #{_lambda_.1} parent=1 // pred_check
      _
    $region55: #{_lambda_.1} parent=1 // pred_check_branch
      %118 = sbr.rel (0) target = $region57
    $region56: #{_lambda_.1} parent=1 // pred_region
      _
    $region57: #{_lambda_.1} parent=1 // pred_fallthru
      _
    // Predicated region
    $region58: #{_lambda_.1} parent=1 // pred_check
      _
    $region59: #{_lambda_.1} parent=1 // pred_check_branch
      %120 = sbr.rel (0) target = $region61
    $region60: #{_lambda_.1} parent=1 // pred_region
      _
    $region61: #{_lambda_.1} parent=1 // pred_fallthru
      _
    // Predicated region
    $region62: #{_lambda_.1} parent=1 // pred_check
      _
    $region63: #{_lambda_.1} parent=1 // pred_check_branch
      %122 = sbr.rel (0) target = $region65
    $region64: #{_lambda_.1} parent=1 // pred_region
      _
    $region65: #{_lambda_.1} parent=1 // pred_fallthru
      _
    // Predicated region
    $region66: #{_lambda_.1} parent=1 // pred_check
      _
    $region67: #{_lambda_.1} parent=1 // pred_check_branch
      %124 = sbr.rel (0) target = $region69
    $region68: #{_lambda_.1} parent=1 // pred_region
      _
    $region69: #{_lambda_.1} parent=1 // pred_fallthru
      _
    // Predicated region
    $region70: #{_lambda_.1} parent=1 // pred_check
      _
    $region71: #{_lambda_.1} parent=1 // pred_check_branch
      %126 = sbr.rel (0) target = $region73
    $region72: #{_lambda_.1} parent=1 // pred_region
      %s128 = ssub.s32 64, 64
      %129 = vsyncadd [#allocation12], %s128
      %s131 = sshll.u32 [#allocation13], 4
      %s132 = int_to_ptr.vmem [resolvable:$true] %s131
      %134 = dma.hbm_to_vmem [thread:$0]  %s17, 64, %s132, [#allocation12]
    $region73: #{_lambda_.1} parent=1 // pred_fallthru
      _
    // Predicated region
    $region74: #{_lambda_.1} parent=1 // pred_check
      _
    $region75: #{_lambda_.1} parent=1 // pred_check_branch
      %136 = sbr.rel (0) target = $region77
    $region76: #{_lambda_.1} parent=1 // pred_region
      %s138 = ssub.s32 512, 512
      %139 = vsyncadd [#allocation15], %s138
      %s140 = sshll.u32 [#allocation14], 4
      %s141 = int_to_ptr.vmem [resolvable:$true] %s140
      %146 = dma.hbm_to_vmem [thread:$0]  %s18, 512, %s141, [#allocation15], 128, 128, 8
    $region77: #{_lambda_.1} parent=1 // pred_fallthru
      _
    // Predicated region
    $region78: #{_lambda_.1} parent=1 // pred_check
      _
    $region79: #{_lambda_.1} parent=1 // pred_check_branch
      %148 = sbr.rel (0) target = $region81
    $region80: #{_lambda_.1} parent=1 // pred_region
      %s150 = ssub.s32 32, 32
      %151 = vsyncadd [#allocation4], %s150
      %154 = dma.hbm_to_smem %s19, 32, [#allocation16], [#allocation4]
    $region81: #{_lambda_.1} parent=1 // pred_fallthru
      _
    // Predicated region
    $region82: #{_lambda_.1} parent=1 // pred_check
      _
    $region83: #{_lambda_.1} parent=1 // pred_check_branch
      %156 = sbr.rel (0) target = $region85
    $region84: #{_lambda_.1} parent=1 // pred_region
      %157 = dma.done [#allocation3], 512
    $region85: #{_lambda_.1} parent=1 // pred_fallthru
      _
    // Predicated region
    $region86: #{_lambda_.1} parent=1 // pred_check
      _
    $region87: #{_lambda_.1} parent=1 // pred_check_branch
      %159 = sbr.rel (0) target = $region89
    $region88: #{_lambda_.1} parent=1 // pred_region
      %160 = dma.done [#allocation6], 512
    $region89: #{_lambda_.1} parent=1 // pred_fallthru
      _
    // Predicated region
    $region90: #{_lambda_.1} parent=1 // pred_check
      _
    $region91: #{_lambda_.1} parent=1 // pred_check_branch
      %162 = sbr.rel (0) target = $region93
    $region92: #{_lambda_.1} parent=1 // pred_region
      %163 = dma.done [#allocation6], 512
    $region93: #{_lambda_.1} parent=1 // pred_fallthru
      _
    // Predicated region
    $region94: #{_lambda_.1} parent=1 // pred_check
      _
    $region95: #{_lambda_.1} parent=1 // pred_check_branch
      %165 = sbr.rel (0) target = $region97
    $region96: #{_lambda_.1} parent=1 // pred_region
      %166 = dma.done [#allocation9], 512
    $region97: #{_lambda_.1} parent=1 // pred_fallthru
      _
    // Predicated region
    $region98: #{_lambda_.1} parent=1 // pred_check
      _
    $region99: #{_lambda_.1} parent=1 // pred_check_branch
      %168 = sbr.rel (0) target = $region101
    $region100: #{_lambda_.1} parent=1 // pred_region
      %169 = dma.done [#allocation9], 512
    $region101: #{_lambda_.1} parent=1 // pred_fallthru
      _
    // Predicated region
    $region102: #{_lambda_.1} parent=1 // pred_check
      _
    $region103: #{_lambda_.1} parent=1 // pred_check_branch
      %171 = sbr.rel (0) target = $region105
    $region104: #{_lambda_.1} parent=1 // pred_region
      %172 = dma.done [#allocation12], 512
    $region105: #{_lambda_.1} parent=1 // pred_fallthru
      _
    // Predicated region
    $region106: #{_lambda_.1} parent=1 // pred_check
      _
    $region107: #{_lambda_.1} parent=1 // pred_check_branch
      %174 = sbr.rel (0) target = $region109
    $region108: #{_lambda_.1} parent=1 // pred_region
      %175 = dma.done [#allocation12], 64
    $region109: #{_lambda_.1} parent=1 // pred_fallthru
      _
    // Predicated region
    $region110: #{_lambda_.1} parent=1 // pred_check
      _
    $region111: #{_lambda_.1} parent=1 // pred_check_branch
      %177 = sbr.rel (0) target = $region113
    $region112: #{_lambda_.1} parent=1 // pred_region
      %178 = dma.done [#allocation15], 512
    $region113: #{_lambda_.1} parent=1 // pred_fallthru
      _
    // Predicated region
    $region114: #{_lambda_.1} parent=1 // pred_check
      _
    $region115: #{_lambda_.1} parent=1 // pred_check_branch
      %180 = sbr.rel (0) target = $region117
    $region116: #{_lambda_.1} parent=1 // pred_region
      %181 = dma.done [#allocation4], 32
    $region117: #{_lambda_.1} parent=1 // pred_fallthru
      _
    %182 = sfence
    %v183 = vld [vmem:[#allocation2] sm:$0xff]
    %v184 = vld [vmem:[#allocation2 + $0x8] sm:$0xff]
    %v185 = vld [vmem:[#allocation2 + $0x10] sm:$0xff]
    %v186 = vld [vmem:[#allocation2 + $0x18] sm:$0xff]
    %v187 = vld [vmem:[%s0] sm:$0xff]
    %v188 = vld [vmem:[%s0 + $0x8] sm:$0xff]
    %v189 = vlaneseq
    %v190 = vand.u32 %v189, 127
    %vm191 = vcmp.ge.s32.totalorder %v190, 1
    %vm192 = vcmask 1047744
    %193 = vrot.lane.b32.xlu0 %v187, 24
    %v194 = vpop.permute.xlu0 %193
    %v195 = vsel %vm192, %v194, %v187
    %196 = vrot.lane.b32.xlu0 %v188, 24
    %v197 = vpop.permute.xlu0 %196
    %v198 = vsel %vm192, %v197, %v188
    %199 = vrot.lane.b32.xlu0 %v195, 24
    %v200 = vpop.permute.xlu0 %199
    %201 = vrot.lane.b32.xlu0 %v198, 24
    %v202 = vpop.permute.xlu0 %201
    %v203 = vsel %vm192, %v200, %v187
    %v204 = vsel %vm192, %v202, %v188
    %207 = vrot.lane.b32.xlu0 %v203, 105
    %v208 = vpop.permute.xlu0 %207
    %209 = vrot.lane.b32.xlu0 %v204, 105
    %v210 = vpop.permute.xlu0 %209
    %v213 = vsel %vm191, %v208, 0.0
    %v214 = vsel %vm191, %v210, 0.0
    %vm215 = vcmp.le.s32.totalorder %v190, 22
    %216 = vrot.lane.b32.xlu0 %v203, 127
    %v217 = vpop.permute.xlu0 %216
    %218 = vrot.lane.b32.xlu0 %v204, 127
    %v219 = vpop.permute.xlu0 %218
    %v222 = vsel %vm215, %v217, 0.0
    %v223 = vsel %vm215, %v219, 0.0
    %vm224 = vcmask 392192
    %v226 = vsel %vm224, %v183, 0
    %v229 = vsel %vm224, %v184, 0
    %v232 = vsel %vm224, %v185, 0
    %v235 = vsel %vm224, %v186, 0
    %237 = vmatprep.subr.mxu0 0.0
    %238 = vmatpush1.msra.mxu0 %v213
    %239 = vmatprep.subr.mxu0 0.0
    %240 = vmatpush1.msra.mxu0 %v214
    %241 = vmatprep.subr.mxu0 0.0
    %242 = vmatpush1.msra.mxu0 %v187
    %243 = vmatprep.subr.mxu0 0.0
    %244 = vmatpush1.msra.mxu0 %v188
    %245 = vmatprep.subr.mxu0 0.0
    %246 = vmatpush1.msra.mxu0 %v222
    %247 = vmatprep.subr.mxu0 0.0
    %248 = vmatpush1.msra.mxu0 %v223
    %249 = vmatprep.subr.mxu0 0.0
    %250 = vmatpush1.msra.mxu0 0.0
    %251 = vmatprep.subr.mxu0 0.0
    %252 = vmatpush1.msra.mxu0 0.0
    %253 = vmatprep.subr.mxu0 0.0
    %254 = vmatpush1.msra.mxu0 0.0
    %255 = vmatprep.subr.mxu0 0.0
    %256 = vmatpush1.msra.mxu0 0.0
    %257 = vmatprep.subr.mxu0 0.0
    %258 = vmatpush1.msra.mxu0 0.0
    %259 = vmatprep.subr.mxu0 0.0
    %260 = vmatpush1.msra.mxu0 0.0
    %261 = vmatprep.subr.mxu0 0.0
    %262 = vmatpush1.msra.mxu0 0.0
    %263 = vmatprep.subr.mxu0 0.0
    %264 = vmatpush1.msra.mxu0 0.0
    %265 = vmatprep.subr.mxu0 0.0
    %266 = vmatpush1.msra.mxu0 0.0
    %267 = vmatprep.subr.mxu0 0.0
    %268 = vmatpush1.msra.mxu0 0.0
    %269 = vmatprep.subr.mxu0 0.0
    %270 = vmatpush1.msra.mxu0 0.0
    %271 = vmatprep.subr.mxu0 0.0
    %272 = vmatpush1.msra.mxu0 0.0
    %273 = vmatprep.subr.mxu0 0.0
    %274 = vmatpush1.msra.mxu0 0.0
    %275 = vmatprep.subr.mxu0 0.0
    %276 = vmatpush1.msra.mxu0 0.0
    %277 = vmatprep.subr.mxu0 0.0
    %278 = vmatpush1.msra.mxu0 0.0
    %279 = vmatprep.subr.mxu0 0.0
    %280 = vmatpush1.msra.mxu0 0.0
    %281 = vmatprep.subr.mxu0 0.0
    %282 = vmatpush1.msra.mxu0 0.0
    %283 = vmatprep.subr.mxu0 0.0
    %284 = vmatpush1.msra.mxu0 0.0
    %285 = vmatprep.subr.mxu0 0.0
    %286 = vmatpush1.msra.mxu0 0.0
    %287 = vmatprep.subr.mxu0 0.0
    %288 = vmatpush1.msra.mxu0 0.0
    %289 = vmatprep.subr.mxu0 0.0
    %290 = vmatpush1.msra.mxu0 0.0
    %291 = vmatprep.subr.mxu0 0.0
    %292 = vmatpush1.msra.mxu0 0.0
    %293 = vmatprep.subr.mxu0 0.0
    %294 = vmatpush1.msra.mxu0 0.0
    %295 = vmatprep.subr.mxu0 0.0
    %296 = vmatpush1.msra.mxu0 0.0
    %297 = vmatprep.subr.mxu0 0.0
    %298 = vmatpush1.msra.mxu0 0.0
    %299 = vmatprep.subr.mxu0 0.0
    %300 = vmatpush1.msra.mxu0 0.0
    %301 = vmatprep.mubr.f32.mxu0 0.0
    %302 = vmatmul.mubr.f32.gmra.mrb[0].mxu0 %v226
    %v303 = vpop.f32.mrb[0].mxu0
    %v304 = vadd.f32 0.0, %v303
    %v305 = vpop.f32.mrb[0].mxu0
    %306 = vmatprep.mubr.f32.mxu0 0.0
    %307 = vmatmul.mubr.f32.gmra.mrb[0].mxu0 %v229
    %v308 = vpop.f32.mrb[0].mxu0
    %v309 = vadd.f32 0.0, %v308
    %v310 = vpop.f32.mrb[0].mxu0
    %311 = vmatprep.mubr.f32.mxu0 0.0
    %312 = vmatmul.mubr.f32.gmra.mrb[0].mxu0 %v232
    %v313 = vpop.f32.mrb[0].mxu0
    %v314 = vadd.f32 0.0, %v313
    %v315 = vpop.f32.mrb[0].mxu0
    %316 = vmatprep.mubr.f32.mxu0 0.0
    %317 = vmatmul.mubr.f32.gmra.mrb[0].mxu0 %v235
    %v318 = vpop.f32.mrb[0].mxu0
    %v319 = vadd.f32 0.0, %v318
    %v320 = vpop.f32.mrb[0].mxu0
    %321 = vdwg.mxu0
    %s322 = scalar_lea.vmem %s0, 16
    %v323 = vld [vmem:[%s322] sm:$0xff]
    %v324 = vld [vmem:[%s322 + $0x8] sm:$0xff]
    %325 = vrot.lane.b32.xlu0 %v323, 24
    %v326 = vpop.permute.xlu0 %325
    %v327 = vsel %vm192, %v326, %v323
    %328 = vrot.lane.b32.xlu0 %v324, 24
    %v329 = vpop.permute.xlu0 %328
    %v330 = vsel %vm192, %v329, %v324
    %331 = vrot.lane.b32.xlu0 %v327, 24
    %v332 = vpop.permute.xlu0 %331
    %333 = vrot.lane.b32.xlu0 %v330, 24
    %v334 = vpop.permute.xlu0 %333
    %v335 = vsel %vm192, %v332, %v323
    %v336 = vsel %vm192, %v334, %v324
    %339 = vrot.lane.b32.xlu0 %v335, 105
    %v340 = vpop.permute.xlu0 %339
    %341 = vrot.lane.b32.xlu0 %v336, 105
    %v342 = vpop.permute.xlu0 %341
    %v345 = vsel %vm191, %v340, 0.0
    %v346 = vsel %vm191, %v342, 0.0
    %347 = vrot.lane.b32.xlu0 %v335, 127
    %v348 = vpop.permute.xlu0 %347
    %349 = vrot.lane.b32.xlu0 %v336, 127
    %v350 = vpop.permute.xlu0 %349
    %v353 = vsel %vm215, %v348, 0.0
    %v354 = vsel %vm215, %v350, 0.0
    %355 = vmatprep.subr.mxu0 0.0
    %356 = vmatpush1.msra.mxu0 %v345
    %357 = vmatprep.subr.mxu0 0.0
    %358 = vmatpush1.msra.mxu0 %v346
    %359 = vmatprep.subr.mxu0 0.0
    %360 = vmatpush1.msra.mxu0 %v323
    %361 = vmatprep.subr.mxu0 0.0
    %362 = vmatpush1.msra.mxu0 %v324
    %363 = vmatprep.subr.mxu0 0.0
    %364 = vmatpush1.msra.mxu0 %v353
    %365 = vmatprep.subr.mxu0 0.0
    %366 = vmatpush1.msra.mxu0 %v354
    %367 = vmatprep.subr.mxu0 0.0
    %368 = vmatpush1.msra.mxu0 0.0
    %369 = vmatprep.subr.mxu0 0.0
    %370 = vmatpush1.msra.mxu0 0.0
    %371 = vmatprep.subr.mxu0 0.0
    %372 = vmatpush1.msra.mxu0 0.0
    %373 = vmatprep.subr.mxu0 0.0
    %374 = vmatpush1.msra.mxu0 0.0
    %375 = vmatprep.subr.mxu0 0.0
    %376 = vmatpush1.msra.mxu0 0.0
    %377 = vmatprep.subr.mxu0 0.0
    %378 = vmatpush1.msra.mxu0 0.0
    %379 = vmatprep.subr.mxu0 0.0
    %380 = vmatpush1.msra.mxu0 0.0
    %381 = vmatprep.subr.mxu0 0.0
    %382 = vmatpush1.msra.mxu0 0.0
    %383 = vmatprep.subr.mxu0 0.0
    %384 = vmatpush1.msra.mxu0 0.0
    %385 = vmatprep.subr.mxu0 0.0
    %386 = vmatpush1.msra.mxu0 0.0
    %387 = vmatprep.subr.mxu0 0.0
    %388 = vmatpush1.msra.mxu0 0.0
    %389 = vmatprep.subr.mxu0 0.0
    %390 = vmatpush1.msra.mxu0 0.0
    %391 = vmatprep.subr.mxu0 0.0
    %392 = vmatpush1.msra.mxu0 0.0
    %393 = vmatprep.subr.mxu0 0.0
    %394 = vmatpush1.msra.mxu0 0.0
    %395 = vmatprep.subr.mxu0 0.0
    %396 = vmatpush1.msra.mxu0 0.0
    %397 = vmatprep.subr.mxu0 0.0
    %398 = vmatpush1.msra.mxu0 0.0
    %399 = vmatprep.subr.mxu0 0.0
    %400 = vmatpush1.msra.mxu0 0.0
    %401 = vmatprep.subr.mxu0 0.0
    %402 = vmatpush1.msra.mxu0 0.0
    %403 = vmatprep.subr.mxu0 0.0
    %404 = vmatpush1.msra.mxu0 0.0
    %405 = vmatprep.subr.mxu0 0.0
    %406 = vmatpush1.msra.mxu0 0.0
    %407 = vmatprep.subr.mxu0 0.0
    %408 = vmatpush1.msra.mxu0 0.0
    %409 = vmatprep.subr.mxu0 0.0
    %410 = vmatpush1.msra.mxu0 0.0
    %411 = vmatprep.subr.mxu0 0.0
    %412 = vmatpush1.msra.mxu0 0.0
    %413 = vmatprep.subr.mxu0 0.0
    %414 = vmatpush1.msra.mxu0 0.0
    %415 = vmatprep.subr.mxu0 0.0
    %416 = vmatpush1.msra.mxu0 0.0
    %417 = vmatprep.subr.mxu0 0.0
    %418 = vmatpush1.msra.mxu0 0.0
    %419 = vmatprep.mubr.f32.mxu0 0.0
    %420 = vmatmul.mubr.f32.gmra.mrb[0].mxu0 %v226
    %v421 = vpop.f32.mrb[0].mxu0
    %v422 = vadd.f32 0.0, %v421
    %v423 = vpop.f32.mrb[0].mxu0
    %424 = vmatprep.mubr.f32.mxu0 0.0
    %425 = vmatmul.mubr.f32.gmra.mrb[0].mxu0 %v229
    %v426 = vpop.f32.mrb[0].mxu0
    %v427 = vadd.f32 0.0, %v426
    %v428 = vpop.f32.mrb[0].mxu0
    %429 = vmatprep.mubr.f32.mxu0 0.0
    %430 = vmatmul.mubr.f32.gmra.mrb[0].mxu0 %v232
    %v431 = vpop.f32.mrb[0].mxu0
    %v432 = vadd.f32 0.0, %v431
    %v433 = vpop.f32.mrb[0].mxu0
    %434 = vmatprep.mubr.f32.mxu0 0.0
    %435 = vmatmul.mubr.f32.gmra.mrb[0].mxu0 %v235
    %v436 = vpop.f32.mrb[0].mxu0
    %v437 = vadd.f32 0.0, %v436
    %v438 = vpop.f32.mrb[0].mxu0
    %439 = vdwg.mxu0
    %v440 = vld [vmem:[#allocation5] sm:$0xff]
    %v441 = vld [vmem:[#allocation5 + $0x8] sm:$0xff]
    %v442 = vld [vmem:[#allocation5 + $0x10] sm:$0xff]
    %v443 = vld [vmem:[#allocation5 + $0x18] sm:$0xff]
    %v444 = vmax.f32 %v304, 0.0
    %v445 = vmax.f32 %v309, 0.0
    %v446 = vmax.f32 %v314, 0.0
    %v447 = vmax.f32 %v319, 0.0
    %448 = vrot.lane.b32.xlu0 %v444, 24
    %v449 = vpop.permute.xlu0 %448
    %v450 = vsel %vm192, %v449, %v444
    %451 = vrot.lane.b32.xlu0 %v445, 24
    %v452 = vpop.permute.xlu0 %451
    %v453 = vsel %vm192, %v452, %v445
    %454 = vrot.lane.b32.xlu0 %v446, 24
    %v455 = vpop.permute.xlu0 %454
    %v456 = vsel %vm192, %v455, %v446
    %457 = vrot.lane.b32.xlu0 %v447, 24
    %v458 = vpop.permute.xlu0 %457
    %v459 = vsel %vm192, %v458, %v447
    %460 = vrot.lane.b32.xlu0 %v450, 24
    %v461 = vpop.permute.xlu0 %460
    %462 = vrot.lane.b32.xlu0 %v453, 24
    %v463 = vpop.permute.xlu0 %462
    %464 = vrot.lane.b32.xlu0 %v456, 24
    %v465 = vpop.permute.xlu0 %464
    %466 = vrot.lane.b32.xlu0 %v459, 24
    %v467 = vpop.permute.xlu0 %466
    %v468 = vsel %vm192, %v461, %v444
    %v469 = vsel %vm192, %v463, %v445
    %v470 = vsel %vm192, %v465, %v446
    %v471 = vsel %vm192, %v467, %v447
    %476 = vrot.lane.b32.xlu0 %v468, 105
    %v477 = vpop.permute.xlu0 %476
    %478 = vrot.lane.b32.xlu0 %v469, 105
    %v479 = vpop.permute.xlu0 %478
    %480 = vrot.lane.b32.xlu0 %v470, 105
    %v481 = vpop.permute.xlu0 %480
    %482 = vrot.lane.b32.xlu0 %v471, 105
    %v483 = vpop.permute.xlu0 %482
    %v488 = vsel %vm191, %v477, 0.0
    %v489 = vsel %vm191, %v479, 0.0
    %v490 = vsel %vm191, %v481, 0.0
    %v491 = vsel %vm191, %v483, 0.0
    %492 = vrot.lane.b32.xlu0 %v468, 127
    %v493 = vpop.permute.xlu0 %492
    %494 = vrot.lane.b32.xlu0 %v469, 127
    %v495 = vpop.permute.xlu0 %494
    %496 = vrot.lane.b32.xlu0 %v470, 127
    %v497 = vpop.permute.xlu0 %496
    %498 = vrot.lane.b32.xlu0 %v471, 127
    %v499 = vpop.permute.xlu0 %498
    %v504 = vsel %vm215, %v493, 0.0
    %v505 = vsel %vm215, %v495, 0.0
    %v506 = vsel %vm215, %v497, 0.0
    %v507 = vsel %vm215, %v499, 0.0
    %vm508 = vcmask 785408
    %v510 = vsel %vm508, %v440, 0
    %v513 = vsel %vm508, %v441, 0
    %v516 = vsel %vm508, %v442, 0
    %v519 = vsel %vm508, %v443, 0
    %521 = vmatprep.subr.mxu0 0.0
    %522 = vmatpush1.msra.mxu0 %v488
    %523 = vmatprep.subr.mxu0 0.0
    %524 = vmatpush1.msra.mxu0 %v489
    %525 = vmatprep.subr.mxu0 0.0
    %526 = vmatpush1.msra.mxu0 %v490
    %527 = vmatprep.subr.mxu0 0.0
    %528 = vmatpush1.msra.mxu0 %v491
    %529 = vmatprep.subr.mxu0 0.0
    %530 = vmatpush1.msra.mxu0 %v444
    %531 = vmatprep.subr.mxu0 0.0
    %532 = vmatpush1.msra.mxu0 %v445
    %533 = vmatprep.subr.mxu0 0.0
    %534 = vmatpush1.msra.mxu0 %v446
    %535 = vmatprep.subr.mxu0 0.0
    %536 = vmatpush1.msra.mxu0 %v447
    %537 = vmatprep.subr.mxu0 0.0
    %538 = vmatpush1.msra.mxu0 %v504
    %539 = vmatprep.subr.mxu0 0.0
    %540 = vmatpush1.msra.mxu0 %v505
    %541 = vmatprep.subr.mxu0 0.0
    %542 = vmatpush1.msra.mxu0 %v506
    %543 = vmatprep.subr.mxu0 0.0
    %544 = vmatpush1.msra.mxu0 %v507
    %545 = vmatprep.subr.mxu0 0.0
    %546 = vmatpush1.msra.mxu0 0.0
    %547 = vmatprep.subr.mxu0 0.0
    %548 = vmatpush1.msra.mxu0 0.0
    %549 = vmatprep.subr.mxu0 0.0
    %550 = vmatpush1.msra.mxu0 0.0
    %551 = vmatprep.subr.mxu0 0.0
    %552 = vmatpush1.msra.mxu0 0.0
    %553 = vmatprep.subr.mxu0 0.0
    %554 = vmatpush1.msra.mxu0 0.0
    %555 = vmatprep.subr.mxu0 0.0
    %556 = vmatpush1.msra.mxu0 0.0
    %557 = vmatprep.subr.mxu0 0.0
    %558 = vmatpush1.msra.mxu0 0.0
    %559 = vmatprep.subr.mxu0 0.0
    %560 = vmatpush1.msra.mxu0 0.0
    %561 = vmatprep.subr.mxu0 0.0
    %562 = vmatpush1.msra.mxu0 0.0
    %563 = vmatprep.subr.mxu0 0.0
    %564 = vmatpush1.msra.mxu0 0.0
    %565 = vmatprep.subr.mxu0 0.0
    %566 = vmatpush1.msra.mxu0 0.0
    %567 = vmatprep.subr.mxu0 0.0
    %568 = vmatpush1.msra.mxu0 0.0
    %569 = vmatprep.subr.mxu0 0.0
    %570 = vmatpush1.msra.mxu0 0.0
    %571 = vmatprep.subr.mxu0 0.0
    %572 = vmatpush1.msra.mxu0 0.0
    %573 = vmatprep.subr.mxu0 0.0
    %574 = vmatpush1.msra.mxu0 0.0
    %575 = vmatprep.subr.mxu0 0.0
    %576 = vmatpush1.msra.mxu0 0.0
    %577 = vmatprep.subr.mxu0 0.0
    %578 = vmatpush1.msra.mxu0 0.0
    %579 = vmatprep.subr.mxu0 0.0
    %580 = vmatpush1.msra.mxu0 0.0
    %581 = vmatprep.subr.mxu0 0.0
    %582 = vmatpush1.msra.mxu0 0.0
    %583 = vmatprep.subr.mxu0 0.0
    %584 = vmatpush1.msra.mxu0 0.0
    %585 = vmatprep.mubr.f32.mxu0 0.0
    %586 = vmatmul.mubr.f32.gmra.mrb[0].mxu0 %v510
    %v587 = vpop.f32.mrb[0].mxu0
    %v588 = vadd.f32 0.0, %v587
    %v589 = vpop.f32.mrb[0].mxu0
    %590 = vmatprep.mubr.f32.mxu0 0.0
    %591 = vmatmul.mubr.f32.gmra.mrb[0].mxu0 %v513
    %v592 = vpop.f32.mrb[0].mxu0
    %v593 = vadd.f32 0.0, %v592
    %v594 = vpop.f32.mrb[0].mxu0
    %595 = vmatprep.mubr.f32.mxu0 0.0
    %596 = vmatmul.mubr.f32.gmra.mrb[0].mxu0 %v516
    %v597 = vpop.f32.mrb[0].mxu0
    %v598 = vadd.f32 0.0, %v597
    %v599 = vpop.f32.mrb[0].mxu0
    %600 = vmatprep.mubr.f32.mxu0 0.0
    %601 = vmatmul.mubr.f32.gmra.mrb[0].mxu0 %v519
    %v602 = vpop.f32.mrb[0].mxu0
    %v603 = vadd.f32 0.0, %v602
    %v604 = vpop.f32.mrb[0].mxu0
    %605 = vdwg.mxu0
    %v606 = vmax.f32 %v422, 0.0
    %v607 = vmax.f32 %v427, 0.0
    %v608 = vmax.f32 %v432, 0.0
    %v609 = vmax.f32 %v437, 0.0
    %610 = vrot.lane.b32.xlu0 %v606, 24
    %v611 = vpop.permute.xlu0 %610
    %v612 = vsel %vm192, %v611, %v606
    %613 = vrot.lane.b32.xlu0 %v607, 24
    %v614 = vpop.permute.xlu0 %613
    %v615 = vsel %vm192, %v614, %v607
    %616 = vrot.lane.b32.xlu0 %v608, 24
    %v617 = vpop.permute.xlu0 %616
    %v618 = vsel %vm192, %v617, %v608
    %619 = vrot.lane.b32.xlu0 %v609, 24
    %v620 = vpop.permute.xlu0 %619
    %v621 = vsel %vm192, %v620, %v609
    %622 = vrot.lane.b32.xlu0 %v612, 24
    %v623 = vpop.permute.xlu0 %622
    %624 = vrot.lane.b32.xlu0 %v615, 24
    %v625 = vpop.permute.xlu0 %624
    %626 = vrot.lane.b32.xlu0 %v618, 24
    %v627 = vpop.permute.xlu0 %626
    %628 = vrot.lane.b32.xlu0 %v621, 24
    %v629 = vpop.permute.xlu0 %628
    %v630 = vsel %vm192, %v623, %v606
    %v631 = vsel %vm192, %v625, %v607
    %v632 = vsel %vm192, %v627, %v608
    %v633 = vsel %vm192, %v629, %v609
    %638 = vrot.lane.b32.xlu0 %v630, 105
    %v639 = vpop.permute.xlu0 %638
    %640 = vrot.lane.b32.xlu0 %v631, 105
    %v641 = vpop.permute.xlu0 %640
    %642 = vrot.lane.b32.xlu0 %v632, 105
    %v643 = vpop.permute.xlu0 %642
    %644 = vrot.lane.b32.xlu0 %v633, 105
    %v645 = vpop.permute.xlu0 %644
    %v650 = vsel %vm191, %v639, 0.0
    %v651 = vsel %vm191, %v641, 0.0
    %v652 = vsel %vm191, %v643, 0.0
    %v653 = vsel %vm191, %v645, 0.0
    %654 = vrot.lane.b32.xlu0 %v630, 127
    %v655 = vpop.permute.xlu0 %654
    %656 = vrot.lane.b32.xlu0 %v631, 127
    %v657 = vpop.permute.xlu0 %656
    %658 = vrot.lane.b32.xlu0 %v632, 127
    %v659 = vpop.permute.xlu0 %658
    %660 = vrot.lane.b32.xlu0 %v633, 127
    %v661 = vpop.permute.xlu0 %660
    %v666 = vsel %vm215, %v655, 0.0
    %v667 = vsel %vm215, %v657, 0.0
    %v668 = vsel %vm215, %v659, 0.0
    %v669 = vsel %vm215, %v661, 0.0
    %670 = vmatprep.subr.mxu0 0.0
    %671 = vmatpush1.msra.mxu0 %v650
    %672 = vmatprep.subr.mxu0 0.0
    %673 = vmatpush1.msra.mxu0 %v651
    %674 = vmatprep.subr.mxu0 0.0
    %675 = vmatpush1.msra.mxu0 %v652
    %676 = vmatprep.subr.mxu0 0.0
    %677 = vmatpush1.msra.mxu0 %v653
    %678 = vmatprep.subr.mxu0 0.0
    %679 = vmatpush1.msra.mxu0 %v606
    %680 = vmatprep.subr.mxu0 0.0
    %681 = vmatpush1.msra.mxu0 %v607
    %682 = vmatprep.subr.mxu0 0.0
    %683 = vmatpush1.msra.mxu0 %v608
    %684 = vmatprep.subr.mxu0 0.0
    %685 = vmatpush1.msra.mxu0 %v609
    %686 = vmatprep.subr.mxu0 0.0
    %687 = vmatpush1.msra.mxu0 %v666
    %688 = vmatprep.subr.mxu0 0.0
    %689 = vmatpush1.msra.mxu0 %v667
    %690 = vmatprep.subr.mxu0 0.0
    %691 = vmatpush1.msra.mxu0 %v668
    %692 = vmatprep.subr.mxu0 0.0
    %693 = vmatpush1.msra.mxu0 %v669
    %694 = vmatprep.subr.mxu0 0.0
    %695 = vmatpush1.msra.mxu0 0.0
    %696 = vmatprep.subr.mxu0 0.0
    %697 = vmatpush1.msra.mxu0 0.0
    %698 = vmatprep.subr.mxu0 0.0
    %699 = vmatpush1.msra.mxu0 0.0
    %700 = vmatprep.subr.mxu0 0.0
    %701 = vmatpush1.msra.mxu0 0.0
    %702 = vmatprep.subr.mxu0 0.0
    %703 = vmatpush1.msra.mxu0 0.0
    %704 = vmatprep.subr.mxu0 0.0
    %705 = vmatpush1.msra.mxu0 0.0
    %706 = vmatprep.subr.mxu0 0.0
    %707 = vmatpush1.msra.mxu0 0.0
    %708 = vmatprep.subr.mxu0 0.0
    %709 = vmatpush1.msra.mxu0 0.0
    %710 = vmatprep.subr.mxu0 0.0
    %711 = vmatpush1.msra.mxu0 0.0
    %712 = vmatprep.subr.mxu0 0.0
    %713 = vmatpush1.msra.mxu0 0.0
    %714 = vmatprep.subr.mxu0 0.0
    %715 = vmatpush1.msra.mxu0 0.0
    %716 = vmatprep.subr.mxu0 0.0
    %717 = vmatpush1.msra.mxu0 0.0
    %718 = vmatprep.subr.mxu0 0.0
    %719 = vmatpush1.msra.mxu0 0.0
    %720 = vmatprep.subr.mxu0 0.0
    %721 = vmatpush1.msra.mxu0 0.0
    %722 = vmatprep.subr.mxu0 0.0
    %723 = vmatpush1.msra.mxu0 0.0
    %724 = vmatprep.subr.mxu0 0.0
    %725 = vmatpush1.msra.mxu0 0.0
    %726 = vmatprep.subr.mxu0 0.0
    %727 = vmatpush1.msra.mxu0 0.0
    %728 = vmatprep.subr.mxu0 0.0
    %729 = vmatpush1.msra.mxu0 0.0
    %730 = vmatprep.subr.mxu0 0.0
    %731 = vmatpush1.msra.mxu0 0.0
    %732 = vmatprep.subr.mxu0 0.0
    %733 = vmatpush1.msra.mxu0 0.0
    %734 = vmatprep.mubr.f32.mxu0 0.0
    %735 = vmatmul.mubr.f32.gmra.mrb[0].mxu0 %v510
    %v736 = vpop.f32.mrb[0].mxu0
    %v737 = vadd.f32 0.0, %v736
    %v738 = vpop.f32.mrb[0].mxu0
    %739 = vmatprep.mubr.f32.mxu0 0.0
    %740 = vmatmul.mubr.f32.gmra.mrb[0].mxu0 %v513
    %v741 = vpop.f32.mrb[0].mxu0
    %v742 = vadd.f32 0.0, %v741
    %v743 = vpop.f32.mrb[0].mxu0
    %744 = vmatprep.mubr.f32.mxu0 0.0
    %745 = vmatmul.mubr.f32.gmra.mrb[0].mxu0 %v516
    %v746 = vpop.f32.mrb[0].mxu0
    %v747 = vadd.f32 0.0, %v746
    %v748 = vpop.f32.mrb[0].mxu0
    %749 = vmatprep.mubr.f32.mxu0 0.0
    %750 = vmatmul.mubr.f32.gmra.mrb[0].mxu0 %v519
    %v751 = vpop.f32.mrb[0].mxu0
    %v752 = vadd.f32 0.0, %v751
    %v753 = vpop.f32.mrb[0].mxu0
    %754 = vdwg.mxu0
    %vm755 = vcmask 195584
    %v756 = vsel %vm755, %v588, 0.0
    %757 = vadd.xlane.f32.xlu0 %v756
    %v758 = vpop.xlane.xlu0 %757
    %v759 = vsel %vm755, %v593, 0.0
    %760 = vadd.xlane.f32.xlu0 %v759
    %v761 = vpop.xlane.xlu0 %760
    %v762 = vsel %vm755, %v598, 0.0
    %763 = vadd.xlane.f32.xlu0 %v762
    %v764 = vpop.xlane.xlu0 %763
    %v765 = vsel %vm755, %v603, 0.0
    %766 = vadd.xlane.f32.xlu0 %v765
    %v767 = vpop.xlane.xlu0 %766
    %v768 = vmul.f32 %v588, %v588
    %v769 = vmul.f32 %v593, %v593
    %v770 = vmul.f32 %v598, %v598
    %v771 = vmul.f32 %v603, %v603
    %v772 = vsel %vm755, %v768, 0.0
    %773 = vadd.xlane.f32.xlu0 %v772
    %v774 = vpop.xlane.xlu0 %773
    %v775 = vsel %vm755, %v769, 0.0
    %776 = vadd.xlane.f32.xlu0 %v775
    %v777 = vpop.xlane.xlu0 %776
    %v778 = vsel %vm755, %v770, 0.0
    %779 = vadd.xlane.f32.xlu0 %v778
    %v780 = vpop.xlane.xlu0 %779
    %v781 = vsel %vm755, %v771, 0.0
    %782 = vadd.xlane.f32.xlu0 %v781
    %v783 = vpop.xlane.xlu0 %782
    %v784 = vsel %vm755, %v737, 0.0
    %785 = vadd.xlane.f32.xlu0 %v784
    %v786 = vpop.xlane.xlu0 %785
    %v787 = vsel %vm755, %v742, 0.0
    %788 = vadd.xlane.f32.xlu0 %v787
    %v789 = vpop.xlane.xlu0 %788
    %v790 = vsel %vm755, %v747, 0.0
    %791 = vadd.xlane.f32.xlu0 %v790
    %v792 = vpop.xlane.xlu0 %791
    %v793 = vsel %vm755, %v752, 0.0
    %794 = vadd.xlane.f32.xlu0 %v793
    %v795 = vpop.xlane.xlu0 %794
    %v796 = vadd.f32 %v758, %v786
    %v797 = vadd.f32 %v761, %v789
    %v798 = vadd.f32 %v764, %v792
    %v799 = vadd.f32 %v767, %v795
    %v800 = vmul.f32 %v737, %v737
    %v801 = vmul.f32 %v742, %v742
    %v802 = vmul.f32 %v747, %v747
    %v803 = vmul.f32 %v752, %v752
    %v804 = vsel %vm755, %v800, 0.0
    %805 = vadd.xlane.f32.xlu0 %v804
    %v806 = vpop.xlane.xlu0 %805
    %v807 = vsel %vm755, %v801, 0.0
    %808 = vadd.xlane.f32.xlu0 %v807
    %v809 = vpop.xlane.xlu0 %808
    %v810 = vsel %vm755, %v802, 0.0
    %811 = vadd.xlane.f32.xlu0 %v810
    %v812 = vpop.xlane.xlu0 %811
    %v813 = vsel %vm755, %v803, 0.0
    %814 = vadd.xlane.f32.xlu0 %v813
    %v815 = vpop.xlane.xlu0 %814
    %v816 = vadd.f32 %v774, %v806
    %v817 = vadd.f32 %v777, %v809
    %v818 = vadd.f32 %v780, %v812
    %v819 = vadd.f32 %v783, %v815
    %v820 = vmul.f32 %v796, 0.020833334
    %v821 = vmul.f32 %v797, 0.020833334
    %v822 = vmul.f32 %v798, 0.020833334
    %v823 = vmul.f32 %v799, 0.020833334
    %v824 = vmul.f32 %v816, 0.020833334
    %v825 = vmul.f32 %v817, 0.020833334
    %v826 = vmul.f32 %v818, 0.020833334
    %v827 = vmul.f32 %v819, 0.020833334
    %v828 = vmul.f32 %v820, %v820
    %v829 = vmul.f32 %v821, %v821
    %v830 = vmul.f32 %v822, %v822
    %v831 = vmul.f32 %v823, %v823
    %v832 = vsub.f32 %v824, %v828
    %v833 = vsub.f32 %v825, %v829
    %v834 = vsub.f32 %v826, %v830
    %v835 = vsub.f32 %v827, %v831
    %v836 = vld [vmem:[%s3] sm:$0xff]
    %v837 = vld [vmem:[%s3 + $0x8] sm:$0xff]
    %v838 = vld [vmem:[%s3 + $0x10] sm:$0xff]
    %v839 = vld [vmem:[%s3 + $0x18] sm:$0xff]
    %v840 = vadd.f32 %v832, 1e-05
    %v841 = vadd.f32 %v833, 1e-05
    %v842 = vadd.f32 %v834, 1e-05
    %v843 = vadd.f32 %v835, 1e-05
    %v844 = vrsqrt.pop %v840
    %v845 = vrsqrt.pop %v841
    %v846 = vrsqrt.pop %v842
    %v847 = vrsqrt.pop %v843
    %v848 = vmul.f32 %v836, %v844
    %v849 = vmul.f32 %v837, %v845
    %v850 = vmul.f32 %v838, %v846
    %v851 = vmul.f32 %v839, %v847
    %v852 = vld [vmem:[%s4] sm:$0xff]
    %v853 = vld [vmem:[%s4 + $0x8] sm:$0xff]
    %v854 = vld [vmem:[%s4 + $0x10] sm:$0xff]
    %v855 = vld [vmem:[%s4 + $0x18] sm:$0xff]
    %v856 = vmul.f32 %v820, %v848
    %v857 = vmul.f32 %v821, %v849
    %v858 = vmul.f32 %v822, %v850
    %v859 = vmul.f32 %v823, %v851
    %v860 = vsub.f32 %v852, %v856
    %v861 = vsub.f32 %v853, %v857
    %v862 = vsub.f32 %v854, %v858
    %v863 = vsub.f32 %v855, %v859
    %865 = vset.pattern.permute.xlu0 0
    %866 = vperm.xlu0 %865, %v848
    %v867 = vpop.permute.xlu0 %866
    %870 = vset.pattern.permute.xlu0 0
    %871 = vperm.xlu0 %870, %v849
    %v872 = vpop.permute.xlu0 %871
    %875 = vset.pattern.permute.xlu0 0
    %876 = vperm.xlu0 %875, %v850
    %v877 = vpop.permute.xlu0 %876
    %880 = vset.pattern.permute.xlu0 0
    %881 = vperm.xlu0 %880, %v851
    %v882 = vpop.permute.xlu0 %881
    %v884 = vmul.f32 %v588, %v867
    %v885 = vmul.f32 %v593, %v872
    %v886 = vmul.f32 %v598, %v877
    %v887 = vmul.f32 %v603, %v882
    %889 = vset.pattern.permute.xlu0 0
    %890 = vperm.xlu0 %889, %v860
    %v891 = vpop.permute.xlu0 %890
    %894 = vset.pattern.permute.xlu0 0
    %895 = vperm.xlu0 %894, %v861
    %v896 = vpop.permute.xlu0 %895
    %899 = vset.pattern.permute.xlu0 0
    %900 = vperm.xlu0 %899, %v862
    %v901 = vpop.permute.xlu0 %900
    %904 = vset.pattern.permute.xlu0 0
    %905 = vperm.xlu0 %904, %v863
    %v906 = vpop.permute.xlu0 %905
    %v908 = vadd.f32 %v884, %v891
    %v909 = vadd.f32 %v885, %v896
    %v910 = vadd.f32 %v886, %v901
    %v911 = vadd.f32 %v887, %v906
    %v912 = vmul.f32 %v737, %v867
    %v913 = vmul.f32 %v742, %v872
    %v914 = vmul.f32 %v747, %v877
    %v915 = vmul.f32 %v752, %v882
    %v916 = vadd.f32 %v912, %v891
    %v917 = vadd.f32 %v913, %v896
    %v918 = vadd.f32 %v914, %v901
    %v919 = vadd.f32 %v915, %v906
    %v920 = vld [vmem:[#allocation7] sm:$0xff]
    %v921 = vld [vmem:[#allocation7 + $0x8] sm:$0xff]
    %v922 = vld [vmem:[#allocation7 + $0x10] sm:$0xff]
    %v923 = vld [vmem:[#allocation7 + $0x18] sm:$0xff]
    %v924 = vmax.f32 %v908, 0.0
    %v925 = vmax.f32 %v909, 0.0
    %v926 = vmax.f32 %v910, 0.0
    %v927 = vmax.f32 %v911, 0.0
    %928 = vrot.lane.b32.xlu0 %v924, 24
    %v929 = vpop.permute.xlu0 %928
    %v930 = vsel %vm192, %v929, %v924
    %931 = vrot.lane.b32.xlu0 %v925, 24
    %v932 = vpop.permute.xlu0 %931
    %v933 = vsel %vm192, %v932, %v925
    %934 = vrot.lane.b32.xlu0 %v926, 24
    %v935 = vpop.permute.xlu0 %934
    %v936 = vsel %vm192, %v935, %v926
    %937 = vrot.lane.b32.xlu0 %v927, 24
    %v938 = vpop.permute.xlu0 %937
    %v939 = vsel %vm192, %v938, %v927
    %940 = vrot.lane.b32.xlu0 %v930, 24
    %v941 = vpop.permute.xlu0 %940
    %942 = vrot.lane.b32.xlu0 %v933, 24
    %v943 = vpop.permute.xlu0 %942
    %944 = vrot.lane.b32.xlu0 %v936, 24
    %v945 = vpop.permute.xlu0 %944
    %946 = vrot.lane.b32.xlu0 %v939, 24
    %v947 = vpop.permute.xlu0 %946
    %v948 = vsel %vm192, %v941, %v924
    %v949 = vsel %vm192, %v943, %v925
    %v950 = vsel %vm192, %v945, %v926
    %v951 = vsel %vm192, %v947, %v927
    %956 = vrot.lane.b32.xlu0 %v948, 105
    %v957 = vpop.permute.xlu0 %956
    %958 = vrot.lane.b32.xlu0 %v949, 105
    %v959 = vpop.permute.xlu0 %958
    %960 = vrot.lane.b32.xlu0 %v950, 105
    %v961 = vpop.permute.xlu0 %960
    %962 = vrot.lane.b32.xlu0 %v951, 105
    %v963 = vpop.permute.xlu0 %962
    %v968 = vsel %vm191, %v957, 0.0
    %v969 = vsel %vm191, %v959, 0.0
    %v970 = vsel %vm191, %v961, 0.0
    %v971 = vsel %vm191, %v963, 0.0
    %972 = vrot.lane.b32.xlu0 %v948, 127
    %v973 = vpop.permute.xlu0 %972
    %974 = vrot.lane.b32.xlu0 %v949, 127
    %v975 = vpop.permute.xlu0 %974
    %976 = vrot.lane.b32.xlu0 %v950, 127
    %v977 = vpop.permute.xlu0 %976
    %978 = vrot.lane.b32.xlu0 %v951, 127
    %v979 = vpop.permute.xlu0 %978
    %v984 = vsel %vm215, %v973, 0.0
    %v985 = vsel %vm215, %v975, 0.0
    %v986 = vsel %vm215, %v977, 0.0
    %v987 = vsel %vm215, %v979, 0.0
    %v989 = vsel %vm508, %v920, 0
    %v992 = vsel %vm508, %v921, 0
    %v995 = vsel %vm508, %v922, 0
    %v998 = vsel %vm508, %v923, 0
    %1000 = vmatprep.subr.mxu0 0.0
    %1001 = vmatpush1.msra.mxu0 %v968
    %1002 = vmatprep.subr.mxu0 0.0
    %1003 = vmatpush1.msra.mxu0 %v969
    %1004 = vmatprep.subr.mxu0 0.0
    %1005 = vmatpush1.msra.mxu0 %v970
    %1006 = vmatprep.subr.mxu0 0.0
    %1007 = vmatpush1.msra.mxu0 %v971
    %1008 = vmatprep.subr.mxu0 0.0
    %1009 = vmatpush1.msra.mxu0 %v924
    %1010 = vmatprep.subr.mxu0 0.0
    %1011 = vmatpush1.msra.mxu0 %v925
    %1012 = vmatprep.subr.mxu0 0.0
    %1013 = vmatpush1.msra.mxu0 %v926
    %1014 = vmatprep.subr.mxu0 0.0
    %1015 = vmatpush1.msra.mxu0 %v927
    %1016 = vmatprep.subr.mxu0 0.0
    %1017 = vmatpush1.msra.mxu0 %v984
    %1018 = vmatprep.subr.mxu0 0.0
    %1019 = vmatpush1.msra.mxu0 %v985
    %1020 = vmatprep.subr.mxu0 0.0
    %1021 = vmatpush1.msra.mxu0 %v986
    %1022 = vmatprep.subr.mxu0 0.0
    %1023 = vmatpush1.msra.mxu0 %v987
    %1024 = vmatprep.subr.mxu0 0.0
    %1025 = vmatpush1.msra.mxu0 0.0
    %1026 = vmatprep.subr.mxu0 0.0
    %1027 = vmatpush1.msra.mxu0 0.0
    %1028 = vmatprep.subr.mxu0 0.0
    %1029 = vmatpush1.msra.mxu0 0.0
    %1030 = vmatprep.subr.mxu0 0.0
    %1031 = vmatpush1.msra.mxu0 0.0
    %1032 = vmatprep.subr.mxu0 0.0
    %1033 = vmatpush1.msra.mxu0 0.0
    %1034 = vmatprep.subr.mxu0 0.0
    %1035 = vmatpush1.msra.mxu0 0.0
    %1036 = vmatprep.subr.mxu0 0.0
    %1037 = vmatpush1.msra.mxu0 0.0
    %1038 = vmatprep.subr.mxu0 0.0
    %1039 = vmatpush1.msra.mxu0 0.0
    %1040 = vmatprep.subr.mxu0 0.0
    %1041 = vmatpush1.msra.mxu0 0.0
    %1042 = vmatprep.subr.mxu0 0.0
    %1043 = vmatpush1.msra.mxu0 0.0
    %1044 = vmatprep.subr.mxu0 0.0
    %1045 = vmatpush1.msra.mxu0 0.0
    %1046 = vmatprep.subr.mxu0 0.0
    %1047 = vmatpush1.msra.mxu0 0.0
    %1048 = vmatprep.subr.mxu0 0.0
    %1049 = vmatpush1.msra.mxu0 0.0
    %1050 = vmatprep.subr.mxu0 0.0
    %1051 = vmatpush1.msra.mxu0 0.0
    %1052 = vmatprep.subr.mxu0 0.0
    %1053 = vmatpush1.msra.mxu0 0.0
    %1054 = vmatprep.subr.mxu0 0.0
    %1055 = vmatpush1.msra.mxu0 0.0
    %1056 = vmatprep.subr.mxu0 0.0
    %1057 = vmatpush1.msra.mxu0 0.0
    %1058 = vmatprep.subr.mxu0 0.0
    %1059 = vmatpush1.msra.mxu0 0.0
    %1060 = vmatprep.subr.mxu0 0.0
    %1061 = vmatpush1.msra.mxu0 0.0
    %1062 = vmatprep.subr.mxu0 0.0
    %1063 = vmatpush1.msra.mxu0 0.0
    %1064 = vmatprep.mubr.f32.mxu0 0.0
    %1065 = vmatmul.mubr.f32.gmra.mrb[0].mxu0 %v989
    %v1066 = vpop.f32.mrb[0].mxu0
    %v1067 = vadd.f32 0.0, %v1066
    %v1068 = vpop.f32.mrb[0].mxu0
    %1069 = vmatprep.mubr.f32.mxu0 0.0
    %1070 = vmatmul.mubr.f32.gmra.mrb[0].mxu0 %v992
    %v1071 = vpop.f32.mrb[0].mxu0
    %v1072 = vadd.f32 0.0, %v1071
    %v1073 = vpop.f32.mrb[0].mxu0
    %1074 = vmatprep.mubr.f32.mxu0 0.0
    %1075 = vmatmul.mubr.f32.gmra.mrb[0].mxu0 %v995
    %v1076 = vpop.f32.mrb[0].mxu0
    %v1077 = vadd.f32 0.0, %v1076
    %v1078 = vpop.f32.mrb[0].mxu0
    %1079 = vmatprep.mubr.f32.mxu0 0.0
    %1080 = vmatmul.mubr.f32.gmra.mrb[0].mxu0 %v998
    %v1081 = vpop.f32.mrb[0].mxu0
    %v1082 = vadd.f32 0.0, %v1081
    %v1083 = vpop.f32.mrb[0].mxu0
    %1084 = vdwg.mxu0
    %v1085 = vmax.f32 %v916, 0.0
    %v1086 = vmax.f32 %v917, 0.0
    %v1087 = vmax.f32 %v918, 0.0
    %v1088 = vmax.f32 %v919, 0.0
    %1089 = vrot.lane.b32.xlu0 %v1085, 24
    %v1090 = vpop.permute.xlu0 %1089
    %v1091 = vsel %vm192, %v1090, %v1085
    %1092 = vrot.lane.b32.xlu0 %v1086, 24
    %v1093 = vpop.permute.xlu0 %1092
    %v1094 = vsel %vm192, %v1093, %v1086
    %1095 = vrot.lane.b32.xlu0 %v1087, 24
    %v1096 = vpop.permute.xlu0 %1095
    %v1097 = vsel %vm192, %v1096, %v1087
    %1098 = vrot.lane.b32.xlu0 %v1088, 24
    %v1099 = vpop.permute.xlu0 %1098
    %v1100 = vsel %vm192, %v1099, %v1088
    %1101 = vrot.lane.b32.xlu0 %v1091, 24
    %v1102 = vpop.permute.xlu0 %1101
    %1103 = vrot.lane.b32.xlu0 %v1094, 24
    %v1104 = vpop.permute.xlu0 %1103
    %1105 = vrot.lane.b32.xlu0 %v1097, 24
    %v1106 = vpop.permute.xlu0 %1105
    %1107 = vrot.lane.b32.xlu0 %v1100, 24
    %v1108 = vpop.permute.xlu0 %1107
    %v1109 = vsel %vm192, %v1102, %v1085
    %v1110 = vsel %vm192, %v1104, %v1086
    %v1111 = vsel %vm192, %v1106, %v1087
    %v1112 = vsel %vm192, %v1108, %v1088
    %1117 = vrot.lane.b32.xlu0 %v1109, 105
    %v1118 = vpop.permute.xlu0 %1117
    %1119 = vrot.lane.b32.xlu0 %v1110, 105
    %v1120 = vpop.permute.xlu0 %1119
    %1121 = vrot.lane.b32.xlu0 %v1111, 105
    %v1122 = vpop.permute.xlu0 %1121
    %1123 = vrot.lane.b32.xlu0 %v1112, 105
    %v1124 = vpop.permute.xlu0 %1123
    %v1129 = vsel %vm191, %v1118, 0.0
    %v1130 = vsel %vm191, %v1120, 0.0
    %v1131 = vsel %vm191, %v1122, 0.0
    %v1132 = vsel %vm191, %v1124, 0.0
    %1133 = vrot.lane.b32.xlu0 %v1109, 127
    %v1134 = vpop.permute.xlu0 %1133
    %1135 = vrot.lane.b32.xlu0 %v1110, 127
    %v1136 = vpop.permute.xlu0 %1135
    %1137 = vrot.lane.b32.xlu0 %v1111, 127
    %v1138 = vpop.permute.xlu0 %1137
    %1139 = vrot.lane.b32.xlu0 %v1112, 127
    %v1140 = vpop.permute.xlu0 %1139
    %v1145 = vsel %vm215, %v1134, 0.0
    %v1146 = vsel %vm215, %v1136, 0.0
    %v1147 = vsel %vm215, %v1138, 0.0
    %v1148 = vsel %vm215, %v1140, 0.0
    %1149 = vmatprep.subr.mxu0 0.0
    %1150 = vmatpush1.msra.mxu0 %v1129
    %1151 = vmatprep.subr.mxu0 0.0
    %1152 = vmatpush1.msra.mxu0 %v1130
    %1153 = vmatprep.subr.mxu0 0.0
    %1154 = vmatpush1.msra.mxu0 %v1131
    %1155 = vmatprep.subr.mxu0 0.0
    %1156 = vmatpush1.msra.mxu0 %v1132
    %1157 = vmatprep.subr.mxu0 0.0
    %1158 = vmatpush1.msra.mxu0 %v1085
    %1159 = vmatprep.subr.mxu0 0.0
    %1160 = vmatpush1.msra.mxu0 %v1086
    %1161 = vmatprep.subr.mxu0 0.0
    %1162 = vmatpush1.msra.mxu0 %v1087
    %1163 = vmatprep.subr.mxu0 0.0
    %1164 = vmatpush1.msra.mxu0 %v1088
    %1165 = vmatprep.subr.mxu0 0.0
    %1166 = vmatpush1.msra.mxu0 %v1145
    %1167 = vmatprep.subr.mxu0 0.0
    %1168 = vmatpush1.msra.mxu0 %v1146
    %1169 = vmatprep.subr.mxu0 0.0
    %1170 = vmatpush1.msra.mxu0 %v1147
    %1171 = vmatprep.subr.mxu0 0.0
    %1172 = vmatpush1.msra.mxu0 %v1148
    %1173 = vmatprep.subr.mxu0 0.0
    %1174 = vmatpush1.msra.mxu0 0.0
    %1175 = vmatprep.subr.mxu0 0.0
    %1176 = vmatpush1.msra.mxu0 0.0
    %1177 = vmatprep.subr.mxu0 0.0
    %1178 = vmatpush1.msra.mxu0 0.0
    %1179 = vmatprep.subr.mxu0 0.0
    %1180 = vmatpush1.msra.mxu0 0.0
    %1181 = vmatprep.subr.mxu0 0.0
    %1182 = vmatpush1.msra.mxu0 0.0
    %1183 = vmatprep.subr.mxu0 0.0
    %1184 = vmatpush1.msra.mxu0 0.0
    %1185 = vmatprep.subr.mxu0 0.0
    %1186 = vmatpush1.msra.mxu0 0.0
    %1187 = vmatprep.subr.mxu0 0.0
    %1188 = vmatpush1.msra.mxu0 0.0
    %1189 = vmatprep.subr.mxu0 0.0
    %1190 = vmatpush1.msra.mxu0 0.0
    %1191 = vmatprep.subr.mxu0 0.0
    %1192 = vmatpush1.msra.mxu0 0.0
    %1193 = vmatprep.subr.mxu0 0.0
    %1194 = vmatpush1.msra.mxu0 0.0
    %1195 = vmatprep.subr.mxu0 0.0
    %1196 = vmatpush1.msra.mxu0 0.0
    %1197 = vmatprep.subr.mxu0 0.0
    %1198 = vmatpush1.msra.mxu0 0.0
    %1199 = vmatprep.subr.mxu0 0.0
    %1200 = vmatpush1.msra.mxu0 0.0
    %1201 = vmatprep.subr.mxu0 0.0
    %1202 = vmatpush1.msra.mxu0 0.0
    %1203 = vmatprep.subr.mxu0 0.0
    %1204 = vmatpush1.msra.mxu0 0.0
    %1205 = vmatprep.subr.mxu0 0.0
    %1206 = vmatpush1.msra.mxu0 0.0
    %1207 = vmatprep.subr.mxu0 0.0
    %1208 = vmatpush1.msra.mxu0 0.0
    %1209 = vmatprep.subr.mxu0 0.0
    %1210 = vmatpush1.msra.mxu0 0.0
    %1211 = vmatprep.subr.mxu0 0.0
    %1212 = vmatpush1.msra.mxu0 0.0
    %1213 = vmatprep.mubr.f32.mxu0 0.0
    %1214 = vmatmul.mubr.f32.gmra.mrb[0].mxu0 %v989
    %v1215 = vpop.f32.mrb[0].mxu0
    %v1216 = vadd.f32 0.0, %v1215
    %v1217 = vpop.f32.mrb[0].mxu0
    %1218 = vmatprep.mubr.f32.mxu0 0.0
    %1219 = vmatmul.mubr.f32.gmra.mrb[0].mxu0 %v992
    %v1220 = vpop.f32.mrb[0].mxu0
    %v1221 = vadd.f32 0.0, %v1220
    %v1222 = vpop.f32.mrb[0].mxu0
    %1223 = vmatprep.mubr.f32.mxu0 0.0
    %1224 = vmatmul.mubr.f32.gmra.mrb[0].mxu0 %v995
    %v1225 = vpop.f32.mrb[0].mxu0
    %v1226 = vadd.f32 0.0, %v1225
    %v1227 = vpop.f32.mrb[0].mxu0
    %1228 = vmatprep.mubr.f32.mxu0 0.0
    %1229 = vmatmul.mubr.f32.gmra.mrb[0].mxu0 %v998
    %v1230 = vpop.f32.mrb[0].mxu0
    %v1231 = vadd.f32 0.0, %v1230
    %v1232 = vpop.f32.mrb[0].mxu0
    %1233 = vdwg.mxu0
    %v1234 = vsel %vm755, %v1067, 0.0
    %1235 = vadd.xlane.f32.xlu0 %v1234
    %v1236 = vpop.xlane.xlu0 %1235
    %v1237 = vsel %vm755, %v1072, 0.0
    %1238 = vadd.xlane.f32.xlu0 %v1237
    %v1239 = vpop.xlane.xlu0 %1238
    %v1240 = vsel %vm755, %v1077, 0.0
    %1241 = vadd.xlane.f32.xlu0 %v1240
    %v1242 = vpop.xlane.xlu0 %1241
    %v1243 = vsel %vm755, %v1082, 0.0
    %1244 = vadd.xlane.f32.xlu0 %v1243
    %v1245 = vpop.xlane.xlu0 %1244
    %v1246 = vmul.f32 %v1067, %v1067
    %v1247 = vmul.f32 %v1072, %v1072
    %v1248 = vmul.f32 %v1077, %v1077
    %v1249 = vmul.f32 %v1082, %v1082
    %v1250 = vsel %vm755, %v1246, 0.0
    %1251 = vadd.xlane.f32.xlu0 %v1250
    %v1252 = vpop.xlane.xlu0 %1251
    %v1253 = vsel %vm755, %v1247, 0.0
    %1254 = vadd.xlane.f32.xlu0 %v1253
    %v1255 = vpop.xlane.xlu0 %1254
    %v1256 = vsel %vm755, %v1248, 0.0
    %1257 = vadd.xlane.f32.xlu0 %v1256
    %v1258 = vpop.xlane.xlu0 %1257
    %v1259 = vsel %vm755, %v1249, 0.0
    %1260 = vadd.xlane.f32.xlu0 %v1259
    %v1261 = vpop.xlane.xlu0 %1260
    %v1262 = vsel %vm755, %v1216, 0.0
    %1263 = vadd.xlane.f32.xlu0 %v1262
    %v1264 = vpop.xlane.xlu0 %1263
    %v1265 = vsel %vm755, %v1221, 0.0
    %1266 = vadd.xlane.f32.xlu0 %v1265
    %v1267 = vpop.xlane.xlu0 %1266
    %v1268 = vsel %vm755, %v1226, 0.0
    %1269 = vadd.xlane.f32.xlu0 %v1268
    %v1270 = vpop.xlane.xlu0 %1269
    %v1271 = vsel %vm755, %v1231, 0.0
    %1272 = vadd.xlane.f32.xlu0 %v1271
    %v1273 = vpop.xlane.xlu0 %1272
    %v1274 = vadd.f32 %v1236, %v1264
    %v1275 = vadd.f32 %v1239, %v1267
    %v1276 = vadd.f32 %v1242, %v1270
    %v1277 = vadd.f32 %v1245, %v1273
    %v1278 = vmul.f32 %v1216, %v1216
    %v1279 = vmul.f32 %v1221, %v1221
    %v1280 = vmul.f32 %v1226, %v1226
    %v1281 = vmul.f32 %v1231, %v1231
    %v1282 = vsel %vm755, %v1278, 0.0
    %1283 = vadd.xlane.f32.xlu0 %v1282
    %v1284 = vpop.xlane.xlu0 %1283
    %v1285 = vsel %vm755, %v1279, 0.0
    %1286 = vadd.xlane.f32.xlu0 %v1285
    %v1287 = vpop.xlane.xlu0 %1286
    %v1288 = vsel %vm755, %v1280, 0.0
    %1289 = vadd.xlane.f32.xlu0 %v1288
    %v1290 = vpop.xlane.xlu0 %1289
    %v1291 = vsel %vm755, %v1281, 0.0
    %1292 = vadd.xlane.f32.xlu0 %v1291
    %v1293 = vpop.xlane.xlu0 %1292
    %v1294 = vadd.f32 %v1252, %v1284
    %v1295 = vadd.f32 %v1255, %v1287
    %v1296 = vadd.f32 %v1258, %v1290
    %v1297 = vadd.f32 %v1261, %v1293
    %v1298 = vmul.f32 %v1274, 0.020833334
    %v1299 = vmul.f32 %v1275, 0.020833334
    %v1300 = vmul.f32 %v1276, 0.020833334
    %v1301 = vmul.f32 %v1277, 0.020833334
    %v1302 = vmul.f32 %v1294, 0.020833334
    %v1303 = vmul.f32 %v1295, 0.020833334
    %v1304 = vmul.f32 %v1296, 0.020833334
    %v1305 = vmul.f32 %v1297, 0.020833334
    %v1306 = vmul.f32 %v1298, %v1298
    %v1307 = vmul.f32 %v1299, %v1299
    %v1308 = vmul.f32 %v1300, %v1300
    %v1309 = vmul.f32 %v1301, %v1301
    %v1310 = vsub.f32 %v1302, %v1306
    %v1311 = vsub.f32 %v1303, %v1307
    %v1312 = vsub.f32 %v1304, %v1308
    %v1313 = vsub.f32 %v1305, %v1309
    %v1314 = vld [vmem:[%s6] sm:$0xff]
    %v1315 = vld [vmem:[%s6 + $0x8] sm:$0xff]
    %v1316 = vld [vmem:[%s6 + $0x10] sm:$0xff]
    %v1317 = vld [vmem:[%s6 + $0x18] sm:$0xff]
    %v1318 = vadd.f32 %v1310, 1e-05
    %v1319 = vadd.f32 %v1311, 1e-05
    %v1320 = vadd.f32 %v1312, 1e-05
    %v1321 = vadd.f32 %v1313, 1e-05
    %v1322 = vrsqrt.pop %v1318
    %v1323 = vrsqrt.pop %v1319
    %v1324 = vrsqrt.pop %v1320
    %v1325 = vrsqrt.pop %v1321
    %v1326 = vmul.f32 %v1314, %v1322
    %v1327 = vmul.f32 %v1315, %v1323
    %v1328 = vmul.f32 %v1316, %v1324
    %v1329 = vmul.f32 %v1317, %v1325
    %v1330 = vld [vmem:[%s7] sm:$0xff]
    %v1331 = vld [vmem:[%s7 + $0x8] sm:$0xff]
    %v1332 = vld [vmem:[%s7 + $0x10] sm:$0xff]
    %v1333 = vld [vmem:[%s7 + $0x18] sm:$0xff]
    %v1334 = vmul.f32 %v1298, %v1326
    %v1335 = vmul.f32 %v1299, %v1327
    %v1336 = vmul.f32 %v1300, %v1328
    %v1337 = vmul.f32 %v1301, %v1329
    %v1338 = vsub.f32 %v1330, %v1334
    %v1339 = vsub.f32 %v1331, %v1335
    %v1340 = vsub.f32 %v1332, %v1336
    %v1341 = vsub.f32 %v1333, %v1337
    %1343 = vset.pattern.permute.xlu0 0
    %1344 = vperm.xlu0 %1343, %v1326
    %v1345 = vpop.permute.xlu0 %1344
    %1348 = vset.pattern.permute.xlu0 0
    %1349 = vperm.xlu0 %1348, %v1327
    %v1350 = vpop.permute.xlu0 %1349
    %1353 = vset.pattern.permute.xlu0 0
    %1354 = vperm.xlu0 %1353, %v1328
    %v1355 = vpop.permute.xlu0 %1354
    %1358 = vset.pattern.permute.xlu0 0
    %1359 = vperm.xlu0 %1358, %v1329
    %v1360 = vpop.permute.xlu0 %1359
    %v1362 = vmul.f32 %v1067, %v1345
    %v1363 = vmul.f32 %v1072, %v1350
    %v1364 = vmul.f32 %v1077, %v1355
    %v1365 = vmul.f32 %v1082, %v1360
    %1367 = vset.pattern.permute.xlu0 0
    %1368 = vperm.xlu0 %1367, %v1338
    %v1369 = vpop.permute.xlu0 %1368
    %1372 = vset.pattern.permute.xlu0 0
    %1373 = vperm.xlu0 %1372, %v1339
    %v1374 = vpop.permute.xlu0 %1373
    %1377 = vset.pattern.permute.xlu0 0
    %1378 = vperm.xlu0 %1377, %v1340
    %v1379 = vpop.permute.xlu0 %1378
    %1382 = vset.pattern.permute.xlu0 0
    %1383 = vperm.xlu0 %1382, %v1341
    %v1384 = vpop.permute.xlu0 %1383
    %v1386 = vadd.f32 %v1362, %v1369
    %v1387 = vadd.f32 %v1363, %v1374
    %v1388 = vadd.f32 %v1364, %v1379
    %v1389 = vadd.f32 %v1365, %v1384
    %v1390 = vmul.f32 %v1216, %v1345
    %v1391 = vmul.f32 %v1221, %v1350
    %v1392 = vmul.f32 %v1226, %v1355
    %v1393 = vmul.f32 %v1231, %v1360
    %v1394 = vadd.f32 %v1390, %v1369
    %v1395 = vadd.f32 %v1391, %v1374
    %v1396 = vadd.f32 %v1392, %v1379
    %v1397 = vadd.f32 %v1393, %v1384
    %v1398 = vld [vmem:[#allocation10] sm:$0xff]
    %v1399 = vld [vmem:[#allocation10 + $0x8] sm:$0xff]
    %v1400 = vld [vmem:[#allocation10 + $0x10] sm:$0xff]
    %v1401 = vld [vmem:[#allocation10 + $0x18] sm:$0xff]
    %v1402 = vld [vmem:[#allocation11] sm:$0xff]
    %v1403 = vld [vmem:[#allocation11 + $0x8] sm:$0xff]
    %v1404 = vld [vmem:[#allocation11 + $0x10] sm:$0xff]
    %v1405 = vld [vmem:[#allocation11 + $0x18] sm:$0xff]
    %vm1406 = vcmask 261120
    %v1408 = vsel %vm1406, %v1402, 0
    %v1411 = vsel %vm1406, %v1403, 0
    %v1414 = vsel %vm1406, %v1404, 0
    %v1417 = vsel %vm1406, %v1405, 0
    %1419 = vmatprep.subr.mxu0 0.0
    %1420 = vmatpush1.msra.mxu0 %v1386
    %1421 = vmatprep.subr.mxu0 0.0
    %1422 = vmatpush1.msra.mxu0 %v1387
    %1423 = vmatprep.subr.mxu0 0.0
    %1424 = vmatpush1.msra.mxu0 %v1388
    %1425 = vmatprep.subr.mxu0 0.0
    %1426 = vmatpush1.msra.mxu0 %v1389
    %1427 = vmatprep.subr.mxu0 0.0
    %1428 = vmatpush1.msra.mxu0 0.0
    %1429 = vmatprep.subr.mxu0 0.0
    %1430 = vmatpush1.msra.mxu0 0.0
    %1431 = vmatprep.subr.mxu0 0.0
    %1432 = vmatpush1.msra.mxu0 0.0
    %1433 = vmatprep.subr.mxu0 0.0
    %1434 = vmatpush1.msra.mxu0 0.0
    %1435 = vmatprep.subr.mxu0 0.0
    %1436 = vmatpush1.msra.mxu0 0.0
    %1437 = vmatprep.subr.mxu0 0.0
    %1438 = vmatpush1.msra.mxu0 0.0
    %1439 = vmatprep.subr.mxu0 0.0
    %1440 = vmatpush1.msra.mxu0 0.0
    %1441 = vmatprep.subr.mxu0 0.0
    %1442 = vmatpush1.msra.mxu0 0.0
    %1443 = vmatprep.subr.mxu0 0.0
    %1444 = vmatpush1.msra.mxu0 0.0
    %1445 = vmatprep.subr.mxu0 0.0
    %1446 = vmatpush1.msra.mxu0 0.0
    %1447 = vmatprep.subr.mxu0 0.0
    %1448 = vmatpush1.msra.mxu0 0.0
    %1449 = vmatprep.subr.mxu0 0.0
    %1450 = vmatpush1.msra.mxu0 0.0
    %1451 = vmatprep.subr.mxu0 0.0
    %1452 = vmatpush1.msra.mxu0 0.0
    %1453 = vmatprep.subr.mxu0 0.0
    %1454 = vmatpush1.msra.mxu0 0.0
    %1455 = vmatprep.subr.mxu0 0.0
    %1456 = vmatpush1.msra.mxu0 0.0
    %1457 = vmatprep.subr.mxu0 0.0
    %1458 = vmatpush1.msra.mxu0 0.0
    %1459 = vmatprep.subr.mxu0 0.0
    %1460 = vmatpush1.msra.mxu0 0.0
    %1461 = vmatprep.subr.mxu0 0.0
    %1462 = vmatpush1.msra.mxu0 0.0
    %1463 = vmatprep.subr.mxu0 0.0
    %1464 = vmatpush1.msra.mxu0 0.0
    %1465 = vmatprep.subr.mxu0 0.0
    %1466 = vmatpush1.msra.mxu0 0.0
    %1467 = vmatprep.subr.mxu0 0.0
    %1468 = vmatpush1.msra.mxu0 0.0
    %1469 = vmatprep.subr.mxu0 0.0
    %1470 = vmatpush1.msra.mxu0 0.0
    %1471 = vmatprep.subr.mxu0 0.0
    %1472 = vmatpush1.msra.mxu0 0.0
    %1473 = vmatprep.subr.mxu0 0.0
    %1474 = vmatpush1.msra.mxu0 0.0
    %1475 = vmatprep.subr.mxu0 0.0
    %1476 = vmatpush1.msra.mxu0 0.0
    %1477 = vmatprep.subr.mxu0 0.0
    %1478 = vmatpush1.msra.mxu0 0.0
    %1479 = vmatprep.subr.mxu0 0.0
    %1480 = vmatpush1.msra.mxu0 0.0
    %1481 = vmatprep.subr.mxu0 0.0
    %1482 = vmatpush1.msra.mxu0 0.0
    %1483 = vmatprep.mubr.f32.mxu0 0.0
    %1484 = vmatmul.mubr.f32.gmra.mrb[0].mxu0 %v1408
    %v1485 = vpop.f32.mrb[0].mxu0
    %v1486 = vadd.f32 0.0, %v1485
    %v1487 = vpop.f32.mrb[0].mxu0
    %1488 = vmatprep.mubr.f32.mxu0 0.0
    %1489 = vmatmul.mubr.f32.gmra.mrb[0].mxu0 %v1411
    %v1490 = vpop.f32.mrb[0].mxu0
    %v1491 = vadd.f32 0.0, %v1490
    %v1492 = vpop.f32.mrb[0].mxu0
    %1493 = vmatprep.mubr.f32.mxu0 0.0
    %1494 = vmatmul.mubr.f32.gmra.mrb[0].mxu0 %v1414
    %v1495 = vpop.f32.mrb[0].mxu0
    %v1496 = vadd.f32 0.0, %v1495
    %v1497 = vpop.f32.mrb[0].mxu0
    %1498 = vmatprep.mubr.f32.mxu0 0.0
    %1499 = vmatmul.mubr.f32.gmra.mrb[0].mxu0 %v1417
    %v1500 = vpop.f32.mrb[0].mxu0
    %v1501 = vadd.f32 0.0, %v1500
    %v1502 = vpop.f32.mrb[0].mxu0
    %1503 = vdwg.mxu0
    %v1505 = vsel %vm1406, %v1398, 0
    %v1508 = vsel %vm1406, %v1399, 0
    %v1511 = vsel %vm1406, %v1400, 0
    %v1514 = vsel %vm1406, %v1401, 0
    %1516 = vmatprep.subr.mxu0 0.0
    %1517 = vmatpush1.msra.mxu0 %v908
    %1518 = vmatprep.subr.mxu0 0.0
    %1519 = vmatpush1.msra.mxu0 %v909
    %1520 = vmatprep.subr.mxu0 0.0
    %1521 = vmatpush1.msra.mxu0 %v910
    %1522 = vmatprep.subr.mxu0 0.0
    %1523 = vmatpush1.msra.mxu0 %v911
    %1524 = vmatprep.subr.mxu0 0.0
    %1525 = vmatpush1.msra.mxu0 0.0
    %1526 = vmatprep.subr.mxu0 0.0
    %1527 = vmatpush1.msra.mxu0 0.0
    %1528 = vmatprep.subr.mxu0 0.0
    %1529 = vmatpush1.msra.mxu0 0.0
    %1530 = vmatprep.subr.mxu0 0.0
    %1531 = vmatpush1.msra.mxu0 0.0
    %1532 = vmatprep.subr.mxu0 0.0
    %1533 = vmatpush1.msra.mxu0 0.0
    %1534 = vmatprep.subr.mxu0 0.0
    %1535 = vmatpush1.msra.mxu0 0.0
    %1536 = vmatprep.subr.mxu0 0.0
    %1537 = vmatpush1.msra.mxu0 0.0
    %1538 = vmatprep.subr.mxu0 0.0
    %1539 = vmatpush1.msra.mxu0 0.0
    %1540 = vmatprep.subr.mxu0 0.0
    %1541 = vmatpush1.msra.mxu0 0.0
    %1542 = vmatprep.subr.mxu0 0.0
    %1543 = vmatpush1.msra.mxu0 0.0
    %1544 = vmatprep.subr.mxu0 0.0
    %1545 = vmatpush1.msra.mxu0 0.0
    %1546 = vmatprep.subr.mxu0 0.0
    %1547 = vmatpush1.msra.mxu0 0.0
    %1548 = vmatprep.subr.mxu0 0.0
    %1549 = vmatpush1.msra.mxu0 0.0
    %1550 = vmatprep.subr.mxu0 0.0
    %1551 = vmatpush1.msra.mxu0 0.0
    %1552 = vmatprep.subr.mxu0 0.0
    %1553 = vmatpush1.msra.mxu0 0.0
    %1554 = vmatprep.subr.mxu0 0.0
    %1555 = vmatpush1.msra.mxu0 0.0
    %1556 = vmatprep.subr.mxu0 0.0
    %1557 = vmatpush1.msra.mxu0 0.0
    %1558 = vmatprep.subr.mxu0 0.0
    %1559 = vmatpush1.msra.mxu0 0.0
    %1560 = vmatprep.subr.mxu0 0.0
    %1561 = vmatpush1.msra.mxu0 0.0
    %1562 = vmatprep.subr.mxu0 0.0
    %1563 = vmatpush1.msra.mxu0 0.0
    %1564 = vmatprep.subr.mxu0 0.0
    %1565 = vmatpush1.msra.mxu0 0.0
    %1566 = vmatprep.subr.mxu0 0.0
    %1567 = vmatpush1.msra.mxu0 0.0
    %1568 = vmatprep.subr.mxu0 0.0
    %1569 = vmatpush1.msra.mxu0 0.0
    %1570 = vmatprep.subr.mxu0 0.0
    %1571 = vmatpush1.msra.mxu0 0.0
    %1572 = vmatprep.subr.mxu0 0.0
    %1573 = vmatpush1.msra.mxu0 0.0
    %1574 = vmatprep.subr.mxu0 0.0
    %1575 = vmatpush1.msra.mxu0 0.0
    %1576 = vmatprep.subr.mxu0 0.0
    %1577 = vmatpush1.msra.mxu0 0.0
    %1578 = vmatprep.subr.mxu0 0.0
    %1579 = vmatpush1.msra.mxu0 0.0
    %1580 = vmatprep.mubr.f32.mxu0 0.0
    %1581 = vmatmul.mubr.f32.gmra.mrb[0].mxu0 %v1505
    %v1582 = vpop.f32.mrb[0].mxu0
    %v1583 = vadd.f32 %v1486, %v1582
    %v1584 = vpop.f32.mrb[0].mxu0
    %1585 = vmatprep.mubr.f32.mxu0 0.0
    %1586 = vmatmul.mubr.f32.gmra.mrb[0].mxu0 %v1508
    %v1587 = vpop.f32.mrb[0].mxu0
    %v1588 = vadd.f32 %v1491, %v1587
    %v1589 = vpop.f32.mrb[0].mxu0
    %1590 = vmatprep.mubr.f32.mxu0 0.0
    %1591 = vmatmul.mubr.f32.gmra.mrb[0].mxu0 %v1511
    %v1592 = vpop.f32.mrb[0].mxu0
    %v1593 = vadd.f32 %v1496, %v1592
    %v1594 = vpop.f32.mrb[0].mxu0
    %1595 = vmatprep.mubr.f32.mxu0 0.0
    %1596 = vmatmul.mubr.f32.gmra.mrb[0].mxu0 %v1514
    %v1597 = vpop.f32.mrb[0].mxu0
    %v1598 = vadd.f32 %v1501, %v1597
    %v1599 = vpop.f32.mrb[0].mxu0
    %1600 = vdwg.mxu0
    %1601 = vmatprep.subr.mxu0 0.0
    %1602 = vmatpush1.msra.mxu0 %v1394
    %1603 = vmatprep.subr.mxu0 0.0
    %1604 = vmatpush1.msra.mxu0 %v1395
    %1605 = vmatprep.subr.mxu0 0.0
    %1606 = vmatpush1.msra.mxu0 %v1396
    %1607 = vmatprep.subr.mxu0 0.0
    %1608 = vmatpush1.msra.mxu0 %v1397
    %1609 = vmatprep.subr.mxu0 0.0
    %1610 = vmatpush1.msra.mxu0 0.0
    %1611 = vmatprep.subr.mxu0 0.0
    %1612 = vmatpush1.msra.mxu0 0.0
    %1613 = vmatprep.subr.mxu0 0.0
    %1614 = vmatpush1.msra.mxu0 0.0
    %1615 = vmatprep.subr.mxu0 0.0
    %1616 = vmatpush1.msra.mxu0 0.0
    %1617 = vmatprep.subr.mxu0 0.0
    %1618 = vmatpush1.msra.mxu0 0.0
    %1619 = vmatprep.subr.mxu0 0.0
    %1620 = vmatpush1.msra.mxu0 0.0
    %1621 = vmatprep.subr.mxu0 0.0
    %1622 = vmatpush1.msra.mxu0 0.0
    %1623 = vmatprep.subr.mxu0 0.0
    %1624 = vmatpush1.msra.mxu0 0.0
    %1625 = vmatprep.subr.mxu0 0.0
    %1626 = vmatpush1.msra.mxu0 0.0
    %1627 = vmatprep.subr.mxu0 0.0
    %1628 = vmatpush1.msra.mxu0 0.0
    %1629 = vmatprep.subr.mxu0 0.0
    %1630 = vmatpush1.msra.mxu0 0.0
    %1631 = vmatprep.subr.mxu0 0.0
    %1632 = vmatpush1.msra.mxu0 0.0
    %1633 = vmatprep.subr.mxu0 0.0
    %1634 = vmatpush1.msra.mxu0 0.0
    %1635 = vmatprep.subr.mxu0 0.0
    %1636 = vmatpush1.msra.mxu0 0.0
    %1637 = vmatprep.subr.mxu0 0.0
    %1638 = vmatpush1.msra.mxu0 0.0
    %1639 = vmatprep.subr.mxu0 0.0
    %1640 = vmatpush1.msra.mxu0 0.0
    %1641 = vmatprep.subr.mxu0 0.0
    %1642 = vmatpush1.msra.mxu0 0.0
    %1643 = vmatprep.subr.mxu0 0.0
    %1644 = vmatpush1.msra.mxu0 0.0
    %1645 = vmatprep.subr.mxu0 0.0
    %1646 = vmatpush1.msra.mxu0 0.0
    %1647 = vmatprep.subr.mxu0 0.0
    %1648 = vmatpush1.msra.mxu0 0.0
    %1649 = vmatprep.subr.mxu0 0.0
    %1650 = vmatpush1.msra.mxu0 0.0
    %1651 = vmatprep.subr.mxu0 0.0
    %1652 = vmatpush1.msra.mxu0 0.0
    %1653 = vmatprep.subr.mxu0 0.0
    %1654 = vmatpush1.msra.mxu0 0.0
    %1655 = vmatprep.subr.mxu0 0.0
    %1656 = vmatpush1.msra.mxu0 0.0
    %1657 = vmatprep.subr.mxu0 0.0
    %1658 = vmatpush1.msra.mxu0 0.0
    %1659 = vmatprep.subr.mxu0 0.0
    %1660 = vmatpush1.msra.mxu0 0.0
    %1661 = vmatprep.subr.mxu0 0.0
    %1662 = vmatpush1.msra.mxu0 0.0
    %1663 = vmatprep.subr.mxu0 0.0
    %1664 = vmatpush1.msra.mxu0 0.0
    %1665 = vmatprep.mubr.f32.mxu0 0.0
    %1666 = vmatmul.mubr.f32.gmra.mrb[0].mxu0 %v1408
    %v1667 = vpop.f32.mrb[0].mxu0
    %v1668 = vadd.f32 0.0, %v1667
    %v1669 = vpop.f32.mrb[0].mxu0
    %1670 = vmatprep.mubr.f32.mxu0 0.0
    %1671 = vmatmul.mubr.f32.gmra.mrb[0].mxu0 %v1411
    %v1672 = vpop.f32.mrb[0].mxu0
    %v1673 = vadd.f32 0.0, %v1672
    %v1674 = vpop.f32.mrb[0].mxu0
    %1675 = vmatprep.mubr.f32.mxu0 0.0
    %1676 = vmatmul.mubr.f32.gmra.mrb[0].mxu0 %v1414
    %v1677 = vpop.f32.mrb[0].mxu0
    %v1678 = vadd.f32 0.0, %v1677
    %v1679 = vpop.f32.mrb[0].mxu0
    %1680 = vmatprep.mubr.f32.mxu0 0.0
    %1681 = vmatmul.mubr.f32.gmra.mrb[0].mxu0 %v1417
    %v1682 = vpop.f32.mrb[0].mxu0
    %v1683 = vadd.f32 0.0, %v1682
    %v1684 = vpop.f32.mrb[0].mxu0
    %1685 = vdwg.mxu0
    %1686 = vmatprep.subr.mxu0 0.0
    %1687 = vmatpush1.msra.mxu0 %v916
    %1688 = vmatprep.subr.mxu0 0.0
    %1689 = vmatpush1.msra.mxu0 %v917
    %1690 = vmatprep.subr.mxu0 0.0
    %1691 = vmatpush1.msra.mxu0 %v918
    %1692 = vmatprep.subr.mxu0 0.0
    %1693 = vmatpush1.msra.mxu0 %v919
    %1694 = vmatprep.subr.mxu0 0.0
    %1695 = vmatpush1.msra.mxu0 0.0
    %1696 = vmatprep.subr.mxu0 0.0
    %1697 = vmatpush1.msra.mxu0 0.0
    %1698 = vmatprep.subr.mxu0 0.0
    %1699 = vmatpush1.msra.mxu0 0.0
    %1700 = vmatprep.subr.mxu0 0.0
    %1701 = vmatpush1.msra.mxu0 0.0
    %1702 = vmatprep.subr.mxu0 0.0
    %1703 = vmatpush1.msra.mxu0 0.0
    %1704 = vmatprep.subr.mxu0 0.0
    %1705 = vmatpush1.msra.mxu0 0.0
    %1706 = vmatprep.subr.mxu0 0.0
    %1707 = vmatpush1.msra.mxu0 0.0
    %1708 = vmatprep.subr.mxu0 0.0
    %1709 = vmatpush1.msra.mxu0 0.0
    %1710 = vmatprep.subr.mxu0 0.0
    %1711 = vmatpush1.msra.mxu0 0.0
    %1712 = vmatprep.subr.mxu0 0.0
    %1713 = vmatpush1.msra.mxu0 0.0
    %1714 = vmatprep.subr.mxu0 0.0
    %1715 = vmatpush1.msra.mxu0 0.0
    %1716 = vmatprep.subr.mxu0 0.0
    %1717 = vmatpush1.msra.mxu0 0.0
    %1718 = vmatprep.subr.mxu0 0.0
    %1719 = vmatpush1.msra.mxu0 0.0
    %1720 = vmatprep.subr.mxu0 0.0
    %1721 = vmatpush1.msra.mxu0 0.0
    %1722 = vmatprep.subr.mxu0 0.0
    %1723 = vmatpush1.msra.mxu0 0.0
    %1724 = vmatprep.subr.mxu0 0.0
    %1725 = vmatpush1.msra.mxu0 0.0
    %1726 = vmatprep.subr.mxu0 0.0
    %1727 = vmatpush1.msra.mxu0 0.0
    %1728 = vmatprep.subr.mxu0 0.0
    %1729 = vmatpush1.msra.mxu0 0.0
    %1730 = vmatprep.subr.mxu0 0.0
    %1731 = vmatpush1.msra.mxu0 0.0
    %1732 = vmatprep.subr.mxu0 0.0
    %1733 = vmatpush1.msra.mxu0 0.0
    %1734 = vmatprep.subr.mxu0 0.0
    %1735 = vmatpush1.msra.mxu0 0.0
    %1736 = vmatprep.subr.mxu0 0.0
    %1737 = vmatpush1.msra.mxu0 0.0
    %1738 = vmatprep.subr.mxu0 0.0
    %1739 = vmatpush1.msra.mxu0 0.0
    %1740 = vmatprep.subr.mxu0 0.0
    %1741 = vmatpush1.msra.mxu0 0.0
    %1742 = vmatprep.subr.mxu0 0.0
    %1743 = vmatpush1.msra.mxu0 0.0
    %1744 = vmatprep.subr.mxu0 0.0
    %1745 = vmatpush1.msra.mxu0 0.0
    %1746 = vmatprep.subr.mxu0 0.0
    %1747 = vmatpush1.msra.mxu0 0.0
    %1748 = vmatprep.subr.mxu0 0.0
    %1749 = vmatpush1.msra.mxu0 0.0
    %1750 = vmatprep.mubr.f32.mxu0 0.0
    %1751 = vmatmul.mubr.f32.gmra.mrb[0].mxu0 %v1505
    %v1752 = vpop.f32.mrb[0].mxu0
    %v1753 = vadd.f32 %v1668, %v1752
    %v1754 = vpop.f32.mrb[0].mxu0
    %1755 = vmatprep.mubr.f32.mxu0 0.0
    %1756 = vmatmul.mubr.f32.gmra.mrb[0].mxu0 %v1508
    %v1757 = vpop.f32.mrb[0].mxu0
    %v1758 = vadd.f32 %v1673, %v1757
    %v1759 = vpop.f32.mrb[0].mxu0
    %1760 = vmatprep.mubr.f32.mxu0 0.0
    %1761 = vmatmul.mubr.f32.gmra.mrb[0].mxu0 %v1511
    %v1762 = vpop.f32.mrb[0].mxu0
    %v1763 = vadd.f32 %v1678, %v1762
    %v1764 = vpop.f32.mrb[0].mxu0
    %1765 = vmatprep.mubr.f32.mxu0 0.0
    %1766 = vmatmul.mubr.f32.gmra.mrb[0].mxu0 %v1514
    %v1767 = vpop.f32.mrb[0].mxu0
    %v1768 = vadd.f32 %v1683, %v1767
    %v1769 = vpop.f32.mrb[0].mxu0
    %1770 = vdwg.mxu0
    %v1771 = vld [vmem:[#allocation8] sm:$0xff]
    %v1772 = vld [vmem:[#allocation8 + $0x8] sm:$0xff]
    %v1773 = vld [vmem:[#allocation8 + $0x10] sm:$0xff]
    %v1774 = vld [vmem:[#allocation8 + $0x18] sm:$0xff]
    %v1775 = vmax.f32 %v1583, 0.0
    %v1776 = vmax.f32 %v1588, 0.0
    %v1777 = vmax.f32 %v1593, 0.0
    %v1778 = vmax.f32 %v1598, 0.0
    %1779 = vrot.lane.b32.xlu0 %v1775, 24
    %v1780 = vpop.permute.xlu0 %1779
    %v1781 = vsel %vm192, %v1780, %v1775
    %1782 = vrot.lane.b32.xlu0 %v1776, 24
    %v1783 = vpop.permute.xlu0 %1782
    %v1784 = vsel %vm192, %v1783, %v1776
    %1785 = vrot.lane.b32.xlu0 %v1777, 24
    %v1786 = vpop.permute.xlu0 %1785
    %v1787 = vsel %vm192, %v1786, %v1777
    %1788 = vrot.lane.b32.xlu0 %v1778, 24
    %v1789 = vpop.permute.xlu0 %1788
    %v1790 = vsel %vm192, %v1789, %v1778
    %1791 = vrot.lane.b32.xlu0 %v1781, 24
    %v1792 = vpop.permute.xlu0 %1791
    %1793 = vrot.lane.b32.xlu0 %v1784, 24
    %v1794 = vpop.permute.xlu0 %1793
    %1795 = vrot.lane.b32.xlu0 %v1787, 24
    %v1796 = vpop.permute.xlu0 %1795
    %1797 = vrot.lane.b32.xlu0 %v1790, 24
    %v1798 = vpop.permute.xlu0 %1797
    %v1799 = vsel %vm192, %v1792, %v1775
    %v1800 = vsel %vm192, %v1794, %v1776
    %v1801 = vsel %vm192, %v1796, %v1777
    %v1802 = vsel %vm192, %v1798, %v1778
    %1807 = vrot.lane.b32.xlu0 %v1799, 105
    %v1808 = vpop.permute.xlu0 %1807
    %1809 = vrot.lane.b32.xlu0 %v1800, 105
    %v1810 = vpop.permute.xlu0 %1809
    %1811 = vrot.lane.b32.xlu0 %v1801, 105
    %v1812 = vpop.permute.xlu0 %1811
    %1813 = vrot.lane.b32.xlu0 %v1802, 105
    %v1814 = vpop.permute.xlu0 %1813
    %v1819 = vsel %vm191, %v1808, 0.0
    %v1820 = vsel %vm191, %v1810, 0.0
    %v1821 = vsel %vm191, %v1812, 0.0
    %v1822 = vsel %vm191, %v1814, 0.0
    %1823 = vrot.lane.b32.xlu0 %v1799, 127
    %v1824 = vpop.permute.xlu0 %1823
    %1825 = vrot.lane.b32.xlu0 %v1800, 127
    %v1826 = vpop.permute.xlu0 %1825
    %1827 = vrot.lane.b32.xlu0 %v1801, 127
    %v1828 = vpop.permute.xlu0 %1827
    %1829 = vrot.lane.b32.xlu0 %v1802, 127
    %v1830 = vpop.permute.xlu0 %1829
    %v1835 = vsel %vm215, %v1824, 0.0
    %v1836 = vsel %vm215, %v1826, 0.0
    %v1837 = vsel %vm215, %v1828, 0.0
    %v1838 = vsel %vm215, %v1830, 0.0
    %v1840 = vsel %vm508, %v1771, 0
    %v1843 = vsel %vm508, %v1772, 0
    %v1846 = vsel %vm508, %v1773, 0
    %v1849 = vsel %vm508, %v1774, 0
    %1851 = vmatprep.subr.mxu0 0.0
    %1852 = vmatpush1.msra.mxu0 %v1819
    %1853 = vmatprep.subr.mxu0 0.0
    %1854 = vmatpush1.msra.mxu0 %v1820
    %1855 = vmatprep.subr.mxu0 0.0
    %1856 = vmatpush1.msra.mxu0 %v1821
    %1857 = vmatprep.subr.mxu0 0.0
    %1858 = vmatpush1.msra.mxu0 %v1822
    %1859 = vmatprep.subr.mxu0 0.0
    %1860 = vmatpush1.msra.mxu0 %v1775
    %1861 = vmatprep.subr.mxu0 0.0
    %1862 = vmatpush1.msra.mxu0 %v1776
    %1863 = vmatprep.subr.mxu0 0.0
    %1864 = vmatpush1.msra.mxu0 %v1777
    %1865 = vmatprep.subr.mxu0 0.0
    %1866 = vmatpush1.msra.mxu0 %v1778
    %1867 = vmatprep.subr.mxu0 0.0
    %1868 = vmatpush1.msra.mxu0 %v1835
    %1869 = vmatprep.subr.mxu0 0.0
    %1870 = vmatpush1.msra.mxu0 %v1836
    %1871 = vmatprep.subr.mxu0 0.0
    %1872 = vmatpush1.msra.mxu0 %v1837
    %1873 = vmatprep.subr.mxu0 0.0
    %1874 = vmatpush1.msra.mxu0 %v1838
    %1875 = vmatprep.subr.mxu0 0.0
    %1876 = vmatpush1.msra.mxu0 0.0
    %1877 = vmatprep.subr.mxu0 0.0
    %1878 = vmatpush1.msra.mxu0 0.0
    %1879 = vmatprep.subr.mxu0 0.0
    %1880 = vmatpush1.msra.mxu0 0.0
    %1881 = vmatprep.subr.mxu0 0.0
    %1882 = vmatpush1.msra.mxu0 0.0
    %1883 = vmatprep.subr.mxu0 0.0
    %1884 = vmatpush1.msra.mxu0 0.0
    %1885 = vmatprep.subr.mxu0 0.0
    %1886 = vmatpush1.msra.mxu0 0.0
    %1887 = vmatprep.subr.mxu0 0.0
    %1888 = vmatpush1.msra.mxu0 0.0
    %1889 = vmatprep.subr.mxu0 0.0
    %1890 = vmatpush1.msra.mxu0 0.0
    %1891 = vmatprep.subr.mxu0 0.0
    %1892 = vmatpush1.msra.mxu0 0.0
    %1893 = vmatprep.subr.mxu0 0.0
    %1894 = vmatpush1.msra.mxu0 0.0
    %1895 = vmatprep.subr.mxu0 0.0
    %1896 = vmatpush1.msra.mxu0 0.0
    %1897 = vmatprep.subr.mxu0 0.0
    %1898 = vmatpush1.msra.mxu0 0.0
    %1899 = vmatprep.subr.mxu0 0.0
    %1900 = vmatpush1.msra.mxu0 0.0
    %1901 = vmatprep.subr.mxu0 0.0
    %1902 = vmatpush1.msra.mxu0 0.0
    %1903 = vmatprep.subr.mxu0 0.0
    %1904 = vmatpush1.msra.mxu0 0.0
    %1905 = vmatprep.subr.mxu0 0.0
    %1906 = vmatpush1.msra.mxu0 0.0
    %1907 = vmatprep.subr.mxu0 0.0
    %1908 = vmatpush1.msra.mxu0 0.0
    %1909 = vmatprep.subr.mxu0 0.0
    %1910 = vmatpush1.msra.mxu0 0.0
    %1911 = vmatprep.subr.mxu0 0.0
    %1912 = vmatpush1.msra.mxu0 0.0
    %1913 = vmatprep.subr.mxu0 0.0
    %1914 = vmatpush1.msra.mxu0 0.0
    %1915 = vmatprep.mubr.f32.mxu0 0.0
    %1916 = vmatmul.mubr.f32.gmra.mrb[0].mxu0 %v1840
    %v1917 = vpop.f32.mrb[0].mxu0
    %v1918 = vadd.f32 0.0, %v1917
    %v1919 = vpop.f32.mrb[0].mxu0
    %1920 = vmatprep.mubr.f32.mxu0 0.0
    %1921 = vmatmul.mubr.f32.gmra.mrb[0].mxu0 %v1843
    %v1922 = vpop.f32.mrb[0].mxu0
    %v1923 = vadd.f32 0.0, %v1922
    %v1924 = vpop.f32.mrb[0].mxu0
    %1925 = vmatprep.mubr.f32.mxu0 0.0
    %1926 = vmatmul.mubr.f32.gmra.mrb[0].mxu0 %v1846
    %v1927 = vpop.f32.mrb[0].mxu0
    %v1928 = vadd.f32 0.0, %v1927
    %v1929 = vpop.f32.mrb[0].mxu0
    %1930 = vmatprep.mubr.f32.mxu0 0.0
    %1931 = vmatmul.mubr.f32.gmra.mrb[0].mxu0 %v1849
    %v1932 = vpop.f32.mrb[0].mxu0
    %v1933 = vadd.f32 0.0, %v1932
    %v1934 = vpop.f32.mrb[0].mxu0
    %1935 = vdwg.mxu0
    %v1936 = vmax.f32 %v1753, 0.0
    %v1937 = vmax.f32 %v1758, 0.0
    %v1938 = vmax.f32 %v1763, 0.0
    %v1939 = vmax.f32 %v1768, 0.0
    %1940 = vrot.lane.b32.xlu0 %v1936, 24
    %v1941 = vpop.permute.xlu0 %1940
    %v1942 = vsel %vm192, %v1941, %v1936
    %1943 = vrot.lane.b32.xlu0 %v1937, 24
    %v1944 = vpop.permute.xlu0 %1943
    %v1945 = vsel %vm192, %v1944, %v1937
    %1946 = vrot.lane.b32.xlu0 %v1938, 24
    %v1947 = vpop.permute.xlu0 %1946
    %v1948 = vsel %vm192, %v1947, %v1938
    %1949 = vrot.lane.b32.xlu0 %v1939, 24
    %v1950 = vpop.permute.xlu0 %1949
    %v1951 = vsel %vm192, %v1950, %v1939
    %1952 = vrot.lane.b32.xlu0 %v1942, 24
    %v1953 = vpop.permute.xlu0 %1952
    %1954 = vrot.lane.b32.xlu0 %v1945, 24
    %v1955 = vpop.permute.xlu0 %1954
    %1956 = vrot.lane.b32.xlu0 %v1948, 24
    %v1957 = vpop.permute.xlu0 %1956
    %1958 = vrot.lane.b32.xlu0 %v1951, 24
    %v1959 = vpop.permute.xlu0 %1958
    %v1960 = vsel %vm192, %v1953, %v1936
    %v1961 = vsel %vm192, %v1955, %v1937
    %v1962 = vsel %vm192, %v1957, %v1938
    %v1963 = vsel %vm192, %v1959, %v1939
    %1968 = vrot.lane.b32.xlu0 %v1960, 105
    %v1969 = vpop.permute.xlu0 %1968
    %1970 = vrot.lane.b32.xlu0 %v1961, 105
    %v1971 = vpop.permute.xlu0 %1970
    %1972 = vrot.lane.b32.xlu0 %v1962, 105
    %v1973 = vpop.permute.xlu0 %1972
    %1974 = vrot.lane.b32.xlu0 %v1963, 105
    %v1975 = vpop.permute.xlu0 %1974
    %v1980 = vsel %vm191, %v1969, 0.0
    %v1981 = vsel %vm191, %v1971, 0.0
    %v1982 = vsel %vm191, %v1973, 0.0
    %v1983 = vsel %vm191, %v1975, 0.0
    %1984 = vrot.lane.b32.xlu0 %v1960, 127
    %v1985 = vpop.permute.xlu0 %1984
    %1986 = vrot.lane.b32.xlu0 %v1961, 127
    %v1987 = vpop.permute.xlu0 %1986
    %1988 = vrot.lane.b32.xlu0 %v1962, 127
    %v1989 = vpop.permute.xlu0 %1988
    %1990 = vrot.lane.b32.xlu0 %v1963, 127
    %v1991 = vpop.permute.xlu0 %1990
    %v1996 = vsel %vm215, %v1985, 0.0
    %v1997 = vsel %vm215, %v1987, 0.0
    %v1998 = vsel %vm215, %v1989, 0.0
    %v1999 = vsel %vm215, %v1991, 0.0
    %2000 = vmatprep.subr.mxu0 0.0
    %2001 = vmatpush1.msra.mxu0 %v1980
    %2002 = vmatprep.subr.mxu0 0.0
    %2003 = vmatpush1.msra.mxu0 %v1981
    %2004 = vmatprep.subr.mxu0 0.0
    %2005 = vmatpush1.msra.mxu0 %v1982
    %2006 = vmatprep.subr.mxu0 0.0
    %2007 = vmatpush1.msra.mxu0 %v1983
    %2008 = vmatprep.subr.mxu0 0.0
    %2009 = vmatpush1.msra.mxu0 %v1936
    %2010 = vmatprep.subr.mxu0 0.0
    %2011 = vmatpush1.msra.mxu0 %v1937
    %2012 = vmatprep.subr.mxu0 0.0
    %2013 = vmatpush1.msra.mxu0 %v1938
    %2014 = vmatprep.subr.mxu0 0.0
    %2015 = vmatpush1.msra.mxu0 %v1939
    %2016 = vmatprep.subr.mxu0 0.0
    %2017 = vmatpush1.msra.mxu0 %v1996
    %2018 = vmatprep.subr.mxu0 0.0
    %2019 = vmatpush1.msra.mxu0 %v1997
    %2020 = vmatprep.subr.mxu0 0.0
    %2021 = vmatpush1.msra.mxu0 %v1998
    %2022 = vmatprep.subr.mxu0 0.0
    %2023 = vmatpush1.msra.mxu0 %v1999
    %2024 = vmatprep.subr.mxu0 0.0
    %2025 = vmatpush1.msra.mxu0 0.0
    %2026 = vmatprep.subr.mxu0 0.0
    %2027 = vmatpush1.msra.mxu0 0.0
    %2028 = vmatprep.subr.mxu0 0.0
    %2029 = vmatpush1.msra.mxu0 0.0
    %2030 = vmatprep.subr.mxu0 0.0
    %2031 = vmatpush1.msra.mxu0 0.0
    %2032 = vmatprep.subr.mxu0 0.0
    %2033 = vmatpush1.msra.mxu0 0.0
    %2034 = vmatprep.subr.mxu0 0.0
    %2035 = vmatpush1.msra.mxu0 0.0
    %2036 = vmatprep.subr.mxu0 0.0
    %2037 = vmatpush1.msra.mxu0 0.0
    %2038 = vmatprep.subr.mxu0 0.0
    %2039 = vmatpush1.msra.mxu0 0.0
    %2040 = vmatprep.subr.mxu0 0.0
    %2041 = vmatpush1.msra.mxu0 0.0
    %2042 = vmatprep.subr.mxu0 0.0
    %2043 = vmatpush1.msra.mxu0 0.0
    %2044 = vmatprep.subr.mxu0 0.0
    %2045 = vmatpush1.msra.mxu0 0.0
    %2046 = vmatprep.subr.mxu0 0.0
    %2047 = vmatpush1.msra.mxu0 0.0
    %2048 = vmatprep.subr.mxu0 0.0
    %2049 = vmatpush1.msra.mxu0 0.0
    %2050 = vmatprep.subr.mxu0 0.0
    %2051 = vmatpush1.msra.mxu0 0.0
    %2052 = vmatprep.subr.mxu0 0.0
    %2053 = vmatpush1.msra.mxu0 0.0
    %2054 = vmatprep.subr.mxu0 0.0
    %2055 = vmatpush1.msra.mxu0 0.0
    %2056 = vmatprep.subr.mxu0 0.0
    %2057 = vmatpush1.msra.mxu0 0.0
    %2058 = vmatprep.subr.mxu0 0.0
    %2059 = vmatpush1.msra.mxu0 0.0
    %2060 = vmatprep.subr.mxu0 0.0
    %2061 = vmatpush1.msra.mxu0 0.0
    %2062 = vmatprep.subr.mxu0 0.0
    %2063 = vmatpush1.msra.mxu0 0.0
    %2064 = vmatprep.mubr.f32.mxu0 0.0
    %2065 = vmatmul.mubr.f32.gmra.mrb[0].mxu0 %v1840
    %v2066 = vpop.f32.mrb[0].mxu0
    %v2067 = vadd.f32 0.0, %v2066
    %v2068 = vpop.f32.mrb[0].mxu0
    %2069 = vmatprep.mubr.f32.mxu0 0.0
    %2070 = vmatmul.mubr.f32.gmra.mrb[0].mxu0 %v1843
    %v2071 = vpop.f32.mrb[0].mxu0
    %v2072 = vadd.f32 0.0, %v2071
    %v2073 = vpop.f32.mrb[0].mxu0
    %2074 = vmatprep.mubr.f32.mxu0 0.0
    %2075 = vmatmul.mubr.f32.gmra.mrb[0].mxu0 %v1846
    %v2076 = vpop.f32.mrb[0].mxu0
    %v2077 = vadd.f32 0.0, %v2076
    %v2078 = vpop.f32.mrb[0].mxu0
    %2079 = vmatprep.mubr.f32.mxu0 0.0
    %2080 = vmatmul.mubr.f32.gmra.mrb[0].mxu0 %v1849
    %v2081 = vpop.f32.mrb[0].mxu0
    %v2082 = vadd.f32 0.0, %v2081
    %v2083 = vpop.f32.mrb[0].mxu0
    %2084 = vdwg.mxu0
    %v2085 = vsel %vm755, %v1918, 0.0
    %2086 = vadd.xlane.f32.xlu0 %v2085
    %v2087 = vpop.xlane.xlu0 %2086
    %v2088 = vsel %vm755, %v1923, 0.0
    %2089 = vadd.xlane.f32.xlu0 %v2088
    %v2090 = vpop.xlane.xlu0 %2089
    %v2091 = vsel %vm755, %v1928, 0.0
    %2092 = vadd.xlane.f32.xlu0 %v2091
    %v2093 = vpop.xlane.xlu0 %2092
    %v2094 = vsel %vm755, %v1933, 0.0
    %2095 = vadd.xlane.f32.xlu0 %v2094
    %v2096 = vpop.xlane.xlu0 %2095
    %v2097 = vmul.f32 %v1918, %v1918
    %v2098 = vmul.f32 %v1923, %v1923
    %v2099 = vmul.f32 %v1928, %v1928
    %v2100 = vmul.f32 %v1933, %v1933
    %v2101 = vsel %vm755, %v2097, 0.0
    %2102 = vadd.xlane.f32.xlu0 %v2101
    %v2103 = vpop.xlane.xlu0 %2102
    %v2104 = vsel %vm755, %v2098, 0.0
    %2105 = vadd.xlane.f32.xlu0 %v2104
    %v2106 = vpop.xlane.xlu0 %2105
    %v2107 = vsel %vm755, %v2099, 0.0
    %2108 = vadd.xlane.f32.xlu0 %v2107
    %v2109 = vpop.xlane.xlu0 %2108
    %v2110 = vsel %vm755, %v2100, 0.0
    %2111 = vadd.xlane.f32.xlu0 %v2110
    %v2112 = vpop.xlane.xlu0 %2111
    %v2113 = vsel %vm755, %v2067, 0.0
    %2114 = vadd.xlane.f32.xlu0 %v2113
    %v2115 = vpop.xlane.xlu0 %2114
    %v2116 = vsel %vm755, %v2072, 0.0
    %2117 = vadd.xlane.f32.xlu0 %v2116
    %v2118 = vpop.xlane.xlu0 %2117
    %v2119 = vsel %vm755, %v2077, 0.0
    %2120 = vadd.xlane.f32.xlu0 %v2119
    %v2121 = vpop.xlane.xlu0 %2120
    %v2122 = vsel %vm755, %v2082, 0.0
    %2123 = vadd.xlane.f32.xlu0 %v2122
    %v2124 = vpop.xlane.xlu0 %2123
    %v2125 = vadd.f32 %v2087, %v2115
    %v2126 = vadd.f32 %v2090, %v2118
    %v2127 = vadd.f32 %v2093, %v2121
    %v2128 = vadd.f32 %v2096, %v2124
    %v2129 = vmul.f32 %v2067, %v2067
    %v2130 = vmul.f32 %v2072, %v2072
    %v2131 = vmul.f32 %v2077, %v2077
    %v2132 = vmul.f32 %v2082, %v2082
    %v2133 = vsel %vm755, %v2129, 0.0
    %2134 = vadd.xlane.f32.xlu0 %v2133
    %v2135 = vpop.xlane.xlu0 %2134
    %v2136 = vsel %vm755, %v2130, 0.0
    %2137 = vadd.xlane.f32.xlu0 %v2136
    %v2138 = vpop.xlane.xlu0 %2137
    %v2139 = vsel %vm755, %v2131, 0.0
    %2140 = vadd.xlane.f32.xlu0 %v2139
    %v2141 = vpop.xlane.xlu0 %2140
    %v2142 = vsel %vm755, %v2132, 0.0
    %2143 = vadd.xlane.f32.xlu0 %v2142
    %v2144 = vpop.xlane.xlu0 %2143
    %v2145 = vadd.f32 %v2103, %v2135
    %v2146 = vadd.f32 %v2106, %v2138
    %v2147 = vadd.f32 %v2109, %v2141
    %v2148 = vadd.f32 %v2112, %v2144
    %v2149 = vmul.f32 %v2125, 0.020833334
    %v2150 = vmul.f32 %v2126, 0.020833334
    %v2151 = vmul.f32 %v2127, 0.020833334
    %v2152 = vmul.f32 %v2128, 0.020833334
    %v2153 = vmul.f32 %v2145, 0.020833334
    %v2154 = vmul.f32 %v2146, 0.020833334
    %v2155 = vmul.f32 %v2147, 0.020833334
    %v2156 = vmul.f32 %v2148, 0.020833334
    %v2157 = vmul.f32 %v2149, %v2149
    %v2158 = vmul.f32 %v2150, %v2150
    %v2159 = vmul.f32 %v2151, %v2151
    %v2160 = vmul.f32 %v2152, %v2152
    %v2161 = vsub.f32 %v2153, %v2157
    %v2162 = vsub.f32 %v2154, %v2158
    %v2163 = vsub.f32 %v2155, %v2159
    %v2164 = vsub.f32 %v2156, %v2160
    %v2165 = vld [vmem:[%s9] sm:$0xff]
    %v2166 = vld [vmem:[%s9 + $0x8] sm:$0xff]
    %v2167 = vld [vmem:[%s9 + $0x10] sm:$0xff]
    %v2168 = vld [vmem:[%s9 + $0x18] sm:$0xff]
    %v2169 = vadd.f32 %v2161, 1e-05
    %v2170 = vadd.f32 %v2162, 1e-05
    %v2171 = vadd.f32 %v2163, 1e-05
    %v2172 = vadd.f32 %v2164, 1e-05
    %v2173 = vrsqrt.pop %v2169
    %v2174 = vrsqrt.pop %v2170
    %v2175 = vrsqrt.pop %v2171
    %v2176 = vrsqrt.pop %v2172
    %v2177 = vmul.f32 %v2165, %v2173
    %v2178 = vmul.f32 %v2166, %v2174
    %v2179 = vmul.f32 %v2167, %v2175
    %v2180 = vmul.f32 %v2168, %v2176
    %v2181 = vld [vmem:[%s10] sm:$0xff]
    %v2182 = vld [vmem:[%s10 + $0x8] sm:$0xff]
    %v2183 = vld [vmem:[%s10 + $0x10] sm:$0xff]
    %v2184 = vld [vmem:[%s10 + $0x18] sm:$0xff]
    %v2185 = vmul.f32 %v2149, %v2177
    %v2186 = vmul.f32 %v2150, %v2178
    %v2187 = vmul.f32 %v2151, %v2179
    %v2188 = vmul.f32 %v2152, %v2180
    %v2189 = vsub.f32 %v2181, %v2185
    %v2190 = vsub.f32 %v2182, %v2186
    %v2191 = vsub.f32 %v2183, %v2187
    %v2192 = vsub.f32 %v2184, %v2188
    %2194 = vset.pattern.permute.xlu0 0
    %2195 = vperm.xlu0 %2194, %v2177
    %v2196 = vpop.permute.xlu0 %2195
    %2199 = vset.pattern.permute.xlu0 0
    %2200 = vperm.xlu0 %2199, %v2178
    %v2201 = vpop.permute.xlu0 %2200
    %2204 = vset.pattern.permute.xlu0 0
    %2205 = vperm.xlu0 %2204, %v2179
    %v2206 = vpop.permute.xlu0 %2205
    %2209 = vset.pattern.permute.xlu0 0
    %2210 = vperm.xlu0 %2209, %v2180
    %v2211 = vpop.permute.xlu0 %2210
    %v2213 = vmul.f32 %v1918, %v2196
    %v2214 = vmul.f32 %v1923, %v2201
    %v2215 = vmul.f32 %v1928, %v2206
    %v2216 = vmul.f32 %v1933, %v2211
    %2218 = vset.pattern.permute.xlu0 0
    %2219 = vperm.xlu0 %2218, %v2189
    %v2220 = vpop.permute.xlu0 %2219
    %2223 = vset.pattern.permute.xlu0 0
    %2224 = vperm.xlu0 %2223, %v2190
    %v2225 = vpop.permute.xlu0 %2224
    %2228 = vset.pattern.permute.xlu0 0
    %2229 = vperm.xlu0 %2228, %v2191
    %v2230 = vpop.permute.xlu0 %2229
    %2233 = vset.pattern.permute.xlu0 0
    %2234 = vperm.xlu0 %2233, %v2192
    %v2235 = vpop.permute.xlu0 %2234
    %v2237 = vadd.f32 %v2213, %v2220
    %v2238 = vadd.f32 %v2214, %v2225
    %v2239 = vadd.f32 %v2215, %v2230
    %v2240 = vadd.f32 %v2216, %v2235
    %v2241 = vmul.f32 %v2067, %v2196
    %v2242 = vmul.f32 %v2072, %v2201
    %v2243 = vmul.f32 %v2077, %v2206
    %v2244 = vmul.f32 %v2082, %v2211
    %v2245 = vadd.f32 %v2241, %v2220
    %v2246 = vadd.f32 %v2242, %v2225
    %v2247 = vadd.f32 %v2243, %v2230
    %v2248 = vadd.f32 %v2244, %v2235
    %v2249 = vld [vmem:[%s13] sm:$0xff]
    %v2250 = vld [vmem:[%s13 + $0x8] sm:$0xff]
    %v2251 = vld [vmem:[%s13 + $0x10] sm:$0xff]
    %v2252 = vld [vmem:[%s13 + $0x18] sm:$0xff]
    %v2253 = vld [vmem:[%s14] sm:$0xff]
    %v2254 = vld [vmem:[%s14 + $0x8] sm:$0xff]
    %v2255 = vld [vmem:[%s14 + $0x10] sm:$0xff]
    %v2256 = vld [vmem:[%s14 + $0x18] sm:$0xff]
    %v2258 = vsel %vm1406, %v2253, 0
    %v2261 = vsel %vm1406, %v2254, 0
    %v2264 = vsel %vm1406, %v2255, 0
    %v2267 = vsel %vm1406, %v2256, 0
    %2269 = vmatprep.subr.mxu0 0.0
    %2270 = vmatpush1.msra.mxu0 %v2237
    %2271 = vmatprep.subr.mxu0 0.0
    %2272 = vmatpush1.msra.mxu0 %v2238
    %2273 = vmatprep.subr.mxu0 0.0
    %2274 = vmatpush1.msra.mxu0 %v2239
    %2275 = vmatprep.subr.mxu0 0.0
    %2276 = vmatpush1.msra.mxu0 %v2240
    %2277 = vmatprep.subr.mxu0 0.0
    %2278 = vmatpush1.msra.mxu0 0.0
    %2279 = vmatprep.subr.mxu0 0.0
    %2280 = vmatpush1.msra.mxu0 0.0
    %2281 = vmatprep.subr.mxu0 0.0
    %2282 = vmatpush1.msra.mxu0 0.0
    %2283 = vmatprep.subr.mxu0 0.0
    %2284 = vmatpush1.msra.mxu0 0.0
    %2285 = vmatprep.subr.mxu0 0.0
    %2286 = vmatpush1.msra.mxu0 0.0
    %2287 = vmatprep.subr.mxu0 0.0
    %2288 = vmatpush1.msra.mxu0 0.0
    %2289 = vmatprep.subr.mxu0 0.0
    %2290 = vmatpush1.msra.mxu0 0.0
    %2291 = vmatprep.subr.mxu0 0.0
    %2292 = vmatpush1.msra.mxu0 0.0
    %2293 = vmatprep.subr.mxu0 0.0
    %2294 = vmatpush1.msra.mxu0 0.0
    %2295 = vmatprep.subr.mxu0 0.0
    %2296 = vmatpush1.msra.mxu0 0.0
    %2297 = vmatprep.subr.mxu0 0.0
    %2298 = vmatpush1.msra.mxu0 0.0
    %2299 = vmatprep.subr.mxu0 0.0
    %2300 = vmatpush1.msra.mxu0 0.0
    %2301 = vmatprep.subr.mxu0 0.0
    %2302 = vmatpush1.msra.mxu0 0.0
    %2303 = vmatprep.subr.mxu0 0.0
    %2304 = vmatpush1.msra.mxu0 0.0
    %2305 = vmatprep.subr.mxu0 0.0
    %2306 = vmatpush1.msra.mxu0 0.0
    %2307 = vmatprep.subr.mxu0 0.0
    %2308 = vmatpush1.msra.mxu0 0.0
    %2309 = vmatprep.subr.mxu0 0.0
    %2310 = vmatpush1.msra.mxu0 0.0
    %2311 = vmatprep.subr.mxu0 0.0
    %2312 = vmatpush1.msra.mxu0 0.0
    %2313 = vmatprep.subr.mxu0 0.0
    %2314 = vmatpush1.msra.mxu0 0.0
    %2315 = vmatprep.subr.mxu0 0.0
    %2316 = vmatpush1.msra.mxu0 0.0
    %2317 = vmatprep.subr.mxu0 0.0
    %2318 = vmatpush1.msra.mxu0 0.0
    %2319 = vmatprep.subr.mxu0 0.0
    %2320 = vmatpush1.msra.mxu0 0.0
    %2321 = vmatprep.subr.mxu0 0.0
    %2322 = vmatpush1.msra.mxu0 0.0
    %2323 = vmatprep.subr.mxu0 0.0
    %2324 = vmatpush1.msra.mxu0 0.0
    %2325 = vmatprep.subr.mxu0 0.0
    %2326 = vmatpush1.msra.mxu0 0.0
    %2327 = vmatprep.subr.mxu0 0.0
    %2328 = vmatpush1.msra.mxu0 0.0
    %2329 = vmatprep.subr.mxu0 0.0
    %2330 = vmatpush1.msra.mxu0 0.0
    %2331 = vmatprep.subr.mxu0 0.0
    %2332 = vmatpush1.msra.mxu0 0.0
    %2333 = vmatprep.mubr.f32.mxu0 0.0
    %2334 = vmatmul.mubr.f32.gmra.mrb[0].mxu0 %v2258
    %v2335 = vpop.f32.mrb[0].mxu0
    %v2336 = vadd.f32 0.0, %v2335
    %v2337 = vpop.f32.mrb[0].mxu0
    %2338 = vmatprep.mubr.f32.mxu0 0.0
    %2339 = vmatmul.mubr.f32.gmra.mrb[0].mxu0 %v2261
    %v2340 = vpop.f32.mrb[0].mxu0
    %v2341 = vadd.f32 0.0, %v2340
    %v2342 = vpop.f32.mrb[0].mxu0
    %2343 = vmatprep.mubr.f32.mxu0 0.0
    %2344 = vmatmul.mubr.f32.gmra.mrb[0].mxu0 %v2264
    %v2345 = vpop.f32.mrb[0].mxu0
    %v2346 = vadd.f32 0.0, %v2345
    %v2347 = vpop.f32.mrb[0].mxu0
    %2348 = vmatprep.mubr.f32.mxu0 0.0
    %2349 = vmatmul.mubr.f32.gmra.mrb[0].mxu0 %v2267
    %v2350 = vpop.f32.mrb[0].mxu0
    %v2351 = vadd.f32 0.0, %v2350
    %v2352 = vpop.f32.mrb[0].mxu0
    %2353 = vdwg.mxu0
    %v2355 = vsel %vm1406, %v2249, 0
    %v2358 = vsel %vm1406, %v2250, 0
    %v2361 = vsel %vm1406, %v2251, 0
    %v2364 = vsel %vm1406, %v2252, 0
    %2366 = vmatprep.subr.mxu0 0.0
    %2367 = vmatpush1.msra.mxu0 %v304
    %2368 = vmatprep.subr.mxu0 0.0
    %2369 = vmatpush1.msra.mxu0 %v309
    %2370 = vmatprep.subr.mxu0 0.0
    %2371 = vmatpush1.msra.mxu0 %v314
    %2372 = vmatprep.subr.mxu0 0.0
    %2373 = vmatpush1.msra.mxu0 %v319
    %2374 = vmatprep.subr.mxu0 0.0
    %2375 = vmatpush1.msra.mxu0 0.0
    %2376 = vmatprep.subr.mxu0 0.0
    %2377 = vmatpush1.msra.mxu0 0.0
    %2378 = vmatprep.subr.mxu0 0.0
    %2379 = vmatpush1.msra.mxu0 0.0
    %2380 = vmatprep.subr.mxu0 0.0
    %2381 = vmatpush1.msra.mxu0 0.0
    %2382 = vmatprep.subr.mxu0 0.0
    %2383 = vmatpush1.msra.mxu0 0.0
    %2384 = vmatprep.subr.mxu0 0.0
    %2385 = vmatpush1.msra.mxu0 0.0
    %2386 = vmatprep.subr.mxu0 0.0
    %2387 = vmatpush1.msra.mxu0 0.0
    %2388 = vmatprep.subr.mxu0 0.0
    %2389 = vmatpush1.msra.mxu0 0.0
    %2390 = vmatprep.subr.mxu0 0.0
    %2391 = vmatpush1.msra.mxu0 0.0
    %2392 = vmatprep.subr.mxu0 0.0
    %2393 = vmatpush1.msra.mxu0 0.0
    %2394 = vmatprep.subr.mxu0 0.0
    %2395 = vmatpush1.msra.mxu0 0.0
    %2396 = vmatprep.subr.mxu0 0.0
    %2397 = vmatpush1.msra.mxu0 0.0
    %2398 = vmatprep.subr.mxu0 0.0
    %2399 = vmatpush1.msra.mxu0 0.0
    %2400 = vmatprep.subr.mxu0 0.0
    %2401 = vmatpush1.msra.mxu0 0.0
    %2402 = vmatprep.subr.mxu0 0.0
    %2403 = vmatpush1.msra.mxu0 0.0
    %2404 = vmatprep.subr.mxu0 0.0
    %2405 = vmatpush1.msra.mxu0 0.0
    %2406 = vmatprep.subr.mxu0 0.0
    %2407 = vmatpush1.msra.mxu0 0.0
    %2408 = vmatprep.subr.mxu0 0.0
    %2409 = vmatpush1.msra.mxu0 0.0
    %2410 = vmatprep.subr.mxu0 0.0
    %2411 = vmatpush1.msra.mxu0 0.0
    %2412 = vmatprep.subr.mxu0 0.0
    %2413 = vmatpush1.msra.mxu0 0.0
    %2414 = vmatprep.subr.mxu0 0.0
    %2415 = vmatpush1.msra.mxu0 0.0
    %2416 = vmatprep.subr.mxu0 0.0
    %2417 = vmatpush1.msra.mxu0 0.0
    %2418 = vmatprep.subr.mxu0 0.0
    %2419 = vmatpush1.msra.mxu0 0.0
    %2420 = vmatprep.subr.mxu0 0.0
    %2421 = vmatpush1.msra.mxu0 0.0
    %2422 = vmatprep.subr.mxu0 0.0
    %2423 = vmatpush1.msra.mxu0 0.0
    %2424 = vmatprep.subr.mxu0 0.0
    %2425 = vmatpush1.msra.mxu0 0.0
    %2426 = vmatprep.subr.mxu0 0.0
    %2427 = vmatpush1.msra.mxu0 0.0
    %2428 = vmatprep.subr.mxu0 0.0
    %2429 = vmatpush1.msra.mxu0 0.0
    %2430 = vmatprep.mubr.f32.mxu0 0.0
    %2431 = vmatmul.mubr.f32.gmra.mrb[0].mxu0 %v2355
    %v2432 = vpop.f32.mrb[0].mxu0
    %v2433 = vadd.f32 %v2336, %v2432
    %v2434 = vpop.f32.mrb[0].mxu0
    %2435 = vmatprep.mubr.f32.mxu0 0.0
    %2436 = vmatmul.mubr.f32.gmra.mrb[0].mxu0 %v2358
    %v2437 = vpop.f32.mrb[0].mxu0
    %v2438 = vadd.f32 %v2341, %v2437
    %v2439 = vpop.f32.mrb[0].mxu0
    %2440 = vmatprep.mubr.f32.mxu0 0.0
    %2441 = vmatmul.mubr.f32.gmra.mrb[0].mxu0 %v2361
    %v2442 = vpop.f32.mrb[0].mxu0
    %v2443 = vadd.f32 %v2346, %v2442
    %v2444 = vpop.f32.mrb[0].mxu0
    %2445 = vmatprep.mubr.f32.mxu0 0.0
    %2446 = vmatmul.mubr.f32.gmra.mrb[0].mxu0 %v2364
    %v2447 = vpop.f32.mrb[0].mxu0
    %v2448 = vadd.f32 %v2351, %v2447
    %v2449 = vpop.f32.mrb[0].mxu0
    %2450 = vdwg.mxu0
    %2451 = vmatprep.subr.mxu0 0.0
    %2452 = vmatpush1.msra.mxu0 %v2245
    %2453 = vmatprep.subr.mxu0 0.0
    %2454 = vmatpush1.msra.mxu0 %v2246
    %2455 = vmatprep.subr.mxu0 0.0
    %2456 = vmatpush1.msra.mxu0 %v2247
    %2457 = vmatprep.subr.mxu0 0.0
    %2458 = vmatpush1.msra.mxu0 %v2248
    %2459 = vmatprep.subr.mxu0 0.0
    %2460 = vmatpush1.msra.mxu0 0.0
    %2461 = vmatprep.subr.mxu0 0.0
    %2462 = vmatpush1.msra.mxu0 0.0
    %2463 = vmatprep.subr.mxu0 0.0
    %2464 = vmatpush1.msra.mxu0 0.0
    %2465 = vmatprep.subr.mxu0 0.0
    %2466 = vmatpush1.msra.mxu0 0.0
    %2467 = vmatprep.subr.mxu0 0.0
    %2468 = vmatpush1.msra.mxu0 0.0
    %2469 = vmatprep.subr.mxu0 0.0
    %2470 = vmatpush1.msra.mxu0 0.0
    %2471 = vmatprep.subr.mxu0 0.0
    %2472 = vmatpush1.msra.mxu0 0.0
    %2473 = vmatprep.subr.mxu0 0.0
    %2474 = vmatpush1.msra.mxu0 0.0
    %2475 = vmatprep.subr.mxu0 0.0
    %2476 = vmatpush1.msra.mxu0 0.0
    %2477 = vmatprep.subr.mxu0 0.0
    %2478 = vmatpush1.msra.mxu0 0.0
    %2479 = vmatprep.subr.mxu0 0.0
    %2480 = vmatpush1.msra.mxu0 0.0
    %2481 = vmatprep.subr.mxu0 0.0
    %2482 = vmatpush1.msra.mxu0 0.0
    %2483 = vmatprep.subr.mxu0 0.0
    %2484 = vmatpush1.msra.mxu0 0.0
    %2485 = vmatprep.subr.mxu0 0.0
    %2486 = vmatpush1.msra.mxu0 0.0
    %2487 = vmatprep.subr.mxu0 0.0
    %2488 = vmatpush1.msra.mxu0 0.0
    %2489 = vmatprep.subr.mxu0 0.0
    %2490 = vmatpush1.msra.mxu0 0.0
    %2491 = vmatprep.subr.mxu0 0.0
    %2492 = vmatpush1.msra.mxu0 0.0
    %2493 = vmatprep.subr.mxu0 0.0
    %2494 = vmatpush1.msra.mxu0 0.0
    %2495 = vmatprep.subr.mxu0 0.0
    %2496 = vmatpush1.msra.mxu0 0.0
    %2497 = vmatprep.subr.mxu0 0.0
    %2498 = vmatpush1.msra.mxu0 0.0
    %2499 = vmatprep.subr.mxu0 0.0
    %2500 = vmatpush1.msra.mxu0 0.0
    %2501 = vmatprep.subr.mxu0 0.0
    %2502 = vmatpush1.msra.mxu0 0.0
    %2503 = vmatprep.subr.mxu0 0.0
    %2504 = vmatpush1.msra.mxu0 0.0
    %2505 = vmatprep.subr.mxu0 0.0
    %2506 = vmatpush1.msra.mxu0 0.0
    %2507 = vmatprep.subr.mxu0 0.0
    %2508 = vmatpush1.msra.mxu0 0.0
    %2509 = vmatprep.subr.mxu0 0.0
    %2510 = vmatpush1.msra.mxu0 0.0
    %2511 = vmatprep.subr.mxu0 0.0
    %2512 = vmatpush1.msra.mxu0 0.0
    %2513 = vmatprep.subr.mxu0 0.0
    %2514 = vmatpush1.msra.mxu0 0.0
    %2515 = vmatprep.mubr.f32.mxu0 0.0
    %2516 = vmatmul.mubr.f32.gmra.mrb[0].mxu0 %v2258
    %v2517 = vpop.f32.mrb[0].mxu0
    %v2518 = vadd.f32 0.0, %v2517
    %v2519 = vpop.f32.mrb[0].mxu0
    %2520 = vmatprep.mubr.f32.mxu0 0.0
    %2521 = vmatmul.mubr.f32.gmra.mrb[0].mxu0 %v2261
    %v2522 = vpop.f32.mrb[0].mxu0
    %v2523 = vadd.f32 0.0, %v2522
    %v2524 = vpop.f32.mrb[0].mxu0
    %2525 = vmatprep.mubr.f32.mxu0 0.0
    %2526 = vmatmul.mubr.f32.gmra.mrb[0].mxu0 %v2264
    %v2527 = vpop.f32.mrb[0].mxu0
    %v2528 = vadd.f32 0.0, %v2527
    %v2529 = vpop.f32.mrb[0].mxu0
    %2530 = vmatprep.mubr.f32.mxu0 0.0
    %2531 = vmatmul.mubr.f32.gmra.mrb[0].mxu0 %v2267
    %v2532 = vpop.f32.mrb[0].mxu0
    %v2533 = vadd.f32 0.0, %v2532
    %v2534 = vpop.f32.mrb[0].mxu0
    %2535 = vdwg.mxu0
    %2536 = vmatprep.subr.mxu0 0.0
    %2537 = vmatpush1.msra.mxu0 %v422
    %2538 = vmatprep.subr.mxu0 0.0
    %2539 = vmatpush1.msra.mxu0 %v427
    %2540 = vmatprep.subr.mxu0 0.0
    %2541 = vmatpush1.msra.mxu0 %v432
    %2542 = vmatprep.subr.mxu0 0.0
    %2543 = vmatpush1.msra.mxu0 %v437
    %2544 = vmatprep.subr.mxu0 0.0
    %2545 = vmatpush1.msra.mxu0 0.0
    %2546 = vmatprep.subr.mxu0 0.0
    %2547 = vmatpush1.msra.mxu0 0.0
    %2548 = vmatprep.subr.mxu0 0.0
    %2549 = vmatpush1.msra.mxu0 0.0
    %2550 = vmatprep.subr.mxu0 0.0
    %2551 = vmatpush1.msra.mxu0 0.0
    %2552 = vmatprep.subr.mxu0 0.0
    %2553 = vmatpush1.msra.mxu0 0.0
    %2554 = vmatprep.subr.mxu0 0.0
    %2555 = vmatpush1.msra.mxu0 0.0
    %2556 = vmatprep.subr.mxu0 0.0
    %2557 = vmatpush1.msra.mxu0 0.0
    %2558 = vmatprep.subr.mxu0 0.0
    %2559 = vmatpush1.msra.mxu0 0.0
    %2560 = vmatprep.subr.mxu0 0.0
    %2561 = vmatpush1.msra.mxu0 0.0
    %2562 = vmatprep.subr.mxu0 0.0
    %2563 = vmatpush1.msra.mxu0 0.0
    %2564 = vmatprep.subr.mxu0 0.0
    %2565 = vmatpush1.msra.mxu0 0.0
    %2566 = vmatprep.subr.mxu0 0.0
    %2567 = vmatpush1.msra.mxu0 0.0
    %2568 = vmatprep.subr.mxu0 0.0
    %2569 = vmatpush1.msra.mxu0 0.0
    %2570 = vmatprep.subr.mxu0 0.0
    %2571 = vmatpush1.msra.mxu0 0.0
    %2572 = vmatprep.subr.mxu0 0.0
    %2573 = vmatpush1.msra.mxu0 0.0
    %2574 = vmatprep.subr.mxu0 0.0
    %2575 = vmatpush1.msra.mxu0 0.0
    %2576 = vmatprep.subr.mxu0 0.0
    %2577 = vmatpush1.msra.mxu0 0.0
    %2578 = vmatprep.subr.mxu0 0.0
    %2579 = vmatpush1.msra.mxu0 0.0
    %2580 = vmatprep.subr.mxu0 0.0
    %2581 = vmatpush1.msra.mxu0 0.0
    %2582 = vmatprep.subr.mxu0 0.0
    %2583 = vmatpush1.msra.mxu0 0.0
    %2584 = vmatprep.subr.mxu0 0.0
    %2585 = vmatpush1.msra.mxu0 0.0
    %2586 = vmatprep.subr.mxu0 0.0
    %2587 = vmatpush1.msra.mxu0 0.0
    %2588 = vmatprep.subr.mxu0 0.0
    %2589 = vmatpush1.msra.mxu0 0.0
    %2590 = vmatprep.subr.mxu0 0.0
    %2591 = vmatpush1.msra.mxu0 0.0
    %2592 = vmatprep.subr.mxu0 0.0
    %2593 = vmatpush1.msra.mxu0 0.0
    %2594 = vmatprep.subr.mxu0 0.0
    %2595 = vmatpush1.msra.mxu0 0.0
    %2596 = vmatprep.subr.mxu0 0.0
    %2597 = vmatpush1.msra.mxu0 0.0
    %2598 = vmatprep.subr.mxu0 0.0
    %2599 = vmatpush1.msra.mxu0 0.0
    %2600 = vmatprep.mubr.f32.mxu0 0.0
    %2601 = vmatmul.mubr.f32.gmra.mrb[0].mxu0 %v2355
    %v2602 = vpop.f32.mrb[0].mxu0
    %v2603 = vadd.f32 %v2518, %v2602
    %v2604 = vpop.f32.mrb[0].mxu0
    %2605 = vmatprep.mubr.f32.mxu0 0.0
    %2606 = vmatmul.mubr.f32.gmra.mrb[0].mxu0 %v2358
    %v2607 = vpop.f32.mrb[0].mxu0
    %v2608 = vadd.f32 %v2523, %v2607
    %v2609 = vpop.f32.mrb[0].mxu0
    %2610 = vmatprep.mubr.f32.mxu0 0.0
    %2611 = vmatmul.mubr.f32.gmra.mrb[0].mxu0 %v2361
    %v2612 = vpop.f32.mrb[0].mxu0
    %v2613 = vadd.f32 %v2528, %v2612
    %v2614 = vpop.f32.mrb[0].mxu0
    %2615 = vmatprep.mubr.f32.mxu0 0.0
    %2616 = vmatmul.mubr.f32.gmra.mrb[0].mxu0 %v2364
    %v2617 = vpop.f32.mrb[0].mxu0
    %v2618 = vadd.f32 %v2533, %v2617
    %v2619 = vpop.f32.mrb[0].mxu0
    %2620 = vdwg.mxu0
    %v2621 = vsel %vm755, %v2433, 0.0
    %2622 = vadd.xlane.f32.xlu0 %v2621
    %v2623 = vpop.xlane.xlu0 %2622
    %v2624 = vsel %vm755, %v2438, 0.0
    %2625 = vadd.xlane.f32.xlu0 %v2624
    %v2626 = vpop.xlane.xlu0 %2625
    %v2627 = vsel %vm755, %v2443, 0.0
    %2628 = vadd.xlane.f32.xlu0 %v2627
    %v2629 = vpop.xlane.xlu0 %2628
    %v2630 = vsel %vm755, %v2448, 0.0
    %2631 = vadd.xlane.f32.xlu0 %v2630
    %v2632 = vpop.xlane.xlu0 %2631
    %v2633 = vmul.f32 %v2433, %v2433
    %v2634 = vmul.f32 %v2438, %v2438
    %v2635 = vmul.f32 %v2443, %v2443
    %v2636 = vmul.f32 %v2448, %v2448
    %v2637 = vsel %vm755, %v2633, 0.0
    %2638 = vadd.xlane.f32.xlu0 %v2637
    %v2639 = vpop.xlane.xlu0 %2638
    %v2640 = vsel %vm755, %v2634, 0.0
    %2641 = vadd.xlane.f32.xlu0 %v2640
    %v2642 = vpop.xlane.xlu0 %2641
    %v2643 = vsel %vm755, %v2635, 0.0
    %2644 = vadd.xlane.f32.xlu0 %v2643
    %v2645 = vpop.xlane.xlu0 %2644
    %v2646 = vsel %vm755, %v2636, 0.0
    %2647 = vadd.xlane.f32.xlu0 %v2646
    %v2648 = vpop.xlane.xlu0 %2647
    %v2649 = vsel %vm755, %v2603, 0.0
    %2650 = vadd.xlane.f32.xlu0 %v2649
    %v2651 = vpop.xlane.xlu0 %2650
    %v2652 = vsel %vm755, %v2608, 0.0
    %2653 = vadd.xlane.f32.xlu0 %v2652
    %v2654 = vpop.xlane.xlu0 %2653
    %v2655 = vsel %vm755, %v2613, 0.0
    %2656 = vadd.xlane.f32.xlu0 %v2655
    %v2657 = vpop.xlane.xlu0 %2656
    %v2658 = vsel %vm755, %v2618, 0.0
    %2659 = vadd.xlane.f32.xlu0 %v2658
    %v2660 = vpop.xlane.xlu0 %2659
    %v2661 = vadd.f32 %v2623, %v2651
    %v2662 = vadd.f32 %v2626, %v2654
    %v2663 = vadd.f32 %v2629, %v2657
    %v2664 = vadd.f32 %v2632, %v2660
    %v2665 = vmul.f32 %v2603, %v2603
    %v2666 = vmul.f32 %v2608, %v2608
    %v2667 = vmul.f32 %v2613, %v2613
    %v2668 = vmul.f32 %v2618, %v2618
    %v2669 = vsel %vm755, %v2665, 0.0
    %2670 = vadd.xlane.f32.xlu0 %v2669
    %v2671 = vpop.xlane.xlu0 %2670
    %v2672 = vsel %vm755, %v2666, 0.0
    %2673 = vadd.xlane.f32.xlu0 %v2672
    %v2674 = vpop.xlane.xlu0 %2673
    %v2675 = vsel %vm755, %v2667, 0.0
    %2676 = vadd.xlane.f32.xlu0 %v2675
    %v2677 = vpop.xlane.xlu0 %2676
    %v2678 = vsel %vm755, %v2668, 0.0
    %2679 = vadd.xlane.f32.xlu0 %v2678
    %v2680 = vpop.xlane.xlu0 %2679
    %v2681 = vadd.f32 %v2639, %v2671
    %v2682 = vadd.f32 %v2642, %v2674
    %v2683 = vadd.f32 %v2645, %v2677
    %v2684 = vadd.f32 %v2648, %v2680
    %v2685 = vmul.f32 %v2661, 0.020833334
    %v2686 = vmul.f32 %v2662, 0.020833334
    %v2687 = vmul.f32 %v2663, 0.020833334
    %v2688 = vmul.f32 %v2664, 0.020833334
    %v2689 = vmul.f32 %v2681, 0.020833334
    %v2690 = vmul.f32 %v2682, 0.020833334
    %v2691 = vmul.f32 %v2683, 0.020833334
    %v2692 = vmul.f32 %v2684, 0.020833334
    %v2693 = vmul.f32 %v2685, %v2685
    %v2694 = vmul.f32 %v2686, %v2686
    %v2695 = vmul.f32 %v2687, %v2687
    %v2696 = vmul.f32 %v2688, %v2688
    %v2697 = vsub.f32 %v2689, %v2693
    %v2698 = vsub.f32 %v2690, %v2694
    %v2699 = vsub.f32 %v2691, %v2695
    %v2700 = vsub.f32 %v2692, %v2696
    %v2701 = vld [vmem:[%s15] sm:$0xff]
    %v2702 = vld [vmem:[%s15 + $0x8] sm:$0xff]
    %v2703 = vld [vmem:[%s15 + $0x10] sm:$0xff]
    %v2704 = vld [vmem:[%s15 + $0x18] sm:$0xff]
    %v2705 = vadd.f32 %v2697, 1e-05
    %v2706 = vadd.f32 %v2698, 1e-05
    %v2707 = vadd.f32 %v2699, 1e-05
    %v2708 = vadd.f32 %v2700, 1e-05
    %v2709 = vrsqrt.pop %v2705
    %v2710 = vrsqrt.pop %v2706
    %v2711 = vrsqrt.pop %v2707
    %v2712 = vrsqrt.pop %v2708
    %v2713 = vmul.f32 %v2701, %v2709
    %v2714 = vmul.f32 %v2702, %v2710
    %v2715 = vmul.f32 %v2703, %v2711
    %v2716 = vmul.f32 %v2704, %v2712
    %v2717 = vld [vmem:[%s16] sm:$0xff]
    %v2718 = vld [vmem:[%s16 + $0x8] sm:$0xff]
    %v2719 = vld [vmem:[%s16 + $0x10] sm:$0xff]
    %v2720 = vld [vmem:[%s16 + $0x18] sm:$0xff]
    %v2721 = vmul.f32 %v2685, %v2713
    %v2722 = vmul.f32 %v2686, %v2714
    %v2723 = vmul.f32 %v2687, %v2715
    %v2724 = vmul.f32 %v2688, %v2716
    %v2725 = vsub.f32 %v2717, %v2721
    %v2726 = vsub.f32 %v2718, %v2722
    %v2727 = vsub.f32 %v2719, %v2723
    %v2728 = vsub.f32 %v2720, %v2724
    %2730 = vset.pattern.permute.xlu0 0
    %2731 = vperm.xlu0 %2730, %v2713
    %v2732 = vpop.permute.xlu0 %2731
    %2735 = vset.pattern.permute.xlu0 0
    %2736 = vperm.xlu0 %2735, %v2714
    %v2737 = vpop.permute.xlu0 %2736
    %2740 = vset.pattern.permute.xlu0 0
    %2741 = vperm.xlu0 %2740, %v2715
    %v2742 = vpop.permute.xlu0 %2741
    %2745 = vset.pattern.permute.xlu0 0
    %2746 = vperm.xlu0 %2745, %v2716
    %v2747 = vpop.permute.xlu0 %2746
    %v2749 = vmul.f32 %v2433, %v2732
    %v2750 = vmul.f32 %v2438, %v2737
    %v2751 = vmul.f32 %v2443, %v2742
    %v2752 = vmul.f32 %v2448, %v2747
    %2754 = vset.pattern.permute.xlu0 0
    %2755 = vperm.xlu0 %2754, %v2725
    %v2756 = vpop.permute.xlu0 %2755
    %2759 = vset.pattern.permute.xlu0 0
    %2760 = vperm.xlu0 %2759, %v2726
    %v2761 = vpop.permute.xlu0 %2760
    %2764 = vset.pattern.permute.xlu0 0
    %2765 = vperm.xlu0 %2764, %v2727
    %v2766 = vpop.permute.xlu0 %2765
    %2769 = vset.pattern.permute.xlu0 0
    %2770 = vperm.xlu0 %2769, %v2728
    %v2771 = vpop.permute.xlu0 %2770
    %v2773 = vadd.f32 %v2749, %v2756
    %v2774 = vadd.f32 %v2750, %v2761
    %v2775 = vadd.f32 %v2751, %v2766
    %v2776 = vadd.f32 %v2752, %v2771
    %v2777 = vmul.f32 %v2603, %v2732
    %v2778 = vmul.f32 %v2608, %v2737
    %v2779 = vmul.f32 %v2613, %v2742
    %v2780 = vmul.f32 %v2618, %v2747
    %v2781 = vadd.f32 %v2777, %v2756
    %v2782 = vadd.f32 %v2778, %v2761
    %v2783 = vadd.f32 %v2779, %v2766
    %v2784 = vadd.f32 %v2780, %v2771
    %v2785 = vmax.f32 %v2773, 0.0
    %v2786 = vmax.f32 %v2774, 0.0
    %v2787 = vmax.f32 %v2775, 0.0
    %v2788 = vmax.f32 %v2776, 0.0
    %v2789 = vmax.f32 %v2781, 0.0
    %v2790 = vmax.f32 %v2782, 0.0
    %v2791 = vmax.f32 %v2783, 0.0
    %v2792 = vmax.f32 %v2784, 0.0
    %v2793 = vld [vmem:[#allocation13] sm:$0xf]
    %v2794 = vld [vmem:[#allocation14] sm:$0xff]
    %v2795 = vld [vmem:[#allocation14 + $0x8] sm:$0xff]
    %v2796 = vld [vmem:[#allocation14 + $0x10] sm:$0xff]
    %v2797 = vld [vmem:[#allocation14 + $0x18] sm:$0xff]
    %v2798 = vsel %vm755, %v2785, 0.0
    %2799 = vadd.xlane.f32.xlu0 %v2798
    %v2800 = vpop.xlane.xlu0 %2799
    %v2801 = vsel %vm755, %v2786, 0.0
    %2802 = vadd.xlane.f32.xlu0 %v2801
    %v2803 = vpop.xlane.xlu0 %2802
    %v2804 = vsel %vm755, %v2787, 0.0
    %2805 = vadd.xlane.f32.xlu0 %v2804
    %v2806 = vpop.xlane.xlu0 %2805
    %v2807 = vsel %vm755, %v2788, 0.0
    %2808 = vadd.xlane.f32.xlu0 %v2807
    %v2809 = vpop.xlane.xlu0 %2808
    %v2810 = vrcp.pop 24.0
    %v2811 = vmul.f32 %v2800, %v2810
    %v2812 = vmul.f32 %v2803, %v2810
    %v2813 = vmul.f32 %v2806, %v2810
    %v2814 = vmul.f32 %v2809, %v2810
    %v2815 = vsel %vm755, %v2785, -inf
    %2816 = vmax.xlane.f32.xlu0 %v2815
    %v2817 = vpop.xlane.xlu0 %2816
    %v2818 = vsel %vm755, %v2786, -inf
    %2819 = vmax.xlane.f32.xlu0 %v2818
    %v2820 = vpop.xlane.xlu0 %2819
    %v2821 = vsel %vm755, %v2787, -inf
    %2822 = vmax.xlane.f32.xlu0 %v2821
    %v2823 = vpop.xlane.xlu0 %2822
    %v2824 = vsel %vm755, %v2788, -inf
    %2825 = vmax.xlane.f32.xlu0 %v2824
    %v2826 = vpop.xlane.xlu0 %2825
    %v2828 = vsel %vm1406, %v2793, 0
    %2830 = vmatprep.subr.mxu0 0.0
    %2831 = vmatpush1.msra.mxu0 %v2811
    %2832 = vmatprep.subr.mxu0 0.0
    %2833 = vmatpush1.msra.mxu0 %v2812
    %2834 = vmatprep.subr.mxu0 0.0
    %2835 = vmatpush1.msra.mxu0 %v2813
    %2836 = vmatprep.subr.mxu0 0.0
    %2837 = vmatpush1.msra.mxu0 %v2814
    %2838 = vmatprep.subr.mxu0 0.0
    %2839 = vmatpush1.msra.mxu0 0.0
    %2840 = vmatprep.subr.mxu0 0.0
    %2841 = vmatpush1.msra.mxu0 0.0
    %2842 = vmatprep.subr.mxu0 0.0
    %2843 = vmatpush1.msra.mxu0 0.0
    %2844 = vmatprep.subr.mxu0 0.0
    %2845 = vmatpush1.msra.mxu0 0.0
    %2846 = vmatprep.subr.mxu0 0.0
    %2847 = vmatpush1.msra.mxu0 0.0
    %2848 = vmatprep.subr.mxu0 0.0
    %2849 = vmatpush1.msra.mxu0 0.0
    %2850 = vmatprep.subr.mxu0 0.0
    %2851 = vmatpush1.msra.mxu0 0.0
    %2852 = vmatprep.subr.mxu0 0.0
    %2853 = vmatpush1.msra.mxu0 0.0
    %2854 = vmatprep.subr.mxu0 0.0
    %2855 = vmatpush1.msra.mxu0 0.0
    %2856 = vmatprep.subr.mxu0 0.0
    %2857 = vmatpush1.msra.mxu0 0.0
    %2858 = vmatprep.subr.mxu0 0.0
    %2859 = vmatpush1.msra.mxu0 0.0
    %2860 = vmatprep.subr.mxu0 0.0
    %2861 = vmatpush1.msra.mxu0 0.0
    %2862 = vmatprep.subr.mxu0 0.0
    %2863 = vmatpush1.msra.mxu0 0.0
    %2864 = vmatprep.subr.mxu0 0.0
    %2865 = vmatpush1.msra.mxu0 0.0
    %2866 = vmatprep.subr.mxu0 0.0
    %2867 = vmatpush1.msra.mxu0 0.0
    %2868 = vmatprep.subr.mxu0 0.0
    %2869 = vmatpush1.msra.mxu0 0.0
    %2870 = vmatprep.subr.mxu0 0.0
    %2871 = vmatpush1.msra.mxu0 0.0
    %2872 = vmatprep.subr.mxu0 0.0
    %2873 = vmatpush1.msra.mxu0 0.0
    %2874 = vmatprep.subr.mxu0 0.0
    %2875 = vmatpush1.msra.mxu0 0.0
    %2876 = vmatprep.subr.mxu0 0.0
    %2877 = vmatpush1.msra.mxu0 0.0
    %2878 = vmatprep.subr.mxu0 0.0
    %2879 = vmatpush1.msra.mxu0 0.0
    %2880 = vmatprep.subr.mxu0 0.0
    %2881 = vmatpush1.msra.mxu0 0.0
    %2882 = vmatprep.subr.mxu0 0.0
    %2883 = vmatpush1.msra.mxu0 0.0
    %2884 = vmatprep.subr.mxu0 0.0
    %2885 = vmatpush1.msra.mxu0 0.0
    %2886 = vmatprep.subr.mxu0 0.0
    %2887 = vmatpush1.msra.mxu0 0.0
    %2888 = vmatprep.subr.mxu0 0.0
    %2889 = vmatpush1.msra.mxu0 0.0
    %2890 = vmatprep.subr.mxu0 0.0
    %2891 = vmatpush1.msra.mxu0 0.0
    %2892 = vmatprep.subr.mxu0 0.0
    %2893 = vmatpush1.msra.mxu0 0.0
    %2894 = vmatprep.mubr.f32.mxu0 0.0
    %2895 = vmatmul.mubr.f32.gmra.mrb[0].mxu0 %v2828
    %v2896 = vpop.f32.mrb[0].mxu0
    %v2897 = vadd.f32 0.0, %v2896
    %v2898 = vpop.f32.mrb[0].mxu0
    %2899 = vdwg.mxu0
    %v2900 = vmax.f32 %v2897, 0.0
    %2901 = vmatprep.subr.mxu0 0.0
    %2902 = vmatpush1.msra.mxu0 %v2817
    %2903 = vmatprep.subr.mxu0 0.0
    %2904 = vmatpush1.msra.mxu0 %v2820
    %2905 = vmatprep.subr.mxu0 0.0
    %2906 = vmatpush1.msra.mxu0 %v2823
    %2907 = vmatprep.subr.mxu0 0.0
    %2908 = vmatpush1.msra.mxu0 %v2826
    %2909 = vmatprep.subr.mxu0 0.0
    %2910 = vmatpush1.msra.mxu0 0.0
    %2911 = vmatprep.subr.mxu0 0.0
    %2912 = vmatpush1.msra.mxu0 0.0
    %2913 = vmatprep.subr.mxu0 0.0
    %2914 = vmatpush1.msra.mxu0 0.0
    %2915 = vmatprep.subr.mxu0 0.0
    %2916 = vmatpush1.msra.mxu0 0.0
    %2917 = vmatprep.subr.mxu0 0.0
    %2918 = vmatpush1.msra.mxu0 0.0
    %2919 = vmatprep.subr.mxu0 0.0
    %2920 = vmatpush1.msra.mxu0 0.0
    %2921 = vmatprep.subr.mxu0 0.0
    %2922 = vmatpush1.msra.mxu0 0.0
    %2923 = vmatprep.subr.mxu0 0.0
    %2924 = vmatpush1.msra.mxu0 0.0
    %2925 = vmatprep.subr.mxu0 0.0
    %2926 = vmatpush1.msra.mxu0 0.0
    %2927 = vmatprep.subr.mxu0 0.0
    %2928 = vmatpush1.msra.mxu0 0.0
    %2929 = vmatprep.subr.mxu0 0.0
    %2930 = vmatpush1.msra.mxu0 0.0
    %2931 = vmatprep.subr.mxu0 0.0
    %2932 = vmatpush1.msra.mxu0 0.0
    %2933 = vmatprep.subr.mxu0 0.0
    %2934 = vmatpush1.msra.mxu0 0.0
    %2935 = vmatprep.subr.mxu0 0.0
    %2936 = vmatpush1.msra.mxu0 0.0
    %2937 = vmatprep.subr.mxu0 0.0
    %2938 = vmatpush1.msra.mxu0 0.0
    %2939 = vmatprep.subr.mxu0 0.0
    %2940 = vmatpush1.msra.mxu0 0.0
    %2941 = vmatprep.subr.mxu0 0.0
    %2942 = vmatpush1.msra.mxu0 0.0
    %2943 = vmatprep.subr.mxu0 0.0
    %2944 = vmatpush1.msra.mxu0 0.0
    %2945 = vmatprep.subr.mxu0 0.0
    %2946 = vmatpush1.msra.mxu0 0.0
    %2947 = vmatprep.subr.mxu0 0.0
    %2948 = vmatpush1.msra.mxu0 0.0
    %2949 = vmatprep.subr.mxu0 0.0
    %2950 = vmatpush1.msra.mxu0 0.0
    %2951 = vmatprep.subr.mxu0 0.0
    %2952 = vmatpush1.msra.mxu0 0.0
    %2953 = vmatprep.subr.mxu0 0.0
    %2954 = vmatpush1.msra.mxu0 0.0
    %2955 = vmatprep.subr.mxu0 0.0
    %2956 = vmatpush1.msra.mxu0 0.0
    %2957 = vmatprep.subr.mxu0 0.0
    %2958 = vmatpush1.msra.mxu0 0.0
    %2959 = vmatprep.subr.mxu0 0.0
    %2960 = vmatpush1.msra.mxu0 0.0
    %2961 = vmatprep.subr.mxu0 0.0
    %2962 = vmatpush1.msra.mxu0 0.0
    %2963 = vmatprep.subr.mxu0 0.0
    %2964 = vmatpush1.msra.mxu0 0.0
    %2965 = vmatprep.mubr.f32.mxu0 0.0
    %2966 = vmatmul.mubr.f32.gmra.mrb[0].mxu0 %v2828
    %v2967 = vpop.f32.mrb[0].mxu0
    %v2968 = vadd.f32 0.0, %v2967
    %v2969 = vpop.f32.mrb[0].mxu0
    %2970 = vdwg.mxu0
    %v2971 = vmax.f32 %v2968, 0.0
    %v2972 = vadd.f32 %v2900, %v2971
    %vm2973 = vcmask 31744
    %v2975 = vsel %vm2973, %v2794, 0
    %v2978 = vsel %vm2973, %v2795, 0
    %v2981 = vsel %vm2973, %v2796, 0
    %v2984 = vsel %vm2973, %v2797, 0
    %vm2986 = vcmask 1043456
    %v2988 = vsel %vm2986, %v2972, 0
    %2990 = vmatprep.subr.mxu0 0.0
    %2991 = vmatpush1.msra.mxu0 %v2988
    %2992 = vmatprep.subr.mxu0 0.0
    %2993 = vmatpush1.msra.mxu0 0.0
    %2994 = vmatprep.subr.mxu0 0.0
    %2995 = vmatpush1.msra.mxu0 0.0
    %2996 = vmatprep.subr.mxu0 0.0
    %2997 = vmatpush1.msra.mxu0 0.0
    %2998 = vmatprep.subr.mxu0 0.0
    %2999 = vmatpush1.msra.mxu0 0.0
    %3000 = vmatprep.subr.mxu0 0.0
    %3001 = vmatpush1.msra.mxu0 0.0
    %3002 = vmatprep.subr.mxu0 0.0
    %3003 = vmatpush1.msra.mxu0 0.0
    %3004 = vmatprep.subr.mxu0 0.0
    %3005 = vmatpush1.msra.mxu0 0.0
    %3006 = vmatprep.subr.mxu0 0.0
    %3007 = vmatpush1.msra.mxu0 0.0
    %3008 = vmatprep.subr.mxu0 0.0
    %3009 = vmatpush1.msra.mxu0 0.0
    %3010 = vmatprep.subr.mxu0 0.0
    %3011 = vmatpush1.msra.mxu0 0.0
    %3012 = vmatprep.subr.mxu0 0.0
    %3013 = vmatpush1.msra.mxu0 0.0
    %3014 = vmatprep.subr.mxu0 0.0
    %3015 = vmatpush1.msra.mxu0 0.0
    %3016 = vmatprep.subr.mxu0 0.0
    %3017 = vmatpush1.msra.mxu0 0.0
    %3018 = vmatprep.subr.mxu0 0.0
    %3019 = vmatpush1.msra.mxu0 0.0
    %3020 = vmatprep.subr.mxu0 0.0
    %3021 = vmatpush1.msra.mxu0 0.0
    %3022 = vmatprep.subr.mxu0 0.0
    %3023 = vmatpush1.msra.mxu0 0.0
    %3024 = vmatprep.subr.mxu0 0.0
    %3025 = vmatpush1.msra.mxu0 0.0
    %3026 = vmatprep.subr.mxu0 0.0
    %3027 = vmatpush1.msra.mxu0 0.0
    %3028 = vmatprep.subr.mxu0 0.0
    %3029 = vmatpush1.msra.mxu0 0.0
    %3030 = vmatprep.subr.mxu0 0.0
    %3031 = vmatpush1.msra.mxu0 0.0
    %3032 = vmatprep.subr.mxu0 0.0
    %3033 = vmatpush1.msra.mxu0 0.0
    %3034 = vmatprep.subr.mxu0 0.0
    %3035 = vmatpush1.msra.mxu0 0.0
    %3036 = vmatprep.subr.mxu0 0.0
    %3037 = vmatpush1.msra.mxu0 0.0
    %3038 = vmatprep.subr.mxu0 0.0
    %3039 = vmatpush1.msra.mxu0 0.0
    %3040 = vmatprep.subr.mxu0 0.0
    %3041 = vmatpush1.msra.mxu0 0.0
    %3042 = vmatprep.subr.mxu0 0.0
    %3043 = vmatpush1.msra.mxu0 0.0
    %3044 = vmatprep.subr.mxu0 0.0
    %3045 = vmatpush1.msra.mxu0 0.0
    %3046 = vmatprep.subr.mxu0 0.0
    %3047 = vmatpush1.msra.mxu0 0.0
    %3048 = vmatprep.subr.mxu0 0.0
    %3049 = vmatpush1.msra.mxu0 0.0
    %3050 = vmatprep.subr.mxu0 0.0
    %3051 = vmatpush1.msra.mxu0 0.0
    %3052 = vmatprep.subr.mxu0 0.0
    %3053 = vmatpush1.msra.mxu0 0.0
    %3054 = vmatprep.mubr.f32.mxu0 0.0
    %3055 = vmatmul.mubr.f32.gmra.mrb[0].mxu0 %v2975
    %v3056 = vpop.f32.mrb[0].mxu0
    %v3057 = vadd.f32 0.0, %v3056
    %v3058 = vpop.f32.mrb[0].mxu0
    %3059 = vmatprep.mubr.f32.mxu0 0.0
    %3060 = vmatmul.mubr.f32.gmra.mrb[0].mxu0 %v2978
    %v3061 = vpop.f32.mrb[0].mxu0
    %v3062 = vadd.f32 0.0, %v3061
    %v3063 = vpop.f32.mrb[0].mxu0
    %3064 = vmatprep.mubr.f32.mxu0 0.0
    %3065 = vmatmul.mubr.f32.gmra.mrb[0].mxu0 %v2981
    %v3066 = vpop.f32.mrb[0].mxu0
    %v3067 = vadd.f32 0.0, %v3066
    %v3068 = vpop.f32.mrb[0].mxu0
    %3069 = vmatprep.mubr.f32.mxu0 0.0
    %3070 = vmatmul.mubr.f32.gmra.mrb[0].mxu0 %v2984
    %v3071 = vpop.f32.mrb[0].mxu0
    %v3072 = vadd.f32 0.0, %v3071
    %v3073 = vpop.f32.mrb[0].mxu0
    %3074 = vdwg.mxu0
    %v3075 = vxor.u32 %v3057, 2147483648
    %v3076 = vxor.u32 %v3062, 2147483648
    %v3077 = vxor.u32 %v3067, 2147483648
    %v3078 = vxor.u32 %v3072, 2147483648
    %v3079 = vmul.f32 %v3075, 1.442695
    %v3080 = vpow.pop %v3079
    %v3081 = vmul.f32 %v3076, 1.442695
    %v3082 = vpow.pop %v3081
    %v3083 = vmul.f32 %v3077, 1.442695
    %v3084 = vpow.pop %v3083
    %v3085 = vmul.f32 %v3078, 1.442695
    %v3086 = vpow.pop %v3085
    %v3087 = vadd.f32 %v3080, 1.0
    %v3088 = vadd.f32 %v3082, 1.0
    %v3089 = vadd.f32 %v3084, 1.0
    %v3090 = vadd.f32 %v3086, 1.0
    %v3091 = vrcp.pop %v3087
    %v3092 = vmul.f32 1.0, %v3091
    %v3093 = vrcp.pop %v3088
    %v3094 = vmul.f32 1.0, %v3093
    %v3095 = vrcp.pop %v3089
    %v3096 = vmul.f32 1.0, %v3095
    %v3097 = vrcp.pop %v3090
    %v3098 = vmul.f32 1.0, %v3097
    %3100 = vset.pattern.permute.xlu0 0
    %3101 = vperm.xlu0 %3100, %v3092
    %v3102 = vpop.permute.xlu0 %3101
    %3105 = vset.pattern.permute.xlu0 0
    %3106 = vperm.xlu0 %3105, %v3094
    %v3107 = vpop.permute.xlu0 %3106
    %3110 = vset.pattern.permute.xlu0 0
    %3111 = vperm.xlu0 %3110, %v3096
    %v3112 = vpop.permute.xlu0 %3111
    %3115 = vset.pattern.permute.xlu0 0
    %3116 = vperm.xlu0 %3115, %v3098
    %v3117 = vpop.permute.xlu0 %3116
    %v3119 = vmul.f32 %v2785, %v3102
    %v3120 = vmul.f32 %v2786, %v3107
    %v3121 = vmul.f32 %v2787, %v3112
    %v3122 = vmul.f32 %v2788, %v3117
    %v3123 = vsel %vm755, %v3119, 0.0
    %v3124 = vsel %vm755, %v3120, 0.0
    %v3125 = vadd.f32 %v3123, %v3124
    %v3126 = vsel %vm755, %v3121, 0.0
    %v3127 = vadd.f32 %v3125, %v3126
    %v3128 = vsel %vm755, %v3122, 0.0
    %v3129 = vadd.f32 %v3127, %v3128
    %v3130 = vrot.slane %v3129, 4
    %v3131 = vadd.f32 %v3129, %v3130
    %v3132 = vrot.slane %v3131, 2
    %v3133 = vadd.f32 %v3131, %v3132
    %v3134 = vrot.slane %v3133, 1
    %v3135 = vadd.f32 %v3133, %v3134
    %v3136 = vrcp.pop 32.0
    %v3137 = vmul.f32 %v3135, %v3136
    %v3138 = vsel %vm755, %v3119, -inf
    %v3139 = vsel %vm755, %v3120, -inf
    %v3140 = vsel %vm755, %v3121, -inf
    %v3141 = vsel %vm755, %v3122, -inf
    %v3142 = vmax.f32 %v3138, %v3139
    %v3143 = vmax.f32 %v3140, %v3141
    %v3144 = vmax.f32 %v3142, %v3143
    %v3145 = vrot.slane %v3144, 4
    %v3146 = vmax.f32 %v3144, %v3145
    %v3147 = vrot.slane %v3146, 2
    %v3148 = vmax.f32 %v3146, %v3147
    %v3149 = vrot.slane %v3148, 1
    %v3150 = vmax.f32 %v3148, %v3149
    %3151 = vrot.lane.b32.xlu0 %v3137, 24
    %v3152 = vpop.permute.xlu0 %3151
    %v3153 = vsel %vm192, %v3152, %v3137
    %3154 = vrot.lane.b32.xlu0 %v3153, 24
    %v3155 = vpop.permute.xlu0 %3154
    %v3156 = vsel %vm192, %v3155, %v3137
    %3157 = vrot.lane.b32.xlu0 %v3150, 24
    %v3158 = vpop.permute.xlu0 %3157
    %v3159 = vsel %vm192, %v3158, %v3150
    %3160 = vrot.lane.b32.xlu0 %v3159, 24
    %v3161 = vpop.permute.xlu0 %3160
    %v3162 = vsel %vm192, %v3161, %v3150
    %v3163 = vadd.s32 %v190, 4294967293
    %vm3164 = vcmp.ge.s32.totalorder %v3163, 0
    %vm3165 = vcmp.le.s32.totalorder %v3163, 23
    %vm3166 = vmand %vm3164, %vm3165
    %s3167 = sld [smem:[#allocation16]]
    %v3168 = vstv %s3167
    %v3169 = vmul.f32 %v3168, %v3156
    %s3170 = sld [smem:[#allocation16 + $0x80]]
    %v3171 = vstv %s3170
    %v3172 = vmul.f32 %v3171, %v3162
    %v3173 = vadd.f32 %v3169, %v3172
    %3175 = vrot.lane.b32.xlu0 %v3173, 107
    %v3176 = vpop.permute.xlu0 %3175
    %v3178 = vsel %vm3166, %v3176, 0.0
    %v3179 = vadd.f32 %v3178, 0.0
    %v3180 = vadd.s32 %v190, 4294967294
    %vm3181 = vcmp.ge.s32.totalorder %v3180, 0
    %vm3182 = vcmp.le.s32.totalorder %v3180, 23
    %vm3183 = vmand %vm3181, %vm3182
    %s3184 = sld [smem:[#allocation16 + $0x1]]
    %v3185 = vstv %s3184
    %v3186 = vmul.f32 %v3185, %v3156
    %s3187 = sld [smem:[#allocation16 + $0x81]]
    %v3188 = vstv %s3187
    %v3189 = vmul.f32 %v3188, %v3162
    %v3190 = vadd.f32 %v3186, %v3189
    %3192 = vrot.lane.b32.xlu0 %v3190, 106
    %v3193 = vpop.permute.xlu0 %3192
    %v3195 = vsel %vm3183, %v3193, 0.0
    %v3196 = vadd.f32 %v3179, %v3195
    %v3197 = vadd.s32 %v190, 4294967295
    %vm3198 = vcmp.ge.s32.totalorder %v3197, 0
    %vm3199 = vcmp.le.s32.totalorder %v3197, 23
    %vm3200 = vmand %vm3198, %vm3199
    %s3201 = sld [smem:[#allocation16 + $0x2]]
    %v3202 = vstv %s3201
    %v3203 = vmul.f32 %v3202, %v3156
    %s3204 = sld [smem:[#allocation16 + $0x82]]
    %v3205 = vstv %s3204
    %v3206 = vmul.f32 %v3205, %v3162
    %v3207 = vadd.f32 %v3203, %v3206
    %3209 = vrot.lane.b32.xlu0 %v3207, 105
    %v3210 = vpop.permute.xlu0 %3209
    %v3212 = vsel %vm3200, %v3210, 0.0
    %v3213 = vadd.f32 %v3196, %v3212
    %vm3214 = vcmp.ge.s32.totalorder %v190, 0
    %vm3215 = vcmp.le.s32.totalorder %v190, 23
    %vm3216 = vmand %vm3214, %vm3215
    %s3217 = sld [smem:[#allocation16 + $0x3]]
    %v3218 = vstv %s3217
    %v3219 = vmul.f32 %v3218, %v3137
    %s3220 = sld [smem:[#allocation16 + $0x83]]
    %v3221 = vstv %s3220
    %v3222 = vmul.f32 %v3221, %v3150
    %v3223 = vadd.f32 %v3219, %v3222
    %v3224 = vsel %vm3216, %v3223, 0.0
    %v3225 = vadd.f32 %v3213, %v3224
    %v3226 = vadd.s32 %v190, 1
    %vm3227 = vcmp.ge.s32.totalorder %v3226, 0
    %vm3228 = vcmp.le.s32.totalorder %v3226, 23
    %vm3229 = vmand %vm3227, %vm3228
    %s3230 = sld [smem:[#allocation16 + $0x4]]
    %v3231 = vstv %s3230
    %v3232 = vmul.f32 %v3231, %v3156
    %s3233 = sld [smem:[#allocation16 + $0x84]]
    %v3234 = vstv %s3233
    %v3235 = vmul.f32 %v3234, %v3162
    %v3236 = vadd.f32 %v3232, %v3235
    %3238 = vrot.lane.b32.xlu0 %v3236, 127
    %v3239 = vpop.permute.xlu0 %3238
    %v3241 = vsel %vm3229, %v3239, 0.0
    %v3242 = vadd.f32 %v3225, %v3241
    %v3243 = vadd.s32 %v190, 2
    %vm3244 = vcmp.ge.s32.totalorder %v3243, 0
    %vm3245 = vcmp.le.s32.totalorder %v3243, 23
    %vm3246 = vmand %vm3244, %vm3245
    %s3247 = sld [smem:[#allocation16 + $0x5]]
    %v3248 = vstv %s3247
    %v3249 = vmul.f32 %v3248, %v3156
    %s3250 = sld [smem:[#allocation16 + $0x85]]
    %v3251 = vstv %s3250
    %v3252 = vmul.f32 %v3251, %v3162
    %v3253 = vadd.f32 %v3249, %v3252
    %3255 = vrot.lane.b32.xlu0 %v3253, 126
    %v3256 = vpop.permute.xlu0 %3255
    %v3258 = vsel %vm3246, %v3256, 0.0
    %v3259 = vadd.f32 %v3242, %v3258
    %v3260 = vadd.s32 %v190, 3
    %vm3261 = vcmp.ge.s32.totalorder %v3260, 0
    %vm3262 = vcmp.le.s32.totalorder %v3260, 23
    %vm3263 = vmand %vm3261, %vm3262
    %s3264 = sld [smem:[#allocation16 + $0x6]]
    %v3265 = vstv %s3264
    %v3266 = vmul.f32 %v3265, %v3156
    %s3267 = sld [smem:[#allocation16 + $0x86]]
    %v3268 = vstv %s3267
    %v3269 = vmul.f32 %v3268, %v3162
    %v3270 = vadd.f32 %v3266, %v3269
    %3272 = vrot.lane.b32.xlu0 %v3270, 125
    %v3273 = vpop.permute.xlu0 %3272
    %v3275 = vsel %vm3263, %v3273, 0.0
    %v3276 = vadd.f32 %v3259, %v3275
    %v3277 = vxor.u32 %v3276, 2147483648
    %v3278 = vmul.f32 %v3277, 1.442695
    %v3279 = vpow.pop %v3278
    %v3280 = vadd.f32 %v3279, 1.0
    %v3281 = vrcp.pop %v3280
    %v3282 = vmul.f32 1.0, %v3281
    %v3283 = vlaneseq
    %v3284 = vshrl.u32 %v3283, 7
    %v3285 = vsub.s32 0, %v3284
    %v3286 = vrot.slane %v3282, %v3285
    %v3287 = vmul.f32 %v3119, %v3286
    %v3288 = vmul.f32 %v3120, %v3286
    %v3289 = vmul.f32 %v3121, %v3286
    %v3290 = vmul.f32 %v3122, %v3286
    %3291 = vst.msk [vmem:[%s20] sm:$0xff] %vm755, %v3287
    %3292 = vst.msk [vmem:[%s20 + $0x8] sm:$0xff] %vm755, %v3288
    %3293 = vst.msk [vmem:[%s20 + $0x10] sm:$0xff] %vm755, %v3289
    %3294 = vst.msk [vmem:[%s20 + $0x18] sm:$0xff] %vm755, %v3290
    %v3295 = vsel %vm755, %v2789, 0.0
    %3296 = vadd.xlane.f32.xlu0 %v3295
    %v3297 = vpop.xlane.xlu0 %3296
    %v3298 = vsel %vm755, %v2790, 0.0
    %3299 = vadd.xlane.f32.xlu0 %v3298
    %v3300 = vpop.xlane.xlu0 %3299
    %v3301 = vsel %vm755, %v2791, 0.0
    %3302 = vadd.xlane.f32.xlu0 %v3301
    %v3303 = vpop.xlane.xlu0 %3302
    %v3304 = vsel %vm755, %v2792, 0.0
    %3305 = vadd.xlane.f32.xlu0 %v3304
    %v3306 = vpop.xlane.xlu0 %3305
    %v3307 = vmul.f32 %v3297, %v2810
    %v3308 = vmul.f32 %v3300, %v2810
    %v3309 = vmul.f32 %v3303, %v2810
    %v3310 = vmul.f32 %v3306, %v2810
    %v3311 = vsel %vm755, %v2789, -inf
    %3312 = vmax.xlane.f32.xlu0 %v3311
    %v3313 = vpop.xlane.xlu0 %3312
    %v3314 = vsel %vm755, %v2790, -inf
    %3315 = vmax.xlane.f32.xlu0 %v3314
    %v3316 = vpop.xlane.xlu0 %3315
    %v3317 = vsel %vm755, %v2791, -inf
    %3318 = vmax.xlane.f32.xlu0 %v3317
    %v3319 = vpop.xlane.xlu0 %3318
    %v3320 = vsel %vm755, %v2792, -inf
    %3321 = vmax.xlane.f32.xlu0 %v3320
    %v3322 = vpop.xlane.xlu0 %3321
    %3323 = vmatprep.subr.mxu0 0.0
    %3324 = vmatpush1.msra.mxu0 %v3307
    %3325 = vmatprep.subr.mxu0 0.0
    %3326 = vmatpush1.msra.mxu0 %v3308
    %3327 = vmatprep.subr.mxu0 0.0
    %3328 = vmatpush1.msra.mxu0 %v3309
    %3329 = vmatprep.subr.mxu0 0.0
    %3330 = vmatpush1.msra.mxu0 %v3310
    %3331 = vmatprep.subr.mxu0 0.0
    %3332 = vmatpush1.msra.mxu0 0.0
    %3333 = vmatprep.subr.mxu0 0.0
    %3334 = vmatpush1.msra.mxu0 0.0
    %3335 = vmatprep.subr.mxu0 0.0
    %3336 = vmatpush1.msra.mxu0 0.0
    %3337 = vmatprep.subr.mxu0 0.0
    %3338 = vmatpush1.msra.mxu0 0.0
    %3339 = vmatprep.subr.mxu0 0.0
    %3340 = vmatpush1.msra.mxu0 0.0
    %3341 = vmatprep.subr.mxu0 0.0
    %3342 = vmatpush1.msra.mxu0 0.0
    %3343 = vmatprep.subr.mxu0 0.0
    %3344 = vmatpush1.msra.mxu0 0.0
    %3345 = vmatprep.subr.mxu0 0.0
    %3346 = vmatpush1.msra.mxu0 0.0
    %3347 = vmatprep.subr.mxu0 0.0
    %3348 = vmatpush1.msra.mxu0 0.0
    %3349 = vmatprep.subr.mxu0 0.0
    %3350 = vmatpush1.msra.mxu0 0.0
    %3351 = vmatprep.subr.mxu0 0.0
    %3352 = vmatpush1.msra.mxu0 0.0
    %3353 = vmatprep.subr.mxu0 0.0
    %3354 = vmatpush1.msra.mxu0 0.0
    %3355 = vmatprep.subr.mxu0 0.0
    %3356 = vmatpush1.msra.mxu0 0.0
    %3357 = vmatprep.subr.mxu0 0.0
    %3358 = vmatpush1.msra.mxu0 0.0
    %3359 = vmatprep.subr.mxu0 0.0
    %3360 = vmatpush1.msra.mxu0 0.0
    %3361 = vmatprep.subr.mxu0 0.0
    %3362 = vmatpush1.msra.mxu0 0.0
    %3363 = vmatprep.subr.mxu0 0.0
    %3364 = vmatpush1.msra.mxu0 0.0
    %3365 = vmatprep.subr.mxu0 0.0
    %3366 = vmatpush1.msra.mxu0 0.0
    %3367 = vmatprep.subr.mxu0 0.0
    %3368 = vmatpush1.msra.mxu0 0.0
    %3369 = vmatprep.subr.mxu0 0.0
    %3370 = vmatpush1.msra.mxu0 0.0
    %3371 = vmatprep.subr.mxu0 0.0
    %3372 = vmatpush1.msra.mxu0 0.0
    %3373 = vmatprep.subr.mxu0 0.0
    %3374 = vmatpush1.msra.mxu0 0.0
    %3375 = vmatprep.subr.mxu0 0.0
    %3376 = vmatpush1.msra.mxu0 0.0
    %3377 = vmatprep.subr.mxu0 0.0
    %3378 = vmatpush1.msra.mxu0 0.0
    %3379 = vmatprep.subr.mxu0 0.0
    %3380 = vmatpush1.msra.mxu0 0.0
    %3381 = vmatprep.subr.mxu0 0.0
    %3382 = vmatpush1.msra.mxu0 0.0
    %3383 = vmatprep.subr.mxu0 0.0
    %3384 = vmatpush1.msra.mxu0 0.0
    %3385 = vmatprep.subr.mxu0 0.0
    %3386 = vmatpush1.msra.mxu0 0.0
    %3387 = vmatprep.mubr.f32.mxu0 0.0
    %3388 = vmatmul.mubr.f32.gmra.mrb[0].mxu0 %v2828
    %v3389 = vpop.f32.mrb[0].mxu0
    %v3390 = vadd.f32 0.0, %v3389
    %v3391 = vpop.f32.mrb[0].mxu0
    %3392 = vdwg.mxu0
    %v3393 = vmax.f32 %v3390, 0.0
    %3394 = vmatprep.subr.mxu0 0.0
    %3395 = vmatpush1.msra.mxu0 %v3313
    %3396 = vmatprep.subr.mxu0 0.0
    %3397 = vmatpush1.msra.mxu0 %v3316
    %3398 = vmatprep.subr.mxu0 0.0
    %3399 = vmatpush1.msra.mxu0 %v3319
    %3400 = vmatprep.subr.mxu0 0.0
    %3401 = vmatpush1.msra.mxu0 %v3322
    %3402 = vmatprep.subr.mxu0 0.0
    %3403 = vmatpush1.msra.mxu0 0.0
    %3404 = vmatprep.subr.mxu0 0.0
    %3405 = vmatpush1.msra.mxu0 0.0
    %3406 = vmatprep.subr.mxu0 0.0
    %3407 = vmatpush1.msra.mxu0 0.0
    %3408 = vmatprep.subr.mxu0 0.0
    %3409 = vmatpush1.msra.mxu0 0.0
    %3410 = vmatprep.subr.mxu0 0.0
    %3411 = vmatpush1.msra.mxu0 0.0
    %3412 = vmatprep.subr.mxu0 0.0
    %3413 = vmatpush1.msra.mxu0 0.0
    %3414 = vmatprep.subr.mxu0 0.0
    %3415 = vmatpush1.msra.mxu0 0.0
    %3416 = vmatprep.subr.mxu0 0.0
    %3417 = vmatpush1.msra.mxu0 0.0
    %3418 = vmatprep.subr.mxu0 0.0
    %3419 = vmatpush1.msra.mxu0 0.0
    %3420 = vmatprep.subr.mxu0 0.0
    %3421 = vmatpush1.msra.mxu0 0.0
    %3422 = vmatprep.subr.mxu0 0.0
    %3423 = vmatpush1.msra.mxu0 0.0
    %3424 = vmatprep.subr.mxu0 0.0
    %3425 = vmatpush1.msra.mxu0 0.0
    %3426 = vmatprep.subr.mxu0 0.0
    %3427 = vmatpush1.msra.mxu0 0.0
    %3428 = vmatprep.subr.mxu0 0.0
    %3429 = vmatpush1.msra.mxu0 0.0
    %3430 = vmatprep.subr.mxu0 0.0
    %3431 = vmatpush1.msra.mxu0 0.0
    %3432 = vmatprep.subr.mxu0 0.0
    %3433 = vmatpush1.msra.mxu0 0.0
    %3434 = vmatprep.subr.mxu0 0.0
    %3435 = vmatpush1.msra.mxu0 0.0
    %3436 = vmatprep.subr.mxu0 0.0
    %3437 = vmatpush1.msra.mxu0 0.0
    %3438 = vmatprep.subr.mxu0 0.0
    %3439 = vmatpush1.msra.mxu0 0.0
    %3440 = vmatprep.subr.mxu0 0.0
    %3441 = vmatpush1.msra.mxu0 0.0
    %3442 = vmatprep.subr.mxu0 0.0
    %3443 = vmatpush1.msra.mxu0 0.0
    %3444 = vmatprep.subr.mxu0 0.0
    %3445 = vmatpush1.msra.mxu0 0.0
    %3446 = vmatprep.subr.mxu0 0.0
    %3447 = vmatpush1.msra.mxu0 0.0
    %3448 = vmatprep.subr.mxu0 0.0
    %3449 = vmatpush1.msra.mxu0 0.0
    %3450 = vmatprep.subr.mxu0 0.0
    %3451 = vmatpush1.msra.mxu0 0.0
    %3452 = vmatprep.subr.mxu0 0.0
    %3453 = vmatpush1.msra.mxu0 0.0
    %3454 = vmatprep.subr.mxu0 0.0
    %3455 = vmatpush1.msra.mxu0 0.0
    %3456 = vmatprep.subr.mxu0 0.0
    %3457 = vmatpush1.msra.mxu0 0.0
    %3458 = vmatprep.mubr.f32.mxu0 0.0
    %3459 = vmatmul.mubr.f32.gmra.mrb[0].mxu0 %v2828
    %v3460 = vpop.f32.mrb[0].mxu0
    %v3461 = vadd.f32 0.0, %v3460
    %v3462 = vpop.f32.mrb[0].mxu0
    %3463 = vdwg.mxu0
    %v3464 = vmax.f32 %v3461, 0.0
    %v3465 = vadd.f32 %v3393, %v3464
    %v3467 = vsel %vm2986, %v3465, 0
    %3469 = vmatprep.subr.mxu0 0.0
    %3470 = vmatpush1.msra.mxu0 %v3467
    %3471 = vmatprep.subr.mxu0 0.0
    %3472 = vmatpush1.msra.mxu0 0.0
    %3473 = vmatprep.subr.mxu0 0.0
    %3474 = vmatpush1.msra.mxu0 0.0
    %3475 = vmatprep.subr.mxu0 0.0
    %3476 = vmatpush1.msra.mxu0 0.0
    %3477 = vmatprep.subr.mxu0 0.0
    %3478 = vmatpush1.msra.mxu0 0.0
    %3479 = vmatprep.subr.mxu0 0.0
    %3480 = vmatpush1.msra.mxu0 0.0
    %3481 = vmatprep.subr.mxu0 0.0
    %3482 = vmatpush1.msra.mxu0 0.0
    %3483 = vmatprep.subr.mxu0 0.0
    %3484 = vmatpush1.msra.mxu0 0.0
    %3485 = vmatprep.subr.mxu0 0.0
    %3486 = vmatpush1.msra.mxu0 0.0
    %3487 = vmatprep.subr.mxu0 0.0
    %3488 = vmatpush1.msra.mxu0 0.0
    %3489 = vmatprep.subr.mxu0 0.0
    %3490 = vmatpush1.msra.mxu0 0.0
    %3491 = vmatprep.subr.mxu0 0.0
    %3492 = vmatpush1.msra.mxu0 0.0
    %3493 = vmatprep.subr.mxu0 0.0
    %3494 = vmatpush1.msra.mxu0 0.0
    %3495 = vmatprep.subr.mxu0 0.0
    %3496 = vmatpush1.msra.mxu0 0.0
    %3497 = vmatprep.subr.mxu0 0.0
    %3498 = vmatpush1.msra.mxu0 0.0
    %3499 = vmatprep.subr.mxu0 0.0
    %3500 = vmatpush1.msra.mxu0 0.0
    %3501 = vmatprep.subr.mxu0 0.0
    %3502 = vmatpush1.msra.mxu0 0.0
    %3503 = vmatprep.subr.mxu0 0.0
    %3504 = vmatpush1.msra.mxu0 0.0
    %3505 = vmatprep.subr.mxu0 0.0
    %3506 = vmatpush1.msra.mxu0 0.0
    %3507 = vmatprep.subr.mxu0 0.0
    %3508 = vmatpush1.msra.mxu0 0.0
    %3509 = vmatprep.subr.mxu0 0.0
    %3510 = vmatpush1.msra.mxu0 0.0
    %3511 = vmatprep.subr.mxu0 0.0
    %3512 = vmatpush1.msra.mxu0 0.0
    %3513 = vmatprep.subr.mxu0 0.0
    %3514 = vmatpush1.msra.mxu0 0.0
    %3515 = vmatprep.subr.mxu0 0.0
    %3516 = vmatpush1.msra.mxu0 0.0
    %3517 = vmatprep.subr.mxu0 0.0
    %3518 = vmatpush1.msra.mxu0 0.0
    %3519 = vmatprep.subr.mxu0 0.0
    %3520 = vmatpush1.msra.mxu0 0.0
    %3521 = vmatprep.subr.mxu0 0.0
    %3522 = vmatpush1.msra.mxu0 0.0
    %3523 = vmatprep.subr.mxu0 0.0
    %3524 = vmatpush1.msra.mxu0 0.0
    %3525 = vmatprep.subr.mxu0 0.0
    %3526 = vmatpush1.msra.mxu0 0.0
    %3527 = vmatprep.subr.mxu0 0.0
    %3528 = vmatpush1.msra.mxu0 0.0
    %3529 = vmatprep.subr.mxu0 0.0
    %3530 = vmatpush1.msra.mxu0 0.0
    %3531 = vmatprep.subr.mxu0 0.0
    %3532 = vmatpush1.msra.mxu0 0.0
    %3533 = vmatprep.mubr.f32.mxu0 0.0
    %3534 = vmatmul.mubr.f32.gmra.mrb[0].mxu0 %v2975
    %v3535 = vpop.f32.mrb[0].mxu0
    %v3536 = vadd.f32 0.0, %v3535
    %v3537 = vpop.f32.mrb[0].mxu0
    %3538 = vmatprep.mubr.f32.mxu0 0.0
    %3539 = vmatmul.mubr.f32.gmra.mrb[0].mxu0 %v2978
    %v3540 = vpop.f32.mrb[0].mxu0
    %v3541 = vadd.f32 0.0, %v3540
    %v3542 = vpop.f32.mrb[0].mxu0
    %3543 = vmatprep.mubr.f32.mxu0 0.0
    %3544 = vmatmul.mubr.f32.gmra.mrb[0].mxu0 %v2981
    %v3545 = vpop.f32.mrb[0].mxu0
    %v3546 = vadd.f32 0.0, %v3545
    %v3547 = vpop.f32.mrb[0].mxu0
    %3548 = vmatprep.mubr.f32.mxu0 0.0
    %3549 = vmatmul.mubr.f32.gmra.mrb[0].mxu0 %v2984
    %v3550 = vpop.f32.mrb[0].mxu0
    %v3551 = vadd.f32 0.0, %v3550
    %v3552 = vpop.f32.mrb[0].mxu0
    %3553 = vdwg.mxu0
    %v3554 = vxor.u32 %v3536, 2147483648
    %v3555 = vxor.u32 %v3541, 2147483648
    %v3556 = vxor.u32 %v3546, 2147483648
    %v3557 = vxor.u32 %v3551, 2147483648
    %v3558 = vmul.f32 %v3554, 1.442695
    %v3559 = vpow.pop %v3558
    %v3560 = vmul.f32 %v3555, 1.442695
    %v3561 = vpow.pop %v3560
    %v3562 = vmul.f32 %v3556, 1.442695
    %v3563 = vpow.pop %v3562
    %v3564 = vmul.f32 %v3557, 1.442695
    %v3565 = vpow.pop %v3564
    %v3566 = vadd.f32 %v3559, 1.0
    %v3567 = vadd.f32 %v3561, 1.0
    %v3568 = vadd.f32 %v3563, 1.0
    %v3569 = vadd.f32 %v3565, 1.0
    %v3570 = vrcp.pop %v3566
    %v3571 = vmul.f32 1.0, %v3570
    %v3572 = vrcp.pop %v3567
    %v3573 = vmul.f32 1.0, %v3572
    %v3574 = vrcp.pop %v3568
    %v3575 = vmul.f32 1.0, %v3574
    %v3576 = vrcp.pop %v3569
    %v3577 = vmul.f32 1.0, %v3576
    %3579 = vset.pattern.permute.xlu0 0
    %3580 = vperm.xlu0 %3579, %v3571
    %v3581 = vpop.permute.xlu0 %3580
    %3584 = vset.pattern.permute.xlu0 0
    %3585 = vperm.xlu0 %3584, %v3573
    %v3586 = vpop.permute.xlu0 %3585
    %3589 = vset.pattern.permute.xlu0 0
    %3590 = vperm.xlu0 %3589, %v3575
    %v3591 = vpop.permute.xlu0 %3590
    %3594 = vset.pattern.permute.xlu0 0
    %3595 = vperm.xlu0 %3594, %v3577
    %v3596 = vpop.permute.xlu0 %3595
    %v3598 = vmul.f32 %v2789, %v3581
    %v3599 = vmul.f32 %v2790, %v3586
    %v3600 = vmul.f32 %v2791, %v3591
    %v3601 = vmul.f32 %v2792, %v3596
    %v3602 = vsel %vm755, %v3598, 0.0
    %v3603 = vsel %vm755, %v3599, 0.0
    %v3604 = vadd.f32 %v3602, %v3603
    %v3605 = vsel %vm755, %v3600, 0.0
    %v3606 = vadd.f32 %v3604, %v3605
    %v3607 = vsel %vm755, %v3601, 0.0
    %v3608 = vadd.f32 %v3606, %v3607
    %v3609 = vrot.slane %v3608, 4
    %v3610 = vadd.f32 %v3608, %v3609
    %v3611 = vrot.slane %v3610, 2
    %v3612 = vadd.f32 %v3610, %v3611
    %v3613 = vrot.slane %v3612, 1
    %v3614 = vadd.f32 %v3612, %v3613
    %v3615 = vmul.f32 %v3614, %v3136
    %v3616 = vsel %vm755, %v3598, -inf
    %v3617 = vsel %vm755, %v3599, -inf
    %v3618 = vsel %vm755, %v3600, -inf
    %v3619 = vsel %vm755, %v3601, -inf
    %v3620 = vmax.f32 %v3616, %v3617
    %v3621 = vmax.f32 %v3618, %v3619
    %v3622 = vmax.f32 %v3620, %v3621
    %v3623 = vrot.slane %v3622, 4
    %v3624 = vmax.f32 %v3622, %v3623
    %v3625 = vrot.slane %v3624, 2
    %v3626 = vmax.f32 %v3624, %v3625
    %v3627 = vrot.slane %v3626, 1
    %v3628 = vmax.f32 %v3626, %v3627
    %3629 = vrot.lane.b32.xlu0 %v3615, 24
    %v3630 = vpop.permute.xlu0 %3629
    %v3631 = vsel %vm192, %v3630, %v3615
    %3632 = vrot.lane.b32.xlu0 %v3631, 24
    %v3633 = vpop.permute.xlu0 %3632
    %v3634 = vsel %vm192, %v3633, %v3615
    %3635 = vrot.lane.b32.xlu0 %v3628, 24
    %v3636 = vpop.permute.xlu0 %3635
    %v3637 = vsel %vm192, %v3636, %v3628
    %3638 = vrot.lane.b32.xlu0 %v3637, 24
    %v3639 = vpop.permute.xlu0 %3638
    %v3640 = vsel %vm192, %v3639, %v3628
    %s3641 = sld [smem:[#allocation16]]
    %v3642 = vstv %s3641
    %v3643 = vmul.f32 %v3642, %v3634
    %s3644 = sld [smem:[#allocation16 + $0x80]]
    %v3645 = vstv %s3644
    %v3646 = vmul.f32 %v3645, %v3640
    %v3647 = vadd.f32 %v3643, %v3646
    %3649 = vrot.lane.b32.xlu0 %v3647, 107
    %v3650 = vpop.permute.xlu0 %3649
    %v3652 = vsel %vm3166, %v3650, 0.0
    %v3653 = vadd.f32 %v3652, 0.0
    %s3654 = sld [smem:[#allocation16 + $0x1]]
    %v3655 = vstv %s3654
    %v3656 = vmul.f32 %v3655, %v3634
    %s3657 = sld [smem:[#allocation16 + $0x81]]
    %v3658 = vstv %s3657
    %v3659 = vmul.f32 %v3658, %v3640
    %v3660 = vadd.f32 %v3656, %v3659
    %3662 = vrot.lane.b32.xlu0 %v3660, 106
    %v3663 = vpop.permute.xlu0 %3662
    %v3665 = vsel %vm3183, %v3663, 0.0
    %v3666 = vadd.f32 %v3653, %v3665
    %s3667 = sld [smem:[#allocation16 + $0x2]]
    %v3668 = vstv %s3667
    %v3669 = vmul.f32 %v3668, %v3634
    %s3670 = sld [smem:[#allocation16 + $0x82]]
    %v3671 = vstv %s3670
    %v3672 = vmul.f32 %v3671, %v3640
    %v3673 = vadd.f32 %v3669, %v3672
    %3675 = vrot.lane.b32.xlu0 %v3673, 105
    %v3676 = vpop.permute.xlu0 %3675
    %v3678 = vsel %vm3200, %v3676, 0.0
    %v3679 = vadd.f32 %v3666, %v3678
    %s3680 = sld [smem:[#allocation16 + $0x3]]
    %v3681 = vstv %s3680
    %v3682 = vmul.f32 %v3681, %v3615
    %s3683 = sld [smem:[#allocation16 + $0x83]]
    %v3684 = vstv %s3683
    %v3685 = vmul.f32 %v3684, %v3628
    %v3686 = vadd.f32 %v3682, %v3685
    %v3687 = vsel %vm3216, %v3686, 0.0
    %v3688 = vadd.f32 %v3679, %v3687
    %s3689 = sld [smem:[#allocation16 + $0x4]]
    %v3690 = vstv %s3689
    %v3691 = vmul.f32 %v3690, %v3634
    %s3692 = sld [smem:[#allocation16 + $0x84]]
    %v3693 = vstv %s3692
    %v3694 = vmul.f32 %v3693, %v3640
    %v3695 = vadd.f32 %v3691, %v3694
    %3697 = vrot.lane.b32.xlu0 %v3695, 127
    %v3698 = vpop.permute.xlu0 %3697
    %v3700 = vsel %vm3229, %v3698, 0.0
    %v3701 = vadd.f32 %v3688, %v3700
    %s3702 = sld [smem:[#allocation16 + $0x5]]
    %v3703 = vstv %s3702
    %v3704 = vmul.f32 %v3703, %v3634
    %s3705 = sld [smem:[#allocation16 + $0x85]]
    %v3706 = vstv %s3705
    %v3707 = vmul.f32 %v3706, %v3640
    %v3708 = vadd.f32 %v3704, %v3707
    %3710 = vrot.lane.b32.xlu0 %v3708, 126
    %v3711 = vpop.permute.xlu0 %3710
    %v3713 = vsel %vm3246, %v3711, 0.0
    %v3714 = vadd.f32 %v3701, %v3713
    %s3715 = sld [smem:[#allocation16 + $0x6]]
    %v3716 = vstv %s3715
    %v3717 = vmul.f32 %v3716, %v3634
    %s3718 = sld [smem:[#allocation16 + $0x86]]
    %v3719 = vstv %s3718
    %v3720 = vmul.f32 %v3719, %v3640
    %v3721 = vadd.f32 %v3717, %v3720
    %3723 = vrot.lane.b32.xlu0 %v3721, 125
    %v3724 = vpop.permute.xlu0 %3723
    %v3726 = vsel %vm3263, %v3724, 0.0
    %v3727 = vadd.f32 %v3714, %v3726
    %v3728 = vxor.u32 %v3727, 2147483648
    %v3729 = vmul.f32 %v3728, 1.442695
    %v3730 = vpow.pop %v3729
    %v3731 = vadd.f32 %v3730, 1.0
    %v3732 = vrcp.pop %v3731
    %v3733 = vmul.f32 1.0, %v3732
    %v3734 = vlaneseq
    %v3735 = vshrl.u32 %v3734, 7
    %v3736 = vsub.s32 0, %v3735
    %v3737 = vrot.slane %v3733, %v3736
    %v3738 = vmul.f32 %v3598, %v3737
    %v3739 = vmul.f32 %v3599, %v3737
    %v3740 = vmul.f32 %v3600, %v3737
    %v3741 = vmul.f32 %v3601, %v3737
    %s3742 = scalar_lea.vmem %s20, 32
    %3743 = vst.msk [vmem:[%s3742] sm:$0xff] %vm755, %v3738
    %3744 = vst.msk [vmem:[%s3742 + $0x8] sm:$0xff] %vm755, %v3739
    %3745 = vst.msk [vmem:[%s3742 + $0x10] sm:$0xff] %vm755, %v3740
    %3746 = vst.msk [vmem:[%s3742 + $0x18] sm:$0xff] %vm755, %v3741
    // Predicated region
    $region118: #{_lambda_.1} parent=1 // pred_check
      _
    $region119: #{_lambda_.1} parent=1 // pred_check_branch
      %3748 = sbr.rel (0) target = $region121
    $region120: #{_lambda_.1} parent=1 // pred_region
      _
    $region121: #{_lambda_.1} parent=1 // pred_fallthru
      _
    // Predicated region
    $region122: #{_lambda_.1} parent=1 // pred_check
      _
    $region123: #{_lambda_.1} parent=1 // pred_check_branch
      %3750 = sbr.rel (0) target = $region125
    $region124: #{_lambda_.1} parent=1 // pred_region
      _
    $region125: #{_lambda_.1} parent=1 // pred_fallthru
      _
    %3751 = vsyncpa [#allocation3], 1
    %3752 = vsyncpa [#allocation6], 1
    %3753 = vsyncpa [#allocation9], 1
    %3754 = vsyncpa [#allocation12], 1
    %3755 = vsyncpa [#allocation15], 1
    %3756 = vsyncpa [#allocation4], 1

</llo_original>
